<compile_context>
chip_gen: v7x
topology: tpu7x:2x2x1
jax: 0.10.0
libtpu: 0.0.40
codegen_flags: <defaults>
</compile_context>

<pallas_src>
import functools
import math

import jax
import jax.numpy as jnp
from jax.experimental import pallas as pl
from jax.experimental.pallas import tpu as pltpu

PARAM_ORDER = ["ln1w", "ln1b", "ln2w", "ln2b", "ln3w", "ln3b",
               "wq", "bq", "wkv", "bkv", "wo", "bo",
               "wfc", "bfc", "wpj", "bpj"]

_CONFIG_CACHE = {}   # shape-key -> (use_slab_layout, single_buffer_weights)


def _ln(x, w, b, eps=1e-5):
    mu = jnp.mean(x, axis=-1, keepdims=True)
    var = jnp.mean((x - mu) ** 2, axis=-1, keepdims=True)
    return (x - mu) * jax.lax.rsqrt(var + eps) * w + b


def cross_block_kernel(q_ref, kv_ref, mask_ref,
                       ln1w, ln1b, ln2w, ln2b, ln3w, ln3b,
                       wq, bq, wkv, bkv, wo, bo,
                       wfc, bfc, wpj, bpj,
                       out_ref, *, n_head, lq, lkv, d_model):
    E, H = d_model, n_head
    Dh = E // H
    NB = q_ref.shape[0]
    Rq, Rkv = NB * lq, NB * lkv

    # Activations arrive in bf16 (HBM traffic); LN/softmax/residual math is f32.
    q2 = q_ref[...].astype(jnp.float32).reshape(Rq, E)
    kv2 = kv_ref[...].astype(jnp.float32).reshape(Rkv, E)

    # --- attention branch: q + out_proj(MHA(ln1(q), ln2(kv), ln2(kv))) ---
    qn = _ln(q2, ln1w[...], ln1b[...])
    kvn = _ln(kv2, ln2w[...], ln2b[...])

    # Fused projections; bf16 MXU inputs, f32 accumulation.
    # The 1/sqrt(Dh) softmax scale is already folded into wq/bq (weight-prep time).
    qp = jnp.dot(qn.astype(jnp.bfloat16), wq[...],
                 preferred_element_type=jnp.float32) + bq[...]          # (Rq, E)
    kvp = jnp.dot(kvn.astype(jnp.bfloat16), wkv[...],
                  preferred_element_type=jnp.float32) + bkv[...]        # (Rkv, 2E)

    def to_heads(x, L):
        # (NB*L, E) -> (NB*H, L, Dh) using only leading-dim reshapes and
        # minor-two-dim transposes.
        x = x.reshape(NB, L, E)
        x = jnp.swapaxes(x, 1, 2)            # (NB, E, L)
        x = x.reshape(NB * H, Dh, L)
        x = jnp.swapaxes(x, 1, 2)            # (NB*H, L, Dh)
        return x.astype(jnp.bfloat16)

    qh = to_heads(qp, lq)
    kh = to_heads(kvp[:, :E], lkv)
    vh = to_heads(kvp[:, E:], lkv)

    # One batched attention over all (batch, head) pairs (no per-head loop).
    s = jnp.einsum("bqd,bkd->bqk", qh, kh,
                   preferred_element_type=jnp.float32)                  # (NB*H, Lq, Lkv)

    # Additive key-padding bias, kept in f32 so -1e30 cannot overflow.
    # TODO(synk): queries whose keys are ALL padded get uniform attention here,
    # whereas torch nn.MultiheadAttention would return NaN.
    bias = mask_ref[...].reshape(NB, lkv) * jnp.float32(-1e30)
    bias = jnp.broadcast_to(bias[:, None, None, :],
                            (NB, H, 1, lkv)).reshape(NB * H, 1, lkv)
    s = s + bias
    s = s - jnp.max(s, axis=-1, keepdims=True)
    p = jnp.exp(s)
    # approx reciprocal -> EUP slot; ~1e-3 relative error vs exact softmax.
    p = p * pl.reciprocal(jnp.sum(p, axis=-1, keepdims=True), approx=True)

    o = jnp.einsum("bqk,bkd->bqd", p.astype(jnp.bfloat16), vh,
                   preferred_element_type=jnp.float32)                  # (NB*H, Lq, Dh)

    # heads -> (rows, E)   (inverse of to_heads)
    o = jnp.swapaxes(o, 1, 2)                # (NB*H, Dh, Lq)
    o = o.reshape(NB, E, lq)
    o = jnp.swapaxes(o, 1, 2)                # (NB, Lq, E)
    attn_in = o.reshape(Rq, E).astype(jnp.bfloat16)

    attn = jnp.dot(attn_in, wo[...], preferred_element_type=jnp.float32) + bo[...]
    q1 = q2 + attn

    # --- MLP branch: q + c_proj(QuickGELU(c_fc(ln3(q)))) ---
    # TODO(synk): at very large widths tile wfc/wpj over the 4E reduction dim
    # (extra "arbitrary" grid axis) instead of full-array const blocks.
    q3 = _ln(q1, ln3w[...], ln3b[...])
    h1 = jnp.dot(q3.astype(jnp.bfloat16), wfc[...],
                 preferred_element_type=jnp.float32) + bfc[...]
    h1 = h1 * jax.nn.sigmoid(1.702 * h1)     # QuickGELU (f32)
    h2 = jnp.dot(h1.astype(jnp.bfloat16), wpj[...],
                 preferred_element_type=jnp.float32) + bpj[...]

    y = q1 + h2
    out_ref[...] = y.reshape(out_ref.shape).astype(out_ref.dtype)


def prepare_layer_params(p, n_head):
    """One-time, host-side weight prep (hoisted out of the forward path):
       fuse K/V weights, fold 1/sqrt(Dh) into the Q projection, cast matmul weights
       to bf16 (LN params and biases stay f32)."""
    E = p["wq"].shape[0]
    scale = 1.0 / math.sqrt(E // n_head)
    bf16, f32 = jnp.bfloat16, jnp.float32
    as_row = lambda a: jnp.asarray(a, f32).reshape(1, -1)
    return dict(
        ln1w=as_row(p["ln1w"]), ln1b=as_row(p["ln1b"]),
        ln2w=as_row(p["ln2w"]), ln2b=as_row(p["ln2b"]),
        ln3w=as_row(p["ln3w"]), ln3b=as_row(p["ln3b"]),
        wq=(p["wq"] * scale).astype(bf16), bq=as_row(p["bq"] * scale),
        wkv=jnp.concatenate([p["wk"], p["wv"]], axis=1).astype(bf16),
        bkv=jnp.concatenate([as_row(p["bk"]), as_row(p["bv"])], axis=1),
        wo=p["wo"].astype(bf16), bo=as_row(p["bo"]),
        wfc=p["wfc"].astype(bf16), bfc=as_row(p["bfc"]),
        wpj=p["wpj"].astype(bf16), bpj=as_row(p["bpj"]),
    )


def _build_call(N, Lq, Lkv, E, NB, n_head, dtype, plist, slab, single_buffer):
    if slab:
        # lane-dense slab layout for narrow E: last block dim is L*E (>=128), so the
        # HBM<->VMEM blocks and the final store are unmasked.
        q_blk, kv_blk, out_blk = (NB, 1, Lq * E), (NB, 1, Lkv * E), (NB, 1, Lq * E)
        out_shape = jax.ShapeDtypeStruct((N, 1, Lq * E), dtype)
    else:
        q_blk, kv_blk, out_blk = (NB, Lq, E), (NB, Lkv, E), (NB, Lq, E)
        out_shape = jax.ShapeDtypeStruct((N, Lq, E), dtype)

    def const_spec(a):
        nd = a.ndim
        kw = {"pipeline_mode": pl.Buffered(1)} if single_buffer else {}
        return pl.BlockSpec(a.shape, lambda *_, _nd=nd: (0,) * _nd, **kw)

    in_specs = [pl.BlockSpec(q_blk, lambda b: (b, 0, 0)),
                pl.BlockSpec(kv_blk, lambda b: (b, 0, 0)),
                pl.BlockSpec((NB, 1, Lkv), lambda b: (b, 0, 0))] \
               + [const_spec(a) for a in plist]

    flops = (2 * N * Lq * E * E + 2 * N * Lkv * E * 2 * E
             + 4 * N * Lq * Lkv * E + 2 * N * Lq * E * E + 16 * N * Lq * E * E)
    transc = N * n_head * Lq * Lkv + N * Lq * 4 * E
    bytes_acc = (2 * (2 * N * Lq * E + N * Lkv * E) + 4 * N * Lkv
                 + sum(int(a.size) * a.dtype.itemsize for a in plist))

    return pl.pallas_call(
        functools.partial(cross_block_kernel, n_head=n_head, lq=Lq, lkv=Lkv, d_model=E),
        out_shape=out_shape,
        grid=(N // NB,),
        in_specs=in_specs,
        out_specs=pl.BlockSpec(out_blk, lambda b: (b, 0, 0)),
        compiler_params=pltpu.CompilerParams(
            dimension_semantics=("parallel",),
            # 48 MiB: above the 16/32 MiB scoped defaults (v5e / v6e,v7x), below v7x's
            # 64 MiB physical VMEM.
            vmem_limit_bytes=48 * 1024 * 1024),
        cost_estimate=pl.CostEstimate(flops=int(flops), transcendentals=int(transc),
                                      bytes_accessed=int(bytes_acc)),
    )


def cross_attention_block(q, kv, mask3, kparams, n_head):
    """One CrossAttentionBlock. q: (N, Lq, E) bf16, kv: (N, Lkv, E) bf16,
    mask3: (N, 1, Lkv) f32 (1.0 == padded key). Returns (N, Lq, E) in q.dtype."""
    N, Lq, E = q.shape
    Lkv = kv.shape[1]
    plist = [kparams[k] for k in PARAM_ORDER]

    # ~256 rows per grid step fills the 256-wide MXU (v6e/v7x); v5e's 128-wide MXU is
    # already full at 128.  Keep >= 2 "parallel" steps so both v7x TCs get work.
    NB = max(1, min(N, 256 // max(Lq, 1)))
    if N >= 2:
        NB = min(NB, max(1, N // 2))
    while N % NB:
        NB -= 1

    slab_pref = (E % 128 != 0)
    key = (N, Lq, Lkv, E, NB, n_head, str(q.dtype))
    if key in _CONFIG_CACHE:
        candidates = [_CONFIG_CACHE[key]]
    elif slab_pref:
        candidates = [(True, True), (True, False), (False, False)]
    else:
        candidates = [(False, True), (False, False)]

    last_err = None
    for slab, single_buf in candidates:   # capability fallback (Buffered(1) / slab reshape)
        q_in = q.reshape(N, 1, Lq * E) if slab else q
        kv_in = kv.reshape(N, 1, Lkv * E) if slab else kv
        try:
            call = _build_call(N, Lq, Lkv, E, NB, n_head, q.dtype, plist, slab, single_buf)
            out = call(q_in, kv_in, mask3, *plist)
            _CONFIG_CACHE[key] = (slab, single_buf)
            return out.reshape(N, Lq, E)
        except Exception as e:            # lowering/compile capability fallback
            last_err = e
    raise last_err


def cross_transformer(q_sf, kv_sf, key_padding_mask, prepped_layers, n_head):
    """q_sf: (Lq, N, E) seq-first (torch layout); kv_sf: (Lkv, N, E);
    key_padding_mask: (N, Lkv) bool, True == padded key."""
    # bf16 activation carry halves per-layer HBM traffic; in-kernel math stays f32.
    # TODO(synk): switch to f32 carry if exact torch-f32 residual accumulation is required.
    q = jnp.transpose(q_sf, (1, 0, 2)).astype(jnp.bfloat16)
    kv = jnp.transpose(kv_sf, (1, 0, 2)).astype(jnp.bfloat16)
    N, Lkv = key_padding_mask.shape
    mask3 = key_padding_mask.astype(jnp.float32).reshape(N, 1, Lkv)
    for kp in prepped_layers:
        q = cross_attention_block(q, kv, mask3, kp, n_head)
    return jnp.transpose(q.astype(jnp.float32), (1, 0, 2))   # back to (Lq, N, E)


# ---------------- deterministic parameter init ----------------
def init_block_params(key, width):
    E = width
    ks = jax.random.split(key, 14)
    w = lambda k, shape, std=0.02: jax.random.normal(k, shape, jnp.float32) * std
    return dict(
        ln1w=jnp.ones((1, E), jnp.float32), ln1b=jnp.zeros((1, E), jnp.float32),
        ln2w=jnp.ones((1, E), jnp.float32), ln2b=jnp.zeros((1, E), jnp.float32),
        ln3w=jnp.ones((1, E), jnp.float32), ln3b=jnp.zeros((1, E), jnp.float32),
        wq=w(ks[0], (E, E)), bq=w(ks[1], (1, E), 0.01),
        wk=w(ks[2], (E, E)), bk=w(ks[3], (1, E), 0.01),
        wv=w(ks[4], (E, E)), bv=w(ks[5], (1, E), 0.01),
        wo=w(ks[6], (E, E)), bo=w(ks[7], (1, E), 0.01),
        wfc=w(ks[8], (E, 4 * E)), bfc=w(ks[9], (1, 4 * E), 0.01),
        wpj=w(ks[10], (4 * E, E)), bpj=w(ks[11], (1, E), 0.01),
    )


# ------- pure-JAX reference (mirrors the kernel's bf16 quantization choices) -------
def ref_block(q, kv, mask_f, p, n_head):
    bf = lambda x: x.astype(jnp.bfloat16)

    def ln(x, w, b):
        mu = x.mean(-1, keepdims=True)
        var = ((x - mu) ** 2).mean(-1, keepdims=True)
        return (x - mu) / jnp.sqrt(var + 1e-5) * w + b

    N, Lq, E = q.shape
    H = n_head
    Dh = E // H
    qn = ln(q, p["ln1w"], p["ln1b"])
    kvn = ln(kv, p["ln2w"], p["ln2b"])
    qp = jnp.einsum("nqe,ef->nqf", bf(qn), bf(p["wq"]),
                    preferred_element_type=jnp.float32) + p["bq"]
    kp = jnp.einsum("nke,ef->nkf", bf(kvn), bf(p["wk"]),
                    preferred_element_type=jnp.float32) + p["bk"]
    vp = jnp.einsum("nke,ef->nkf", bf(kvn), bf(p["wv"]),
                    preferred_element_type=jnp.float32) + p["bv"]
    qp = bf(qp).reshape(N, Lq, H, Dh)
    kp = bf(kp).reshape(N, -1, H, Dh)
    vp = bf(vp).reshape(N, -1, H, Dh)
    s = jnp.einsum("nqhd,nkhd->nhqk", qp, kp,
                   preferred_element_type=jnp.float32) / math.sqrt(Dh)
    s = s + (mask_f * -1e30)[:, None, None, :]
    pr = jax.nn.softmax(s, -1)
    o = jnp.einsum("nhqk,nkhd->nqhd", bf(pr), vp,
                   preferred_element_type=jnp.float32).reshape(N, Lq, E)
    q1 = q + jnp.einsum("nqe,ef->nqf", bf(o), bf(p["wo"]),
                        preferred_element_type=jnp.float32) + p["bo"]
    q3 = ln(q1, p["ln3w"], p["ln3b"])
    h = jnp.einsum("nqe,ef->nqf", bf(q3), bf(p["wfc"]),
                   preferred_element_type=jnp.float32) + p["bfc"]
    h = h * jax.nn.sigmoid(1.702 * h)
    return q1 + jnp.einsum("nqe,ef->nqf", bf(h), bf(p["wpj"]),
                           preferred_element_type=jnp.float32) + p["bpj"]


def ref_transformer(q_sf, kv_sf, mask, layer_params, n_head):
    q = jnp.transpose(q_sf, (1, 0, 2)).astype(jnp.bfloat16)
    kv = jnp.transpose(kv_sf, (1, 0, 2)).astype(jnp.bfloat16).astype(jnp.float32)
    m = mask.astype(jnp.float32)
    for p in layer_params:
        q = ref_block(q.astype(jnp.float32), kv, m, p, n_head).astype(jnp.bfloat16)
    return jnp.transpose(q.astype(jnp.float32), (1, 0, 2))


if __name__ == "__main__":
    width, layers, heads = 32, 2, 4
    Lq, Lkv, N = 8, 16, 2

    root = jax.random.PRNGKey(0)
    k_q, k_kv, k_p = jax.random.split(root, 3)
    q_in = jax.random.normal(k_q, (Lq, N, width), jnp.float32)     # seq-first like torch
    kv_in = jax.random.normal(k_kv, (Lkv, N, width), jnp.float32)
    lengths = jnp.array([12, 16])                                  # valid kv lengths per batch
    key_padding_mask = jnp.arange(Lkv)[None, :] >= lengths[:, None]  # (N, Lkv) True == pad

    layer_params = [init_block_params(k, width)
                    for k in jax.random.split(k_p, layers)]
    # One-time weight prep, hoisted out of the forward path.
    prepped = [prepare_layer_params(p, heads) for p in layer_params]

    out = cross_transformer(q_in, kv_in, key_padding_mask, prepped, heads)
    out = jax.block_until_ready(out)

    ref = ref_transformer(q_in, kv_in, key_padding_mask, layer_params, heads)
    err = float(jnp.max(jnp.abs(out - ref)))
    if not jnp.allclose(out, ref, atol=1e-2, rtol=1e-2):
        raise SystemExit("mismatch vs reference: max abs err = %e" % err)
    print("KERNEL_OK")
</pallas_src>

<mosaic_0001>
module attributes {stable_mosaic.version = 11 : i64} {
  func.func @cross_block_kernel(%arg0: i32, %arg1: memref<1x1x256xbf16, #tpu.memory_space<vmem>>, %arg2: memref<1x1x512xbf16, #tpu.memory_space<vmem>>, %arg3: memref<1x1x16xf32, #tpu.memory_space<vmem>>, %arg4: memref<1x32xf32, #tpu.memory_space<vmem>>, %arg5: memref<1x32xf32, #tpu.memory_space<vmem>>, %arg6: memref<1x32xf32, #tpu.memory_space<vmem>>, %arg7: memref<1x32xf32, #tpu.memory_space<vmem>>, %arg8: memref<1x32xf32, #tpu.memory_space<vmem>>, %arg9: memref<1x32xf32, #tpu.memory_space<vmem>>, %arg10: memref<32x32xbf16, #tpu.memory_space<vmem>>, %arg11: memref<1x32xf32, #tpu.memory_space<vmem>>, %arg12: memref<32x64xbf16, #tpu.memory_space<vmem>>, %arg13: memref<1x64xf32, #tpu.memory_space<vmem>>, %arg14: memref<32x32xbf16, #tpu.memory_space<vmem>>, %arg15: memref<1x32xf32, #tpu.memory_space<vmem>>, %arg16: memref<32x128xbf16, #tpu.memory_space<vmem>>, %arg17: memref<1x128xf32, #tpu.memory_space<vmem>>, %arg18: memref<128x32xbf16, #tpu.memory_space<vmem>>, %arg19: memref<1x32xf32, #tpu.memory_space<vmem>>, %arg20: memref<1x1x256xbf16, #tpu.memory_space<vmem>>) attributes {dimension_semantics = [#tpu.dimension_semantics<parallel>], iteration_bounds = array<i64: 2>, scalar_prefetch = 0 : i64, scratch_operands = 0 : i64, tpu.core_type = #tpu.core_type<tc>, window_params = [{transform_indices = @transform_0, window_bounds = array<i64: 1, 1, 256>}, {transform_indices = @transform_1, window_bounds = array<i64: 1, 1, 512>}, {transform_indices = @transform_2, window_bounds = array<i64: 1, 1, 16>}, {pipeline_mode = #tpu.pipeline_mode<synchronous>, transform_indices = @transform_3, window_bounds = array<i64: 1, 32>}, {pipeline_mode = #tpu.pipeline_mode<synchronous>, transform_indices = @transform_4, window_bounds = array<i64: 1, 32>}, {pipeline_mode = #tpu.pipeline_mode<synchronous>, transform_indices = @transform_5, window_bounds = array<i64: 1, 32>}, {pipeline_mode = #tpu.pipeline_mode<synchronous>, transform_indices = @transform_6, window_bounds = array<i64: 1, 32>}, {pipeline_mode = #tpu.pipeline_mode<synchronous>, transform_indices = @transform_7, window_bounds = array<i64: 1, 32>}, {pipeline_mode = #tpu.pipeline_mode<synchronous>, transform_indices = @transform_8, window_bounds = array<i64: 1, 32>}, {pipeline_mode = #tpu.pipeline_mode<synchronous>, transform_indices = @transform_9, window_bounds = array<i64: 32, 32>}, {pipeline_mode = #tpu.pipeline_mode<synchronous>, transform_indices = @transform_10, window_bounds = array<i64: 1, 32>}, {pipeline_mode = #tpu.pipeline_mode<synchronous>, transform_indices = @transform_11, window_bounds = array<i64: 32, 64>}, {pipeline_mode = #tpu.pipeline_mode<synchronous>, transform_indices = @transform_12, window_bounds = array<i64: 1, 64>}, {pipeline_mode = #tpu.pipeline_mode<synchronous>, transform_indices = @transform_13, window_bounds = array<i64: 32, 32>}, {pipeline_mode = #tpu.pipeline_mode<synchronous>, transform_indices = @transform_14, window_bounds = array<i64: 1, 32>}, {pipeline_mode = #tpu.pipeline_mode<synchronous>, transform_indices = @transform_15, window_bounds = array<i64: 32, 128>}, {pipeline_mode = #tpu.pipeline_mode<synchronous>, transform_indices = @transform_16, window_bounds = array<i64: 1, 128>}, {pipeline_mode = #tpu.pipeline_mode<synchronous>, transform_indices = @transform_17, window_bounds = array<i64: 128, 32>}, {pipeline_mode = #tpu.pipeline_mode<synchronous>, transform_indices = @transform_18, window_bounds = array<i64: 1, 32>}, {transform_indices = @transform_19, window_bounds = array<i64: 1, 1, 256>}]} {
    %c0 = arith.constant 0 : index
    %c0_0 = arith.constant 0 : index
    %c0_1 = arith.constant 0 : index
    %0 = vector.load %arg1[%c0, %c0_0, %c0_1] : memref<1x1x256xbf16, #tpu.memory_space<vmem>>, vector<1x1x256xbf16>
    %1 = arith.extf %0 : vector<1x1x256xbf16> to vector<1x1x256xf32>
    %2 = vector.shape_cast %1 : vector<1x1x256xf32> to vector<8x32xf32>
    %c0_2 = arith.constant 0 : index
    %c0_3 = arith.constant 0 : index
    %c0_4 = arith.constant 0 : index
    %3 = vector.load %arg2[%c0_2, %c0_3, %c0_4] : memref<1x1x512xbf16, #tpu.memory_space<vmem>>, vector<1x1x512xbf16>
    %4 = arith.extf %3 : vector<1x1x512xbf16> to vector<1x1x512xf32>
    %5 = vector.shape_cast %4 : vector<1x1x512xf32> to vector<16x32xf32>
    %c0_5 = arith.constant 0 : index
    %c0_6 = arith.constant 0 : index
    %6 = vector.load %arg4[%c0_5, %c0_6] : memref<1x32xf32, #tpu.memory_space<vmem>>, vector<1x32xf32>
    %c0_7 = arith.constant 0 : index
    %c0_8 = arith.constant 0 : index
    %7 = vector.load %arg5[%c0_7, %c0_8] : memref<1x32xf32, #tpu.memory_space<vmem>>, vector<1x32xf32>
    %cst = arith.constant dense<0.000000e+00> : vector<8xf32>
    %8 = vector.multi_reduction <add>, %2, %cst [1] : vector<8x32xf32> to vector<8xf32>
    %9 = vector.shape_cast %8 : vector<8xf32> to vector<8x1xf32>
    %cst_9 = arith.constant 3.200000e+01 : f32
    %10 = vector.broadcast %cst_9 : f32 to vector<8x1xf32>
    %11 = arith.divf %9, %10 : vector<8x1xf32>
    %12 = vector.broadcast %11 : vector<8x1xf32> to vector<8x32xf32>
    %13 = arith.subf %2, %12 : vector<8x32xf32>
    %14 = arith.mulf %13, %13 : vector<8x32xf32>
    %cst_10 = arith.constant dense<0.000000e+00> : vector<8xf32>
    %15 = vector.multi_reduction <add>, %14, %cst_10 [1] : vector<8x32xf32> to vector<8xf32>
    %16 = vector.shape_cast %15 : vector<8xf32> to vector<8x1xf32>
    %cst_11 = arith.constant 3.200000e+01 : f32
    %17 = vector.broadcast %cst_11 : f32 to vector<8x1xf32>
    %18 = arith.divf %16, %17 : vector<8x1xf32>
    %19 = vector.broadcast %11 : vector<8x1xf32> to vector<8x32xf32>
    %20 = arith.subf %2, %19 : vector<8x32xf32>
    %cst_12 = arith.constant 9.99999974E-6 : f32
    %21 = vector.broadcast %cst_12 : f32 to vector<8x1xf32>
    %22 = arith.addf %18, %21 : vector<8x1xf32>
    %23 = math.rsqrt %22 : vector<8x1xf32>
    %24 = vector.broadcast %23 : vector<8x1xf32> to vector<8x32xf32>
    %25 = arith.mulf %20, %24 : vector<8x32xf32>
    %26 = vector.broadcast %6 : vector<1x32xf32> to vector<8x32xf32>
    %27 = arith.mulf %25, %26 : vector<8x32xf32>
    %28 = vector.broadcast %7 : vector<1x32xf32> to vector<8x32xf32>
    %29 = arith.addf %27, %28 : vector<8x32xf32>
    %c0_13 = arith.constant 0 : index
    %c0_14 = arith.constant 0 : index
    %30 = vector.load %arg6[%c0_13, %c0_14] : memref<1x32xf32, #tpu.memory_space<vmem>>, vector<1x32xf32>
    %c0_15 = arith.constant 0 : index
    %c0_16 = arith.constant 0 : index
    %31 = vector.load %arg7[%c0_15, %c0_16] : memref<1x32xf32, #tpu.memory_space<vmem>>, vector<1x32xf32>
    %cst_17 = arith.constant dense<0.000000e+00> : vector<16xf32>
    %32 = vector.multi_reduction <add>, %5, %cst_17 [1] : vector<16x32xf32> to vector<16xf32>
    %33 = vector.shape_cast %32 : vector<16xf32> to vector<16x1xf32>
    %cst_18 = arith.constant 3.200000e+01 : f32
    %34 = vector.broadcast %cst_18 : f32 to vector<16x1xf32>
    %35 = arith.divf %33, %34 : vector<16x1xf32>
    %36 = vector.broadcast %35 : vector<16x1xf32> to vector<16x32xf32>
    %37 = arith.subf %5, %36 : vector<16x32xf32>
    %38 = arith.mulf %37, %37 : vector<16x32xf32>
    %cst_19 = arith.constant dense<0.000000e+00> : vector<16xf32>
    %39 = vector.multi_reduction <add>, %38, %cst_19 [1] : vector<16x32xf32> to vector<16xf32>
    %40 = vector.shape_cast %39 : vector<16xf32> to vector<16x1xf32>
    %cst_20 = arith.constant 3.200000e+01 : f32
    %41 = vector.broadcast %cst_20 : f32 to vector<16x1xf32>
    %42 = arith.divf %40, %41 : vector<16x1xf32>
    %43 = vector.broadcast %35 : vector<16x1xf32> to vector<16x32xf32>
    %44 = arith.subf %5, %43 : vector<16x32xf32>
    %cst_21 = arith.constant 9.99999974E-6 : f32
    %45 = vector.broadcast %cst_21 : f32 to vector<16x1xf32>
    %46 = arith.addf %42, %45 : vector<16x1xf32>
    %47 = math.rsqrt %46 : vector<16x1xf32>
    %48 = vector.broadcast %47 : vector<16x1xf32> to vector<16x32xf32>
    %49 = arith.mulf %44, %48 : vector<16x32xf32>
    %50 = vector.broadcast %30 : vector<1x32xf32> to vector<16x32xf32>
    %51 = arith.mulf %49, %50 : vector<16x32xf32>
    %52 = vector.broadcast %31 : vector<1x32xf32> to vector<16x32xf32>
    %53 = arith.addf %51, %52 : vector<16x32xf32>
    %54 = arith.truncf %29 : vector<8x32xf32> to vector<8x32xbf16>
    %c0_22 = arith.constant 0 : index
    %c0_23 = arith.constant 0 : index
    %55 = vector.load %arg10[%c0_22, %c0_23] : memref<32x32xbf16, #tpu.memory_space<vmem>>, vector<32x32xbf16>
    %cst_24 = arith.constant dense<0.000000e+00> : vector<8x32xf32>
    %56 = tpu.matmul %54, %55, %cst_24 {dimension_numbers = #tpu.dot_dimension_numbers<[1], [0], [0], [1], [0, 0, 1, 1], [], []>} : vector<8x32xbf16>, vector<32x32xbf16>, vector<8x32xf32> -> vector<8x32xf32>
    %c0_25 = arith.constant 0 : index
    %c0_26 = arith.constant 0 : index
    %57 = vector.load %arg11[%c0_25, %c0_26] : memref<1x32xf32, #tpu.memory_space<vmem>>, vector<1x32xf32>
    %58 = vector.broadcast %57 : vector<1x32xf32> to vector<8x32xf32>
    %59 = arith.addf %56, %58 : vector<8x32xf32>
    %60 = arith.truncf %53 : vector<16x32xf32> to vector<16x32xbf16>
    %c0_27 = arith.constant 0 : index
    %c0_28 = arith.constant 0 : index
    %61 = vector.load %arg12[%c0_27, %c0_28] : memref<32x64xbf16, #tpu.memory_space<vmem>>, vector<32x64xbf16>
    %cst_29 = arith.constant dense<0.000000e+00> : vector<16x64xf32>
    %62 = tpu.matmul %60, %61, %cst_29 {dimension_numbers = #tpu.dot_dimension_numbers<[1], [0], [0], [1], [0, 0, 1, 1], [], []>} : vector<16x32xbf16>, vector<32x64xbf16>, vector<16x64xf32> -> vector<16x64xf32>
    %c0_30 = arith.constant 0 : index
    %c0_31 = arith.constant 0 : index
    %63 = vector.load %arg13[%c0_30, %c0_31] : memref<1x64xf32, #tpu.memory_space<vmem>>, vector<1x64xf32>
    %64 = vector.broadcast %63 : vector<1x64xf32> to vector<16x64xf32>
    %65 = arith.addf %62, %64 : vector<16x64xf32>
    %66 = vector.shape_cast %59 : vector<8x32xf32> to vector<1x8x32xf32>
    %67 = tpu.transpose %66, [0, 2, 1] : vector<1x8x32xf32> -> vector<1x32x8xf32>
    %68 = vector.shape_cast %67 : vector<1x32x8xf32> to vector<4x8x8xf32>
    %69 = tpu.transpose %68, [0, 2, 1] : vector<4x8x8xf32> -> vector<4x8x8xf32>
    %70 = arith.truncf %69 : vector<4x8x8xf32> to vector<4x8x8xbf16>
    %71 = vector.extract_strided_slice %65 {offsets = [0, 0], sizes = [16, 32], strides = [1, 1]} : vector<16x64xf32> to vector<16x32xf32>
    %72 = vector.shape_cast %71 : vector<16x32xf32> to vector<1x16x32xf32>
    %73 = tpu.transpose %72, [0, 2, 1] : vector<1x16x32xf32> -> vector<1x32x16xf32>
    %74 = vector.shape_cast %73 : vector<1x32x16xf32> to vector<4x8x16xf32>
    %75 = tpu.transpose %74, [0, 2, 1] : vector<4x8x16xf32> -> vector<4x16x8xf32>
    %76 = arith.truncf %75 : vector<4x16x8xf32> to vector<4x16x8xbf16>
    %77 = vector.extract_strided_slice %65 {offsets = [0, 32], sizes = [16, 32], strides = [1, 1]} : vector<16x64xf32> to vector<16x32xf32>
    %78 = vector.shape_cast %77 : vector<16x32xf32> to vector<1x16x32xf32>
    %79 = tpu.transpose %78, [0, 2, 1] : vector<1x16x32xf32> -> vector<1x32x16xf32>
    %80 = vector.shape_cast %79 : vector<1x32x16xf32> to vector<4x8x16xf32>
    %81 = tpu.transpose %80, [0, 2, 1] : vector<4x8x16xf32> -> vector<4x16x8xf32>
    %82 = arith.truncf %81 : vector<4x16x8xf32> to vector<4x16x8xbf16>
    "tpu.trace_start"() <{level = 10 : i32, message = "bqd,bkd->bqk"}> : () -> ()
    %cst_32 = arith.constant dense<0.000000e+00> : vector<4x8x16xf32>
    %83 = tpu.matmul %70, %76, %cst_32 {dimension_numbers = #tpu.dot_dimension_numbers<[2], [2], [1], [1], [0, 0, 0, 1, 1, 1], [0], [0]>} : vector<4x8x8xbf16>, vector<4x16x8xbf16>, vector<4x8x16xf32> -> vector<4x8x16xf32>
    "tpu.trace_stop"() : () -> ()
    %c0_33 = arith.constant 0 : index
    %c0_34 = arith.constant 0 : index
    %c0_35 = arith.constant 0 : index
    %84 = vector.load %arg3[%c0_33, %c0_34, %c0_35] : memref<1x1x16xf32, #tpu.memory_space<vmem>>, vector<1x1x16xf32>
    %85 = vector.shape_cast %84 : vector<1x1x16xf32> to vector<1x16xf32>
    %cst_36 = arith.constant -1.000000e+30 : f32
    %86 = vector.broadcast %cst_36 : f32 to vector<1x16xf32>
    %87 = arith.mulf %85, %86 : vector<1x16xf32>
    %88 = vector.shape_cast %87 : vector<1x16xf32> to vector<1x1x1x16xf32>
    %89 = vector.shape_cast %88 : vector<1x1x1x16xf32> to vector<1x1x1x16xf32>
    %90 = vector.broadcast %89 : vector<1x1x1x16xf32> to vector<1x4x1x16xf32>
    %91 = vector.shape_cast %90 : vector<1x4x1x16xf32> to vector<4x1x16xf32>
    %92 = vector.broadcast %91 : vector<4x1x16xf32> to vector<4x8x16xf32>
    %93 = arith.addf %83, %92 : vector<4x8x16xf32>
    %cst_37 = arith.constant dense<0xFF800000> : vector<4x8xf32>
    %94 = vector.multi_reduction <maximumf>, %93, %cst_37 [2] : vector<4x8x16xf32> to vector<4x8xf32>
    %95 = vector.shape_cast %94 : vector<4x8xf32> to vector<4x8x1xf32>
    %96 = vector.broadcast %95 : vector<4x8x1xf32> to vector<4x8x16xf32>
    %97 = arith.subf %93, %96 : vector<4x8x16xf32>
    %98 = math.exp %97 : vector<4x8x16xf32>
    %cst_38 = arith.constant dense<0.000000e+00> : vector<4x8xf32>
    %99 = vector.multi_reduction <add>, %98, %cst_38 [2] : vector<4x8x16xf32> to vector<4x8xf32>
    %100 = vector.shape_cast %99 : vector<4x8xf32> to vector<4x8x1xf32>
    %101 = tpu.reciprocal %100 {approx = true} : vector<4x8x1xf32> -> vector<4x8x1xf32>
    %102 = vector.broadcast %101 : vector<4x8x1xf32> to vector<4x8x16xf32>
    %103 = arith.mulf %98, %102 : vector<4x8x16xf32>
    %104 = arith.truncf %103 : vector<4x8x16xf32> to vector<4x8x16xbf16>
    "tpu.trace_start"() <{level = 10 : i32, message = "bqk,bkd->bqd"}> : () -> ()
    %cst_39 = arith.constant dense<0.000000e+00> : vector<4x8x8xf32>
    %105 = tpu.matmul %104, %82, %cst_39 {dimension_numbers = #tpu.dot_dimension_numbers<[2], [1], [1], [2], [0, 0, 0, 1, 1, 2], [0], [0]>} : vector<4x8x16xbf16>, vector<4x16x8xbf16>, vector<4x8x8xf32> -> vector<4x8x8xf32>
    "tpu.trace_stop"() : () -> ()
    %106 = tpu.transpose %105, [0, 2, 1] : vector<4x8x8xf32> -> vector<4x8x8xf32>
    %107 = vector.shape_cast %106 : vector<4x8x8xf32> to vector<1x32x8xf32>
    %108 = tpu.transpose %107, [0, 2, 1] : vector<1x32x8xf32> -> vector<1x8x32xf32>
    %109 = vector.shape_cast %108 : vector<1x8x32xf32> to vector<8x32xf32>
    %110 = arith.truncf %109 : vector<8x32xf32> to vector<8x32xbf16>
    %c0_40 = arith.constant 0 : index
    %c0_41 = arith.constant 0 : index
    %111 = vector.load %arg14[%c0_40, %c0_41] : memref<32x32xbf16, #tpu.memory_space<vmem>>, vector<32x32xbf16>
    %cst_42 = arith.constant dense<0.000000e+00> : vector<8x32xf32>
    %112 = tpu.matmul %110, %111, %cst_42 {dimension_numbers = #tpu.dot_dimension_numbers<[1], [0], [0], [1], [0, 0, 1, 1], [], []>} : vector<8x32xbf16>, vector<32x32xbf16>, vector<8x32xf32> -> vector<8x32xf32>
    %c0_43 = arith.constant 0 : index
    %c0_44 = arith.constant 0 : index
    %113 = vector.load %arg15[%c0_43, %c0_44] : memref<1x32xf32, #tpu.memory_space<vmem>>, vector<1x32xf32>
    %114 = vector.broadcast %113 : vector<1x32xf32> to vector<8x32xf32>
    %115 = arith.addf %112, %114 : vector<8x32xf32>
    %116 = arith.addf %2, %115 : vector<8x32xf32>
    %c0_45 = arith.constant 0 : index
    %c0_46 = arith.constant 0 : index
    %117 = vector.load %arg8[%c0_45, %c0_46] : memref<1x32xf32, #tpu.memory_space<vmem>>, vector<1x32xf32>
    %c0_47 = arith.constant 0 : index
    %c0_48 = arith.constant 0 : index
    %118 = vector.load %arg9[%c0_47, %c0_48] : memref<1x32xf32, #tpu.memory_space<vmem>>, vector<1x32xf32>
    %cst_49 = arith.constant dense<0.000000e+00> : vector<8xf32>
    %119 = vector.multi_reduction <add>, %116, %cst_49 [1] : vector<8x32xf32> to vector<8xf32>
    %120 = vector.shape_cast %119 : vector<8xf32> to vector<8x1xf32>
    %cst_50 = arith.constant 3.200000e+01 : f32
    %121 = vector.broadcast %cst_50 : f32 to vector<8x1xf32>
    %122 = arith.divf %120, %121 : vector<8x1xf32>
    %123 = vector.broadcast %122 : vector<8x1xf32> to vector<8x32xf32>
    %124 = arith.subf %116, %123 : vector<8x32xf32>
    %125 = arith.mulf %124, %124 : vector<8x32xf32>
    %cst_51 = arith.constant dense<0.000000e+00> : vector<8xf32>
    %126 = vector.multi_reduction <add>, %125, %cst_51 [1] : vector<8x32xf32> to vector<8xf32>
    %127 = vector.shape_cast %126 : vector<8xf32> to vector<8x1xf32>
    %cst_52 = arith.constant 3.200000e+01 : f32
    %128 = vector.broadcast %cst_52 : f32 to vector<8x1xf32>
    %129 = arith.divf %127, %128 : vector<8x1xf32>
    %130 = vector.broadcast %122 : vector<8x1xf32> to vector<8x32xf32>
    %131 = arith.subf %116, %130 : vector<8x32xf32>
    %cst_53 = arith.constant 9.99999974E-6 : f32
    %132 = vector.broadcast %cst_53 : f32 to vector<8x1xf32>
    %133 = arith.addf %129, %132 : vector<8x1xf32>
    %134 = math.rsqrt %133 : vector<8x1xf32>
    %135 = vector.broadcast %134 : vector<8x1xf32> to vector<8x32xf32>
    %136 = arith.mulf %131, %135 : vector<8x32xf32>
    %137 = vector.broadcast %117 : vector<1x32xf32> to vector<8x32xf32>
    %138 = arith.mulf %136, %137 : vector<8x32xf32>
    %139 = vector.broadcast %118 : vector<1x32xf32> to vector<8x32xf32>
    %140 = arith.addf %138, %139 : vector<8x32xf32>
    %141 = arith.truncf %140 : vector<8x32xf32> to vector<8x32xbf16>
    %c0_54 = arith.constant 0 : index
    %c0_55 = arith.constant 0 : index
    %142 = vector.load %arg16[%c0_54, %c0_55] : memref<32x128xbf16, #tpu.memory_space<vmem>>, vector<32x128xbf16>
    %cst_56 = arith.constant dense<0.000000e+00> : vector<8x128xf32>
    %143 = tpu.matmul %141, %142, %cst_56 {dimension_numbers = #tpu.dot_dimension_numbers<[1], [0], [0], [1], [0, 0, 1, 1], [], []>} : vector<8x32xbf16>, vector<32x128xbf16>, vector<8x128xf32> -> vector<8x128xf32>
    %c0_57 = arith.constant 0 : index
    %c0_58 = arith.constant 0 : index
    %144 = vector.load %arg17[%c0_57, %c0_58] : memref<1x128xf32, #tpu.memory_space<vmem>>, vector<1x128xf32>
    %145 = vector.broadcast %144 : vector<1x128xf32> to vector<8x128xf32>
    %146 = arith.addf %143, %145 : vector<8x128xf32>
    %cst_59 = arith.constant 1.702000e+00 : f32
    %147 = vector.broadcast %cst_59 : f32 to vector<8x128xf32>
    %148 = arith.mulf %147, %146 : vector<8x128xf32>
    %149 = arith.negf %148 : vector<8x128xf32>
    %150 = math.exp %149 : vector<8x128xf32>
    %cst_60 = arith.constant 1.000000e+00 : f32
    %151 = vector.broadcast %cst_60 : f32 to vector<8x128xf32>
    %152 = arith.addf %151, %150 : vector<8x128xf32>
    %153 = arith.divf %151, %152 : vector<8x128xf32>
    %154 = arith.mulf %146, %153 : vector<8x128xf32>
    %155 = arith.truncf %154 : vector<8x128xf32> to vector<8x128xbf16>
    %c0_61 = arith.constant 0 : index
    %c0_62 = arith.constant 0 : index
    %156 = vector.load %arg18[%c0_61, %c0_62] : memref<128x32xbf16, #tpu.memory_space<vmem>>, vector<128x32xbf16>
    %cst_63 = arith.constant dense<0.000000e+00> : vector<8x32xf32>
    %157 = tpu.matmul %155, %156, %cst_63 {dimension_numbers = #tpu.dot_dimension_numbers<[1], [0], [0], [1], [0, 0, 1, 1], [], []>} : vector<8x128xbf16>, vector<128x32xbf16>, vector<8x32xf32> -> vector<8x32xf32>
    %c0_64 = arith.constant 0 : index
    %c0_65 = arith.constant 0 : index
    %158 = vector.load %arg19[%c0_64, %c0_65] : memref<1x32xf32, #tpu.memory_space<vmem>>, vector<1x32xf32>
    %159 = vector.broadcast %158 : vector<1x32xf32> to vector<8x32xf32>
    %160 = arith.addf %157, %159 : vector<8x32xf32>
    %161 = arith.addf %116, %160 : vector<8x32xf32>
    %162 = vector.shape_cast %161 : vector<8x32xf32> to vector<1x1x256xf32>
    %163 = arith.truncf %162 : vector<1x1x256xf32> to vector<1x1x256xbf16>
    %c0_66 = arith.constant 0 : index
    %c0_67 = arith.constant 0 : index
    %c0_68 = arith.constant 0 : index
    %164 = vector.load %arg20[%c0_66, %c0_67, %c0_68] : memref<1x1x256xbf16, #tpu.memory_space<vmem>>, vector<1x1x256xbf16>
    tpu.vector_store %arg20[%c0_66, %c0_67, %c0_68], %163 {strides = array<i32>} : memref<1x1x256xbf16, #tpu.memory_space<vmem>>, vector<1x1x256xbf16>,
    return
  }
  func.func @transform_0(%arg0: i32) -> (i32, i32, i32) {
    %c0_i32 = arith.constant 0 : i32
    %c0_i32_0 = arith.constant 0 : i32
    %c0_i32_1 = arith.constant 0 : i32
    return %arg0, %c0_i32, %c0_i32_0 : i32, i32, i32
  }
  func.func @transform_1(%arg0: i32) -> (i32, i32, i32) {
    %c0_i32 = arith.constant 0 : i32
    %c0_i32_0 = arith.constant 0 : i32
    %c0_i32_1 = arith.constant 0 : i32
    return %arg0, %c0_i32, %c0_i32_0 : i32, i32, i32
  }
  func.func @transform_2(%arg0: i32) -> (i32, i32, i32) {
    %c0_i32 = arith.constant 0 : i32
    %c0_i32_0 = arith.constant 0 : i32
    %c0_i32_1 = arith.constant 0 : i32
    return %arg0, %c0_i32, %c0_i32_0 : i32, i32, i32
  }
  func.func @transform_3(%arg0: i32) -> (i32, i32) {
    %c0_i32 = arith.constant 0 : i32
    %c0_i32_0 = arith.constant 0 : i32
    %c0_i32_1 = arith.constant 0 : i32
    return %c0_i32, %c0_i32_0 : i32, i32
  }
  func.func @transform_4(%arg0: i32) -> (i32, i32) {
    %c0_i32 = arith.constant 0 : i32
    %c0_i32_0 = arith.constant 0 : i32
    %c0_i32_1 = arith.constant 0 : i32
    return %c0_i32, %c0_i32_0 : i32, i32
  }
  func.func @transform_5(%arg0: i32) -> (i32, i32) {
    %c0_i32 = arith.constant 0 : i32
    %c0_i32_0 = arith.constant 0 : i32
    %c0_i32_1 = arith.constant 0 : i32
    return %c0_i32, %c0_i32_0 : i32, i32
  }
  func.func @transform_6(%arg0: i32) -> (i32, i32) {
    %c0_i32 = arith.constant 0 : i32
    %c0_i32_0 = arith.constant 0 : i32
    %c0_i32_1 = arith.constant 0 : i32
    return %c0_i32, %c0_i32_0 : i32, i32
  }
  func.func @transform_7(%arg0: i32) -> (i32, i32) {
    %c0_i32 = arith.constant 0 : i32
    %c0_i32_0 = arith.constant 0 : i32
    %c0_i32_1 = arith.constant 0 : i32
    return %c0_i32, %c0_i32_0 : i32, i32
  }
  func.func @transform_8(%arg0: i32) -> (i32, i32) {
    %c0_i32 = arith.constant 0 : i32
    %c0_i32_0 = arith.constant 0 : i32
    %c0_i32_1 = arith.constant 0 : i32
    return %c0_i32, %c0_i32_0 : i32, i32
  }
  func.func @transform_9(%arg0: i32) -> (i32, i32) {
    %c0_i32 = arith.constant 0 : i32
    %c0_i32_0 = arith.constant 0 : i32
    %c0_i32_1 = arith.constant 0 : i32
    return %c0_i32, %c0_i32_0 : i32, i32
  }
  func.func @transform_10(%arg0: i32) -> (i32, i32) {
    %c0_i32 = arith.constant 0 : i32
    %c0_i32_0 = arith.constant 0 : i32
    %c0_i32_1 = arith.constant 0 : i32
    return %c0_i32, %c0_i32_0 : i32, i32
  }
  func.func @transform_11(%arg0: i32) -> (i32, i32) {
    %c0_i32 = arith.constant 0 : i32
    %c0_i32_0 = arith.constant 0 : i32
    %c0_i32_1 = arith.constant 0 : i32
    return %c0_i32, %c0_i32_0 : i32, i32
  }
  func.func @transform_12(%arg0: i32) -> (i32, i32) {
    %c0_i32 = arith.constant 0 : i32
    %c0_i32_0 = arith.constant 0 : i32
    %c0_i32_1 = arith.constant 0 : i32
    return %c0_i32, %c0_i32_0 : i32, i32
  }
  func.func @transform_13(%arg0: i32) -> (i32, i32) {
    %c0_i32 = arith.constant 0 : i32
    %c0_i32_0 = arith.constant 0 : i32
    %c0_i32_1 = arith.constant 0 : i32
    return %c0_i32, %c0_i32_0 : i32, i32
  }
  func.func @transform_14(%arg0: i32) -> (i32, i32) {
    %c0_i32 = arith.constant 0 : i32
    %c0_i32_0 = arith.constant 0 : i32
    %c0_i32_1 = arith.constant 0 : i32
    return %c0_i32, %c0_i32_0 : i32, i32
  }
  func.func @transform_15(%arg0: i32) -> (i32, i32) {
    %c0_i32 = arith.constant 0 : i32
    %c0_i32_0 = arith.constant 0 : i32
    %c0_i32_1 = arith.constant 0 : i32
    return %c0_i32, %c0_i32_0 : i32, i32
  }
  func.func @transform_16(%arg0: i32) -> (i32, i32) {
    %c0_i32 = arith.constant 0 : i32
    %c0_i32_0 = arith.constant 0 : i32
    %c0_i32_1 = arith.constant 0 : i32
    return %c0_i32, %c0_i32_0 : i32, i32
  }
  func.func @transform_17(%arg0: i32) -> (i32, i32) {
    %c0_i32 = arith.constant 0 : i32
    %c0_i32_0 = arith.constant 0 : i32
    %c0_i32_1 = arith.constant 0 : i32
    return %c0_i32, %c0_i32_0 : i32, i32
  }
  func.func @transform_18(%arg0: i32) -> (i32, i32) {
    %c0_i32 = arith.constant 0 : i32
    %c0_i32_0 = arith.constant 0 : i32
    %c0_i32_1 = arith.constant 0 : i32
    return %c0_i32, %c0_i32_0 : i32, i32
  }
  func.func @transform_19(%arg0: i32) -> (i32, i32, i32) {
    %c0_i32 = arith.constant 0 : i32
    %c0_i32_0 = arith.constant 0 : i32
    %c0_i32_1 = arith.constant 0 : i32
    return %arg0, %c0_i32, %c0_i32_0 : i32, i32, i32
  }
}

module attributes {stable_mosaic.version = 11 : i64} {
  func.func @cross_block_kernel(%arg0: i32, %arg1: memref<1x1x256xbf16, #tpu.memory_space<vmem>>, %arg2: memref<1x1x512xbf16, #tpu.memory_space<vmem>>, %arg3: memref<1x1x16xf32, #tpu.memory_space<vmem>>, %arg4: memref<1x32xf32, #tpu.memory_space<vmem>>, %arg5: memref<1x32xf32, #tpu.memory_space<vmem>>, %arg6: memref<1x32xf32, #tpu.memory_space<vmem>>, %arg7: memref<1x32xf32, #tpu.memory_space<vmem>>, %arg8: memref<1x32xf32, #tpu.memory_space<vmem>>, %arg9: memref<1x32xf32, #tpu.memory_space<vmem>>, %arg10: memref<32x32xbf16, #tpu.memory_space<vmem>>, %arg11: memref<1x32xf32, #tpu.memory_space<vmem>>, %arg12: memref<32x64xbf16, #tpu.memory_space<vmem>>, %arg13: memref<1x64xf32, #tpu.memory_space<vmem>>, %arg14: memref<32x32xbf16, #tpu.memory_space<vmem>>, %arg15: memref<1x32xf32, #tpu.memory_space<vmem>>, %arg16: memref<32x128xbf16, #tpu.memory_space<vmem>>, %arg17: memref<1x128xf32, #tpu.memory_space<vmem>>, %arg18: memref<128x32xbf16, #tpu.memory_space<vmem>>, %arg19: memref<1x32xf32, #tpu.memory_space<vmem>>, %arg20: memref<1x1x256xbf16, #tpu.memory_space<vmem>>) attributes {dimension_semantics = [#tpu.dimension_semantics<parallel>], iteration_bounds = array<i64: 2>, scalar_prefetch = 0 : i64, scratch_operands = 0 : i64, tpu.core_type = #tpu.core_type<tc>, window_params = [{transform_indices = @transform_0, window_bounds = array<i64: 1, 1, 256>}, {transform_indices = @transform_1, window_bounds = array<i64: 1, 1, 512>}, {transform_indices = @transform_2, window_bounds = array<i64: 1, 1, 16>}, {pipeline_mode = #tpu.pipeline_mode<synchronous>, transform_indices = @transform_3, window_bounds = array<i64: 1, 32>}, {pipeline_mode = #tpu.pipeline_mode<synchronous>, transform_indices = @transform_4, window_bounds = array<i64: 1, 32>}, {pipeline_mode = #tpu.pipeline_mode<synchronous>, transform_indices = @transform_5, window_bounds = array<i64: 1, 32>}, {pipeline_mode = #tpu.pipeline_mode<synchronous>, transform_indices = @transform_6, window_bounds = array<i64: 1, 32>}, {pipeline_mode = #tpu.pipeline_mode<synchronous>, transform_indices = @transform_7, window_bounds = array<i64: 1, 32>}, {pipeline_mode = #tpu.pipeline_mode<synchronous>, transform_indices = @transform_8, window_bounds = array<i64: 1, 32>}, {pipeline_mode = #tpu.pipeline_mode<synchronous>, transform_indices = @transform_9, window_bounds = array<i64: 32, 32>}, {pipeline_mode = #tpu.pipeline_mode<synchronous>, transform_indices = @transform_10, window_bounds = array<i64: 1, 32>}, {pipeline_mode = #tpu.pipeline_mode<synchronous>, transform_indices = @transform_11, window_bounds = array<i64: 32, 64>}, {pipeline_mode = #tpu.pipeline_mode<synchronous>, transform_indices = @transform_12, window_bounds = array<i64: 1, 64>}, {pipeline_mode = #tpu.pipeline_mode<synchronous>, transform_indices = @transform_13, window_bounds = array<i64: 32, 32>}, {pipeline_mode = #tpu.pipeline_mode<synchronous>, transform_indices = @transform_14, window_bounds = array<i64: 1, 32>}, {pipeline_mode = #tpu.pipeline_mode<synchronous>, transform_indices = @transform_15, window_bounds = array<i64: 32, 128>}, {pipeline_mode = #tpu.pipeline_mode<synchronous>, transform_indices = @transform_16, window_bounds = array<i64: 1, 128>}, {pipeline_mode = #tpu.pipeline_mode<synchronous>, transform_indices = @transform_17, window_bounds = array<i64: 128, 32>}, {pipeline_mode = #tpu.pipeline_mode<synchronous>, transform_indices = @transform_18, window_bounds = array<i64: 1, 32>}, {transform_indices = @transform_19, window_bounds = array<i64: 1, 1, 256>}]} {
    %c0 = arith.constant 0 : index
    %c0_0 = arith.constant 0 : index
    %c0_1 = arith.constant 0 : index
    %0 = vector.load %arg1[%c0, %c0_0, %c0_1] : memref<1x1x256xbf16, #tpu.memory_space<vmem>>, vector<1x1x256xbf16>
    %1 = arith.extf %0 : vector<1x1x256xbf16> to vector<1x1x256xf32>
    %2 = vector.shape_cast %1 : vector<1x1x256xf32> to vector<8x32xf32>
    %c0_2 = arith.constant 0 : index
    %c0_3 = arith.constant 0 : index
    %c0_4 = arith.constant 0 : index
    %3 = vector.load %arg2[%c0_2, %c0_3, %c0_4] : memref<1x1x512xbf16, #tpu.memory_space<vmem>>, vector<1x1x512xbf16>
    %4 = arith.extf %3 : vector<1x1x512xbf16> to vector<1x1x512xf32>
    %5 = vector.shape_cast %4 : vector<1x1x512xf32> to vector<16x32xf32>
    %c0_5 = arith.constant 0 : index
    %c0_6 = arith.constant 0 : index
    %6 = vector.load %arg4[%c0_5, %c0_6] : memref<1x32xf32, #tpu.memory_space<vmem>>, vector<1x32xf32>
    %c0_7 = arith.constant 0 : index
    %c0_8 = arith.constant 0 : index
    %7 = vector.load %arg5[%c0_7, %c0_8] : memref<1x32xf32, #tpu.memory_space<vmem>>, vector<1x32xf32>
    %cst = arith.constant dense<0.000000e+00> : vector<8xf32>
    %8 = vector.multi_reduction <add>, %2, %cst [1] : vector<8x32xf32> to vector<8xf32>
    %9 = vector.shape_cast %8 : vector<8xf32> to vector<8x1xf32>
    %cst_9 = arith.constant 3.200000e+01 : f32
    %10 = vector.broadcast %cst_9 : f32 to vector<8x1xf32>
    %11 = arith.divf %9, %10 : vector<8x1xf32>
    %12 = vector.broadcast %11 : vector<8x1xf32> to vector<8x32xf32>
    %13 = arith.subf %2, %12 : vector<8x32xf32>
    %14 = arith.mulf %13, %13 : vector<8x32xf32>
    %cst_10 = arith.constant dense<0.000000e+00> : vector<8xf32>
    %15 = vector.multi_reduction <add>, %14, %cst_10 [1] : vector<8x32xf32> to vector<8xf32>
    %16 = vector.shape_cast %15 : vector<8xf32> to vector<8x1xf32>
    %cst_11 = arith.constant 3.200000e+01 : f32
    %17 = vector.broadcast %cst_11 : f32 to vector<8x1xf32>
    %18 = arith.divf %16, %17 : vector<8x1xf32>
    %19 = vector.broadcast %11 : vector<8x1xf32> to vector<8x32xf32>
    %20 = arith.subf %2, %19 : vector<8x32xf32>
    %cst_12 = arith.constant 9.99999974E-6 : f32
    %21 = vector.broadcast %cst_12 : f32 to vector<8x1xf32>
    %22 = arith.addf %18, %21 : vector<8x1xf32>
    %23 = math.rsqrt %22 : vector<8x1xf32>
    %24 = vector.broadcast %23 : vector<8x1xf32> to vector<8x32xf32>
    %25 = arith.mulf %20, %24 : vector<8x32xf32>
    %26 = vector.broadcast %6 : vector<1x32xf32> to vector<8x32xf32>
    %27 = arith.mulf %25, %26 : vector<8x32xf32>
    %28 = vector.broadcast %7 : vector<1x32xf32> to vector<8x32xf32>
    %29 = arith.addf %27, %28 : vector<8x32xf32>
    %c0_13 = arith.constant 0 : index
    %c0_14 = arith.constant 0 : index
    %30 = vector.load %arg6[%c0_13, %c0_14] : memref<1x32xf32, #tpu.memory_space<vmem>>, vector<1x32xf32>
    %c0_15 = arith.constant 0 : index
    %c0_16 = arith.constant 0 : index
    %31 = vector.load %arg7[%c0_15, %c0_16] : memref<1x32xf32, #tpu.memory_space<vmem>>, vector<1x32xf32>
    %cst_17 = arith.constant dense<0.000000e+00> : vector<16xf32>
    %32 = vector.multi_reduction <add>, %5, %cst_17 [1] : vector<16x32xf32> to vector<16xf32>
    %33 = vector.shape_cast %32 : vector<16xf32> to vector<16x1xf32>
    %cst_18 = arith.constant 3.200000e+01 : f32
    %34 = vector.broadcast %cst_18 : f32 to vector<16x1xf32>
    %35 = arith.divf %33, %34 : vector<16x1xf32>
    %36 = vector.broadcast %35 : vector<16x1xf32> to vector<16x32xf32>
    %37 = arith.subf %5, %36 : vector<16x32xf32>
    %38 = arith.mulf %37, %37 : vector<16x32xf32>
    %cst_19 = arith.constant dense<0.000000e+00> : vector<16xf32>
    %39 = vector.multi_reduction <add>, %38, %cst_19 [1] : vector<16x32xf32> to vector<16xf32>
    %40 = vector.shape_cast %39 : vector<16xf32> to vector<16x1xf32>
    %cst_20 = arith.constant 3.200000e+01 : f32
    %41 = vector.broadcast %cst_20 : f32 to vector<16x1xf32>
    %42 = arith.divf %40, %41 : vector<16x1xf32>
    %43 = vector.broadcast %35 : vector<16x1xf32> to vector<16x32xf32>
    %44 = arith.subf %5, %43 : vector<16x32xf32>
    %cst_21 = arith.constant 9.99999974E-6 : f32
    %45 = vector.broadcast %cst_21 : f32 to vector<16x1xf32>
    %46 = arith.addf %42, %45 : vector<16x1xf32>
    %47 = math.rsqrt %46 : vector<16x1xf32>
    %48 = vector.broadcast %47 : vector<16x1xf32> to vector<16x32xf32>
    %49 = arith.mulf %44, %48 : vector<16x32xf32>
    %50 = vector.broadcast %30 : vector<1x32xf32> to vector<16x32xf32>
    %51 = arith.mulf %49, %50 : vector<16x32xf32>
    %52 = vector.broadcast %31 : vector<1x32xf32> to vector<16x32xf32>
    %53 = arith.addf %51, %52 : vector<16x32xf32>
    %54 = arith.truncf %29 : vector<8x32xf32> to vector<8x32xbf16>
    %c0_22 = arith.constant 0 : index
    %c0_23 = arith.constant 0 : index
    %55 = vector.load %arg10[%c0_22, %c0_23] : memref<32x32xbf16, #tpu.memory_space<vmem>>, vector<32x32xbf16>
    %cst_24 = arith.constant dense<0.000000e+00> : vector<8x32xf32>
    %56 = tpu.matmul %54, %55, %cst_24 {dimension_numbers = #tpu.dot_dimension_numbers<[1], [0], [0], [1], [0, 0, 1, 1], [], []>} : vector<8x32xbf16>, vector<32x32xbf16>, vector<8x32xf32> -> vector<8x32xf32>
    %c0_25 = arith.constant 0 : index
    %c0_26 = arith.constant 0 : index
    %57 = vector.load %arg11[%c0_25, %c0_26] : memref<1x32xf32, #tpu.memory_space<vmem>>, vector<1x32xf32>
    %58 = vector.broadcast %57 : vector<1x32xf32> to vector<8x32xf32>
    %59 = arith.addf %56, %58 : vector<8x32xf32>
    %60 = arith.truncf %53 : vector<16x32xf32> to vector<16x32xbf16>
    %c0_27 = arith.constant 0 : index
    %c0_28 = arith.constant 0 : index
    %61 = vector.load %arg12[%c0_27, %c0_28] : memref<32x64xbf16, #tpu.memory_space<vmem>>, vector<32x64xbf16>
    %cst_29 = arith.constant dense<0.000000e+00> : vector<16x64xf32>
    %62 = tpu.matmul %60, %61, %cst_29 {dimension_numbers = #tpu.dot_dimension_numbers<[1], [0], [0], [1], [0, 0, 1, 1], [], []>} : vector<16x32xbf16>, vector<32x64xbf16>, vector<16x64xf32> -> vector<16x64xf32>
    %c0_30 = arith.constant 0 : index
    %c0_31 = arith.constant 0 : index
    %63 = vector.load %arg13[%c0_30, %c0_31] : memref<1x64xf32, #tpu.memory_space<vmem>>, vector<1x64xf32>
    %64 = vector.broadcast %63 : vector<1x64xf32> to vector<16x64xf32>
    %65 = arith.addf %62, %64 : vector<16x64xf32>
    %66 = vector.shape_cast %59 : vector<8x32xf32> to vector<1x8x32xf32>
    %67 = tpu.transpose %66, [0, 2, 1] : vector<1x8x32xf32> -> vector<1x32x8xf32>
    %68 = vector.shape_cast %67 : vector<1x32x8xf32> to vector<4x8x8xf32>
    %69 = tpu.transpose %68, [0, 2, 1] : vector<4x8x8xf32> -> vector<4x8x8xf32>
    %70 = arith.truncf %69 : vector<4x8x8xf32> to vector<4x8x8xbf16>
    %71 = vector.extract_strided_slice %65 {offsets = [0, 0], sizes = [16, 32], strides = [1, 1]} : vector<16x64xf32> to vector<16x32xf32>
    %72 = vector.shape_cast %71 : vector<16x32xf32> to vector<1x16x32xf32>
    %73 = tpu.transpose %72, [0, 2, 1] : vector<1x16x32xf32> -> vector<1x32x16xf32>
    %74 = vector.shape_cast %73 : vector<1x32x16xf32> to vector<4x8x16xf32>
    %75 = tpu.transpose %74, [0, 2, 1] : vector<4x8x16xf32> -> vector<4x16x8xf32>
    %76 = arith.truncf %75 : vector<4x16x8xf32> to vector<4x16x8xbf16>
    %77 = vector.extract_strided_slice %65 {offsets = [0, 32], sizes = [16, 32], strides = [1, 1]} : vector<16x64xf32> to vector<16x32xf32>
    %78 = vector.shape_cast %77 : vector<16x32xf32> to vector<1x16x32xf32>
    %79 = tpu.transpose %78, [0, 2, 1] : vector<1x16x32xf32> -> vector<1x32x16xf32>
    %80 = vector.shape_cast %79 : vector<1x32x16xf32> to vector<4x8x16xf32>
    %81 = tpu.transpose %80, [0, 2, 1] : vector<4x8x16xf32> -> vector<4x16x8xf32>
    %82 = arith.truncf %81 : vector<4x16x8xf32> to vector<4x16x8xbf16>
    "tpu.trace_start"() <{level = 10 : i32, message = "bqd,bkd->bqk"}> : () -> ()
    %cst_32 = arith.constant dense<0.000000e+00> : vector<4x8x16xf32>
    %83 = tpu.matmul %70, %76, %cst_32 {dimension_numbers = #tpu.dot_dimension_numbers<[2], [2], [1], [1], [0, 0, 0, 1, 1, 1], [0], [0]>} : vector<4x8x8xbf16>, vector<4x16x8xbf16>, vector<4x8x16xf32> -> vector<4x8x16xf32>
    "tpu.trace_stop"() : () -> ()
    %c0_33 = arith.constant 0 : index
    %c0_34 = arith.constant 0 : index
    %c0_35 = arith.constant 0 : index
    %84 = vector.load %arg3[%c0_33, %c0_34, %c0_35] : memref<1x1x16xf32, #tpu.memory_space<vmem>>, vector<1x1x16xf32>
    %85 = vector.shape_cast %84 : vector<1x1x16xf32> to vector<1x16xf32>
    %cst_36 = arith.constant -1.000000e+30 : f32
    %86 = vector.broadcast %cst_36 : f32 to vector<1x16xf32>
    %87 = arith.mulf %85, %86 : vector<1x16xf32>
    %88 = vector.shape_cast %87 : vector<1x16xf32> to vector<1x1x1x16xf32>
    %89 = vector.shape_cast %88 : vector<1x1x1x16xf32> to vector<1x1x1x16xf32>
    %90 = vector.broadcast %89 : vector<1x1x1x16xf32> to vector<1x4x1x16xf32>
    %91 = vector.shape_cast %90 : vector<1x4x1x16xf32> to vector<4x1x16xf32>
    %92 = vector.broadcast %91 : vector<4x1x16xf32> to vector<4x8x16xf32>
    %93 = arith.addf %83, %92 : vector<4x8x16xf32>
    %cst_37 = arith.constant dense<0xFF800000> : vector<4x8xf32>
    %94 = vector.multi_reduction <maximumf>, %93, %cst_37 [2] : vector<4x8x16xf32> to vector<4x8xf32>
    %95 = vector.shape_cast %94 : vector<4x8xf32> to vector<4x8x1xf32>
    %96 = vector.broadcast %95 : vector<4x8x1xf32> to vector<4x8x16xf32>
    %97 = arith.subf %93, %96 : vector<4x8x16xf32>
    %98 = math.exp %97 : vector<4x8x16xf32>
    %cst_38 = arith.constant dense<0.000000e+00> : vector<4x8xf32>
    %99 = vector.multi_reduction <add>, %98, %cst_38 [2] : vector<4x8x16xf32> to vector<4x8xf32>
    %100 = vector.shape_cast %99 : vector<4x8xf32> to vector<4x8x1xf32>
    %101 = tpu.reciprocal %100 {approx = true} : vector<4x8x1xf32> -> vector<4x8x1xf32>
    %102 = vector.broadcast %101 : vector<4x8x1xf32> to vector<4x8x16xf32>
    %103 = arith.mulf %98, %102 : vector<4x8x16xf32>
    %104 = arith.truncf %103 : vector<4x8x16xf32> to vector<4x8x16xbf16>
    "tpu.trace_start"() <{level = 10 : i32, message = "bqk,bkd->bqd"}> : () -> ()
    %cst_39 = arith.constant dense<0.000000e+00> : vector<4x8x8xf32>
    %105 = tpu.matmul %104, %82, %cst_39 {dimension_numbers = #tpu.dot_dimension_numbers<[2], [1], [1], [2], [0, 0, 0, 1, 1, 2], [0], [0]>} : vector<4x8x16xbf16>, vector<4x16x8xbf16>, vector<4x8x8xf32> -> vector<4x8x8xf32>
    "tpu.trace_stop"() : () -> ()
    %106 = tpu.transpose %105, [0, 2, 1] : vector<4x8x8xf32> -> vector<4x8x8xf32>
    %107 = vector.shape_cast %106 : vector<4x8x8xf32> to vector<1x32x8xf32>
    %108 = tpu.transpose %107, [0, 2, 1] : vector<1x32x8xf32> -> vector<1x8x32xf32>
    %109 = vector.shape_cast %108 : vector<1x8x32xf32> to vector<8x32xf32>
    %110 = arith.truncf %109 : vector<8x32xf32> to vector<8x32xbf16>
    %c0_40 = arith.constant 0 : index
    %c0_41 = arith.constant 0 : index
    %111 = vector.load %arg14[%c0_40, %c0_41] : memref<32x32xbf16, #tpu.memory_space<vmem>>, vector<32x32xbf16>
    %cst_42 = arith.constant dense<0.000000e+00> : vector<8x32xf32>
    %112 = tpu.matmul %110, %111, %cst_42 {dimension_numbers = #tpu.dot_dimension_numbers<[1], [0], [0], [1], [0, 0, 1, 1], [], []>} : vector<8x32xbf16>, vector<32x32xbf16>, vector<8x32xf32> -> vector<8x32xf32>
    %c0_43 = arith.constant 0 : index
    %c0_44 = arith.constant 0 : index
    %113 = vector.load %arg15[%c0_43, %c0_44] : memref<1x32xf32, #tpu.memory_space<vmem>>, vector<1x32xf32>
    %114 = vector.broadcast %113 : vector<1x32xf32> to vector<8x32xf32>
    %115 = arith.addf %112, %114 : vector<8x32xf32>
    %116 = arith.addf %2, %115 : vector<8x32xf32>
    %c0_45 = arith.constant 0 : index
    %c0_46 = arith.constant 0 : index
    %117 = vector.load %arg8[%c0_45, %c0_46] : memref<1x32xf32, #tpu.memory_space<vmem>>, vector<1x32xf32>
    %c0_47 = arith.constant 0 : index
    %c0_48 = arith.constant 0 : index
    %118 = vector.load %arg9[%c0_47, %c0_48] : memref<1x32xf32, #tpu.memory_space<vmem>>, vector<1x32xf32>
    %cst_49 = arith.constant dense<0.000000e+00> : vector<8xf32>
    %119 = vector.multi_reduction <add>, %116, %cst_49 [1] : vector<8x32xf32> to vector<8xf32>
    %120 = vector.shape_cast %119 : vector<8xf32> to vector<8x1xf32>
    %cst_50 = arith.constant 3.200000e+01 : f32
    %121 = vector.broadcast %cst_50 : f32 to vector<8x1xf32>
    %122 = arith.divf %120, %121 : vector<8x1xf32>
    %123 = vector.broadcast %122 : vector<8x1xf32> to vector<8x32xf32>
    %124 = arith.subf %116, %123 : vector<8x32xf32>
    %125 = arith.mulf %124, %124 : vector<8x32xf32>
    %cst_51 = arith.constant dense<0.000000e+00> : vector<8xf32>
    %126 = vector.multi_reduction <add>, %125, %cst_51 [1] : vector<8x32xf32> to vector<8xf32>
    %127 = vector.shape_cast %126 : vector<8xf32> to vector<8x1xf32>
    %cst_52 = arith.constant 3.200000e+01 : f32
    %128 = vector.broadcast %cst_52 : f32 to vector<8x1xf32>
    %129 = arith.divf %127, %128 : vector<8x1xf32>
    %130 = vector.broadcast %122 : vector<8x1xf32> to vector<8x32xf32>
    %131 = arith.subf %116, %130 : vector<8x32xf32>
    %cst_53 = arith.constant 9.99999974E-6 : f32
    %132 = vector.broadcast %cst_53 : f32 to vector<8x1xf32>
    %133 = arith.addf %129, %132 : vector<8x1xf32>
    %134 = math.rsqrt %133 : vector<8x1xf32>
    %135 = vector.broadcast %134 : vector<8x1xf32> to vector<8x32xf32>
    %136 = arith.mulf %131, %135 : vector<8x32xf32>
    %137 = vector.broadcast %117 : vector<1x32xf32> to vector<8x32xf32>
    %138 = arith.mulf %136, %137 : vector<8x32xf32>
    %139 = vector.broadcast %118 : vector<1x32xf32> to vector<8x32xf32>
    %140 = arith.addf %138, %139 : vector<8x32xf32>
    %141 = arith.truncf %140 : vector<8x32xf32> to vector<8x32xbf16>
    %c0_54 = arith.constant 0 : index
    %c0_55 = arith.constant 0 : index
    %142 = vector.load %arg16[%c0_54, %c0_55] : memref<32x128xbf16, #tpu.memory_space<vmem>>, vector<32x128xbf16>
    %cst_56 = arith.constant dense<0.000000e+00> : vector<8x128xf32>
    %143 = tpu.matmul %141, %142, %cst_56 {dimension_numbers = #tpu.dot_dimension_numbers<[1], [0], [0], [1], [0, 0, 1, 1], [], []>} : vector<8x32xbf16>, vector<32x128xbf16>, vector<8x128xf32> -> vector<8x128xf32>
    %c0_57 = arith.constant 0 : index
    %c0_58 = arith.constant 0 : index
    %144 = vector.load %arg17[%c0_57, %c0_58] : memref<1x128xf32, #tpu.memory_space<vmem>>, vector<1x128xf32>
    %145 = vector.broadcast %144 : vector<1x128xf32> to vector<8x128xf32>
    %146 = arith.addf %143, %145 : vector<8x128xf32>
    %cst_59 = arith.constant 1.702000e+00 : f32
    %147 = vector.broadcast %cst_59 : f32 to vector<8x128xf32>
    %148 = arith.mulf %147, %146 : vector<8x128xf32>
    %149 = arith.negf %148 : vector<8x128xf32>
    %150 = math.exp %149 : vector<8x128xf32>
    %cst_60 = arith.constant 1.000000e+00 : f32
    %151 = vector.broadcast %cst_60 : f32 to vector<8x128xf32>
    %152 = arith.addf %151, %150 : vector<8x128xf32>
    %153 = arith.divf %151, %152 : vector<8x128xf32>
    %154 = arith.mulf %146, %153 : vector<8x128xf32>
    %155 = arith.truncf %154 : vector<8x128xf32> to vector<8x128xbf16>
    %c0_61 = arith.constant 0 : index
    %c0_62 = arith.constant 0 : index
    %156 = vector.load %arg18[%c0_61, %c0_62] : memref<128x32xbf16, #tpu.memory_space<vmem>>, vector<128x32xbf16>
    %cst_63 = arith.constant dense<0.000000e+00> : vector<8x32xf32>
    %157 = tpu.matmul %155, %156, %cst_63 {dimension_numbers = #tpu.dot_dimension_numbers<[1], [0], [0], [1], [0, 0, 1, 1], [], []>} : vector<8x128xbf16>, vector<128x32xbf16>, vector<8x32xf32> -> vector<8x32xf32>
    %c0_64 = arith.constant 0 : index
    %c0_65 = arith.constant 0 : index
    %158 = vector.load %arg19[%c0_64, %c0_65] : memref<1x32xf32, #tpu.memory_space<vmem>>, vector<1x32xf32>
    %159 = vector.broadcast %158 : vector<1x32xf32> to vector<8x32xf32>
    %160 = arith.addf %157, %159 : vector<8x32xf32>
    %161 = arith.addf %116, %160 : vector<8x32xf32>
    %162 = vector.shape_cast %161 : vector<8x32xf32> to vector<1x1x256xf32>
    %163 = arith.truncf %162 : vector<1x1x256xf32> to vector<1x1x256xbf16>
    %c0_66 = arith.constant 0 : index
    %c0_67 = arith.constant 0 : index
    %c0_68 = arith.constant 0 : index
    %164 = vector.load %arg20[%c0_66, %c0_67, %c0_68] : memref<1x1x256xbf16, #tpu.memory_space<vmem>>, vector<1x1x256xbf16>
    tpu.vector_store %arg20[%c0_66, %c0_67, %c0_68], %163 {strides = array<i32>} : memref<1x1x256xbf16, #tpu.memory_space<vmem>>, vector<1x1x256xbf16>,
    return
  }
  func.func @transform_0(%arg0: i32) -> (i32, i32, i32) {
    %c0_i32 = arith.constant 0 : i32
    %c0_i32_0 = arith.constant 0 : i32
    %c0_i32_1 = arith.constant 0 : i32
    return %arg0, %c0_i32, %c0_i32_0 : i32, i32, i32
  }
  func.func @transform_1(%arg0: i32) -> (i32, i32, i32) {
    %c0_i32 = arith.constant 0 : i32
    %c0_i32_0 = arith.constant 0 : i32
    %c0_i32_1 = arith.constant 0 : i32
    return %arg0, %c0_i32, %c0_i32_0 : i32, i32, i32
  }
  func.func @transform_2(%arg0: i32) -> (i32, i32, i32) {
    %c0_i32 = arith.constant 0 : i32
    %c0_i32_0 = arith.constant 0 : i32
    %c0_i32_1 = arith.constant 0 : i32
    return %arg0, %c0_i32, %c0_i32_0 : i32, i32, i32
  }
  func.func @transform_3(%arg0: i32) -> (i32, i32) {
    %c0_i32 = arith.constant 0 : i32
    %c0_i32_0 = arith.constant 0 : i32
    %c0_i32_1 = arith.constant 0 : i32
    return %c0_i32, %c0_i32_0 : i32, i32
  }
  func.func @transform_4(%arg0: i32) -> (i32, i32) {
    %c0_i32 = arith.constant 0 : i32
    %c0_i32_0 = arith.constant 0 : i32
    %c0_i32_1 = arith.constant 0 : i32
    return %c0_i32, %c0_i32_0 : i32, i32
  }
  func.func @transform_5(%arg0: i32) -> (i32, i32) {
    %c0_i32 = arith.constant 0 : i32
    %c0_i32_0 = arith.constant 0 : i32
    %c0_i32_1 = arith.constant 0 : i32
    return %c0_i32, %c0_i32_0 : i32, i32
  }
  func.func @transform_6(%arg0: i32) -> (i32, i32) {
    %c0_i32 = arith.constant 0 : i32
    %c0_i32_0 = arith.constant 0 : i32
    %c0_i32_1 = arith.constant 0 : i32
    return %c0_i32, %c0_i32_0 : i32, i32
  }
  func.func @transform_7(%arg0: i32) -> (i32, i32) {
    %c0_i32 = arith.constant 0 : i32
    %c0_i32_0 = arith.constant 0 : i32
    %c0_i32_1 = arith.constant 0 : i32
    return %c0_i32, %c0_i32_0 : i32, i32
  }
  func.func @transform_8(%arg0: i32) -> (i32, i32) {
    %c0_i32 = arith.constant 0 : i32
    %c0_i32_0 = arith.constant 0 : i32
    %c0_i32_1 = arith.constant 0 : i32
    return %c0_i32, %c0_i32_0 : i32, i32
  }
  func.func @transform_9(%arg0: i32) -> (i32, i32) {
    %c0_i32 = arith.constant 0 : i32
    %c0_i32_0 = arith.constant 0 : i32
    %c0_i32_1 = arith.constant 0 : i32
    return %c0_i32, %c0_i32_0 : i32, i32
  }
  func.func @transform_10(%arg0: i32) -> (i32, i32) {
    %c0_i32 = arith.constant 0 : i32
    %c0_i32_0 = arith.constant 0 : i32
    %c0_i32_1 = arith.constant 0 : i32
    return %c0_i32, %c0_i32_0 : i32, i32
  }
  func.func @transform_11(%arg0: i32) -> (i32, i32) {
    %c0_i32 = arith.constant 0 : i32
    %c0_i32_0 = arith.constant 0 : i32
    %c0_i32_1 = arith.constant 0 : i32
    return %c0_i32, %c0_i32_0 : i32, i32
  }
  func.func @transform_12(%arg0: i32) -> (i32, i32) {
    %c0_i32 = arith.constant 0 : i32
    %c0_i32_0 = arith.constant 0 : i32
    %c0_i32_1 = arith.constant 0 : i32
    return %c0_i32, %c0_i32_0 : i32, i32
  }
  func.func @transform_13(%arg0: i32) -> (i32, i32) {
    %c0_i32 = arith.constant 0 : i32
    %c0_i32_0 = arith.constant 0 : i32
    %c0_i32_1 = arith.constant 0 : i32
    return %c0_i32, %c0_i32_0 : i32, i32
  }
  func.func @transform_14(%arg0: i32) -> (i32, i32) {
    %c0_i32 = arith.constant 0 : i32
    %c0_i32_0 = arith.constant 0 : i32
    %c0_i32_1 = arith.constant 0 : i32
    return %c0_i32, %c0_i32_0 : i32, i32
  }
  func.func @transform_15(%arg0: i32) -> (i32, i32) {
    %c0_i32 = arith.constant 0 : i32
    %c0_i32_0 = arith.constant 0 : i32
    %c0_i32_1 = arith.constant 0 : i32
    return %c0_i32, %c0_i32_0 : i32, i32
  }
  func.func @transform_16(%arg0: i32) -> (i32, i32) {
    %c0_i32 = arith.constant 0 : i32
    %c0_i32_0 = arith.constant 0 : i32
    %c0_i32_1 = arith.constant 0 : i32
    return %c0_i32, %c0_i32_0 : i32, i32
  }
  func.func @transform_17(%arg0: i32) -> (i32, i32) {
    %c0_i32 = arith.constant 0 : i32
    %c0_i32_0 = arith.constant 0 : i32
    %c0_i32_1 = arith.constant 0 : i32
    return %c0_i32, %c0_i32_0 : i32, i32
  }
  func.func @transform_18(%arg0: i32) -> (i32, i32) {
    %c0_i32 = arith.constant 0 : i32
    %c0_i32_0 = arith.constant 0 : i32
    %c0_i32_1 = arith.constant 0 : i32
    return %c0_i32, %c0_i32_0 : i32, i32
  }
  func.func @transform_19(%arg0: i32) -> (i32, i32, i32) {
    %c0_i32 = arith.constant 0 : i32
    %c0_i32_0 = arith.constant 0 : i32
    %c0_i32_1 = arith.constant 0 : i32
    return %arg0, %c0_i32, %c0_i32_0 : i32, i32, i32
  }
}

module attributes {stable_mosaic.version = 11 : i64} {
  func.func @cross_block_kernel(%arg0: i32, %arg1: memref<1x8x32xbf16, #tpu.memory_space<vmem>>, %arg2: memref<1x16x32xbf16, #tpu.memory_space<vmem>>, %arg3: memref<1x1x16xf32, #tpu.memory_space<vmem>>, %arg4: memref<1x32xf32, #tpu.memory_space<vmem>>, %arg5: memref<1x32xf32, #tpu.memory_space<vmem>>, %arg6: memref<1x32xf32, #tpu.memory_space<vmem>>, %arg7: memref<1x32xf32, #tpu.memory_space<vmem>>, %arg8: memref<1x32xf32, #tpu.memory_space<vmem>>, %arg9: memref<1x32xf32, #tpu.memory_space<vmem>>, %arg10: memref<32x32xbf16, #tpu.memory_space<vmem>>, %arg11: memref<1x32xf32, #tpu.memory_space<vmem>>, %arg12: memref<32x64xbf16, #tpu.memory_space<vmem>>, %arg13: memref<1x64xf32, #tpu.memory_space<vmem>>, %arg14: memref<32x32xbf16, #tpu.memory_space<vmem>>, %arg15: memref<1x32xf32, #tpu.memory_space<vmem>>, %arg16: memref<32x128xbf16, #tpu.memory_space<vmem>>, %arg17: memref<1x128xf32, #tpu.memory_space<vmem>>, %arg18: memref<128x32xbf16, #tpu.memory_space<vmem>>, %arg19: memref<1x32xf32, #tpu.memory_space<vmem>>, %arg20: memref<1x8x32xbf16, #tpu.memory_space<vmem>>) attributes {dimension_semantics = [#tpu.dimension_semantics<parallel>], iteration_bounds = array<i64: 2>, scalar_prefetch = 0 : i64, scratch_operands = 0 : i64, tpu.core_type = #tpu.core_type<tc>, window_params = [{transform_indices = @transform_0, window_bounds = array<i64: 1, 8, 32>}, {transform_indices = @transform_1, window_bounds = array<i64: 1, 16, 32>}, {transform_indices = @transform_2, window_bounds = array<i64: 1, 1, 16>}, {pipeline_mode = #tpu.pipeline_mode<synchronous>, transform_indices = @transform_3, window_bounds = array<i64: 1, 32>}, {pipeline_mode = #tpu.pipeline_mode<synchronous>, transform_indices = @transform_4, window_bounds = array<i64: 1, 32>}, {pipeline_mode = #tpu.pipeline_mode<synchronous>, transform_indices = @transform_5, window_bounds = array<i64: 1, 32>}, {pipeline_mode = #tpu.pipeline_mode<synchronous>, transform_indices = @transform_6, window_bounds = array<i64: 1, 32>}, {pipeline_mode = #tpu.pipeline_mode<synchronous>, transform_indices = @transform_7, window_bounds = array<i64: 1, 32>}, {pipeline_mode = #tpu.pipeline_mode<synchronous>, transform_indices = @transform_8, window_bounds = array<i64: 1, 32>}, {pipeline_mode = #tpu.pipeline_mode<synchronous>, transform_indices = @transform_9, window_bounds = array<i64: 32, 32>}, {pipeline_mode = #tpu.pipeline_mode<synchronous>, transform_indices = @transform_10, window_bounds = array<i64: 1, 32>}, {pipeline_mode = #tpu.pipeline_mode<synchronous>, transform_indices = @transform_11, window_bounds = array<i64: 32, 64>}, {pipeline_mode = #tpu.pipeline_mode<synchronous>, transform_indices = @transform_12, window_bounds = array<i64: 1, 64>}, {pipeline_mode = #tpu.pipeline_mode<synchronous>, transform_indices = @transform_13, window_bounds = array<i64: 32, 32>}, {pipeline_mode = #tpu.pipeline_mode<synchronous>, transform_indices = @transform_14, window_bounds = array<i64: 1, 32>}, {pipeline_mode = #tpu.pipeline_mode<synchronous>, transform_indices = @transform_15, window_bounds = array<i64: 32, 128>}, {pipeline_mode = #tpu.pipeline_mode<synchronous>, transform_indices = @transform_16, window_bounds = array<i64: 1, 128>}, {pipeline_mode = #tpu.pipeline_mode<synchronous>, transform_indices = @transform_17, window_bounds = array<i64: 128, 32>}, {pipeline_mode = #tpu.pipeline_mode<synchronous>, transform_indices = @transform_18, window_bounds = array<i64: 1, 32>}, {transform_indices = @transform_19, window_bounds = array<i64: 1, 8, 32>}]} {
    %c0 = arith.constant 0 : index
    %c0_0 = arith.constant 0 : index
    %c0_1 = arith.constant 0 : index
    %0 = vector.load %arg1[%c0, %c0_0, %c0_1] : memref<1x8x32xbf16, #tpu.memory_space<vmem>>, vector<1x8x32xbf16>
    %1 = arith.extf %0 : vector<1x8x32xbf16> to vector<1x8x32xf32>
    %2 = vector.shape_cast %1 : vector<1x8x32xf32> to vector<8x32xf32>
    %c0_2 = arith.constant 0 : index
    %c0_3 = arith.constant 0 : index
    %c0_4 = arith.constant 0 : index
    %3 = vector.load %arg2[%c0_2, %c0_3, %c0_4] : memref<1x16x32xbf16, #tpu.memory_space<vmem>>, vector<1x16x32xbf16>
    %4 = arith.extf %3 : vector<1x16x32xbf16> to vector<1x16x32xf32>
    %5 = vector.shape_cast %4 : vector<1x16x32xf32> to vector<16x32xf32>
    %c0_5 = arith.constant 0 : index
    %c0_6 = arith.constant 0 : index
    %6 = vector.load %arg4[%c0_5, %c0_6] : memref<1x32xf32, #tpu.memory_space<vmem>>, vector<1x32xf32>
    %c0_7 = arith.constant 0 : index
    %c0_8 = arith.constant 0 : index
    %7 = vector.load %arg5[%c0_7, %c0_8] : memref<1x32xf32, #tpu.memory_space<vmem>>, vector<1x32xf32>
    %cst = arith.constant dense<0.000000e+00> : vector<8xf32>
    %8 = vector.multi_reduction <add>, %2, %cst [1] : vector<8x32xf32> to vector<8xf32>
    %9 = vector.shape_cast %8 : vector<8xf32> to vector<8x1xf32>
    %cst_9 = arith.constant 3.200000e+01 : f32
    %10 = vector.broadcast %cst_9 : f32 to vector<8x1xf32>
    %11 = arith.divf %9, %10 : vector<8x1xf32>
    %12 = vector.broadcast %11 : vector<8x1xf32> to vector<8x32xf32>
    %13 = arith.subf %2, %12 : vector<8x32xf32>
    %14 = arith.mulf %13, %13 : vector<8x32xf32>
    %cst_10 = arith.constant dense<0.000000e+00> : vector<8xf32>
    %15 = vector.multi_reduction <add>, %14, %cst_10 [1] : vector<8x32xf32> to vector<8xf32>
    %16 = vector.shape_cast %15 : vector<8xf32> to vector<8x1xf32>
    %cst_11 = arith.constant 3.200000e+01 : f32
    %17 = vector.broadcast %cst_11 : f32 to vector<8x1xf32>
    %18 = arith.divf %16, %17 : vector<8x1xf32>
    %19 = vector.broadcast %11 : vector<8x1xf32> to vector<8x32xf32>
    %20 = arith.subf %2, %19 : vector<8x32xf32>
    %cst_12 = arith.constant 9.99999974E-6 : f32
    %21 = vector.broadcast %cst_12 : f32 to vector<8x1xf32>
    %22 = arith.addf %18, %21 : vector<8x1xf32>
    %23 = math.rsqrt %22 : vector<8x1xf32>
    %24 = vector.broadcast %23 : vector<8x1xf32> to vector<8x32xf32>
    %25 = arith.mulf %20, %24 : vector<8x32xf32>
    %26 = vector.broadcast %6 : vector<1x32xf32> to vector<8x32xf32>
    %27 = arith.mulf %25, %26 : vector<8x32xf32>
    %28 = vector.broadcast %7 : vector<1x32xf32> to vector<8x32xf32>
    %29 = arith.addf %27, %28 : vector<8x32xf32>
    %c0_13 = arith.constant 0 : index
    %c0_14 = arith.constant 0 : index
    %30 = vector.load %arg6[%c0_13, %c0_14] : memref<1x32xf32, #tpu.memory_space<vmem>>, vector<1x32xf32>
    %c0_15 = arith.constant 0 : index
    %c0_16 = arith.constant 0 : index
    %31 = vector.load %arg7[%c0_15, %c0_16] : memref<1x32xf32, #tpu.memory_space<vmem>>, vector<1x32xf32>
    %cst_17 = arith.constant dense<0.000000e+00> : vector<16xf32>
    %32 = vector.multi_reduction <add>, %5, %cst_17 [1] : vector<16x32xf32> to vector<16xf32>
    %33 = vector.shape_cast %32 : vector<16xf32> to vector<16x1xf32>
    %cst_18 = arith.constant 3.200000e+01 : f32
    %34 = vector.broadcast %cst_18 : f32 to vector<16x1xf32>
    %35 = arith.divf %33, %34 : vector<16x1xf32>
    %36 = vector.broadcast %35 : vector<16x1xf32> to vector<16x32xf32>
    %37 = arith.subf %5, %36 : vector<16x32xf32>
    %38 = arith.mulf %37, %37 : vector<16x32xf32>
    %cst_19 = arith.constant dense<0.000000e+00> : vector<16xf32>
    %39 = vector.multi_reduction <add>, %38, %cst_19 [1] : vector<16x32xf32> to vector<16xf32>
    %40 = vector.shape_cast %39 : vector<16xf32> to vector<16x1xf32>
    %cst_20 = arith.constant 3.200000e+01 : f32
    %41 = vector.broadcast %cst_20 : f32 to vector<16x1xf32>
    %42 = arith.divf %40, %41 : vector<16x1xf32>
    %43 = vector.broadcast %35 : vector<16x1xf32> to vector<16x32xf32>
    %44 = arith.subf %5, %43 : vector<16x32xf32>
    %cst_21 = arith.constant 9.99999974E-6 : f32
    %45 = vector.broadcast %cst_21 : f32 to vector<16x1xf32>
    %46 = arith.addf %42, %45 : vector<16x1xf32>
    %47 = math.rsqrt %46 : vector<16x1xf32>
    %48 = vector.broadcast %47 : vector<16x1xf32> to vector<16x32xf32>
    %49 = arith.mulf %44, %48 : vector<16x32xf32>
    %50 = vector.broadcast %30 : vector<1x32xf32> to vector<16x32xf32>
    %51 = arith.mulf %49, %50 : vector<16x32xf32>
    %52 = vector.broadcast %31 : vector<1x32xf32> to vector<16x32xf32>
    %53 = arith.addf %51, %52 : vector<16x32xf32>
    %54 = arith.truncf %29 : vector<8x32xf32> to vector<8x32xbf16>
    %c0_22 = arith.constant 0 : index
    %c0_23 = arith.constant 0 : index
    %55 = vector.load %arg10[%c0_22, %c0_23] : memref<32x32xbf16, #tpu.memory_space<vmem>>, vector<32x32xbf16>
    %cst_24 = arith.constant dense<0.000000e+00> : vector<8x32xf32>
    %56 = tpu.matmul %54, %55, %cst_24 {dimension_numbers = #tpu.dot_dimension_numbers<[1], [0], [0], [1], [0, 0, 1, 1], [], []>} : vector<8x32xbf16>, vector<32x32xbf16>, vector<8x32xf32> -> vector<8x32xf32>
    %c0_25 = arith.constant 0 : index
    %c0_26 = arith.constant 0 : index
    %57 = vector.load %arg11[%c0_25, %c0_26] : memref<1x32xf32, #tpu.memory_space<vmem>>, vector<1x32xf32>
    %58 = vector.broadcast %57 : vector<1x32xf32> to vector<8x32xf32>
    %59 = arith.addf %56, %58 : vector<8x32xf32>
    %60 = arith.truncf %53 : vector<16x32xf32> to vector<16x32xbf16>
    %c0_27 = arith.constant 0 : index
    %c0_28 = arith.constant 0 : index
    %61 = vector.load %arg12[%c0_27, %c0_28] : memref<32x64xbf16, #tpu.memory_space<vmem>>, vector<32x64xbf16>
    %cst_29 = arith.constant dense<0.000000e+00> : vector<16x64xf32>
    %62 = tpu.matmul %60, %61, %cst_29 {dimension_numbers = #tpu.dot_dimension_numbers<[1], [0], [0], [1], [0, 0, 1, 1], [], []>} : vector<16x32xbf16>, vector<32x64xbf16>, vector<16x64xf32> -> vector<16x64xf32>
    %c0_30 = arith.constant 0 : index
    %c0_31 = arith.constant 0 : index
    %63 = vector.load %arg13[%c0_30, %c0_31] : memref<1x64xf32, #tpu.memory_space<vmem>>, vector<1x64xf32>
    %64 = vector.broadcast %63 : vector<1x64xf32> to vector<16x64xf32>
    %65 = arith.addf %62, %64 : vector<16x64xf32>
    %66 = vector.shape_cast %59 : vector<8x32xf32> to vector<1x8x32xf32>
    %67 = tpu.transpose %66, [0, 2, 1] : vector<1x8x32xf32> -> vector<1x32x8xf32>
    %68 = vector.shape_cast %67 : vector<1x32x8xf32> to vector<4x8x8xf32>
    %69 = tpu.transpose %68, [0, 2, 1] : vector<4x8x8xf32> -> vector<4x8x8xf32>
    %70 = arith.truncf %69 : vector<4x8x8xf32> to vector<4x8x8xbf16>
    %71 = vector.extract_strided_slice %65 {offsets = [0, 0], sizes = [16, 32], strides = [1, 1]} : vector<16x64xf32> to vector<16x32xf32>
    %72 = vector.shape_cast %71 : vector<16x32xf32> to vector<1x16x32xf32>
    %73 = tpu.transpose %72, [0, 2, 1] : vector<1x16x32xf32> -> vector<1x32x16xf32>
    %74 = vector.shape_cast %73 : vector<1x32x16xf32> to vector<4x8x16xf32>
    %75 = tpu.transpose %74, [0, 2, 1] : vector<4x8x16xf32> -> vector<4x16x8xf32>
    %76 = arith.truncf %75 : vector<4x16x8xf32> to vector<4x16x8xbf16>
    %77 = vector.extract_strided_slice %65 {offsets = [0, 32], sizes = [16, 32], strides = [1, 1]} : vector<16x64xf32> to vector<16x32xf32>
    %78 = vector.shape_cast %77 : vector<16x32xf32> to vector<1x16x32xf32>
    %79 = tpu.transpose %78, [0, 2, 1] : vector<1x16x32xf32> -> vector<1x32x16xf32>
    %80 = vector.shape_cast %79 : vector<1x32x16xf32> to vector<4x8x16xf32>
    %81 = tpu.transpose %80, [0, 2, 1] : vector<4x8x16xf32> -> vector<4x16x8xf32>
    %82 = arith.truncf %81 : vector<4x16x8xf32> to vector<4x16x8xbf16>
    "tpu.trace_start"() <{level = 10 : i32, message = "bqd,bkd->bqk"}> : () -> ()
    %cst_32 = arith.constant dense<0.000000e+00> : vector<4x8x16xf32>
    %83 = tpu.matmul %70, %76, %cst_32 {dimension_numbers = #tpu.dot_dimension_numbers<[2], [2], [1], [1], [0, 0, 0, 1, 1, 1], [0], [0]>} : vector<4x8x8xbf16>, vector<4x16x8xbf16>, vector<4x8x16xf32> -> vector<4x8x16xf32>
    "tpu.trace_stop"() : () -> ()
    %c0_33 = arith.constant 0 : index
    %c0_34 = arith.constant 0 : index
    %c0_35 = arith.constant 0 : index
    %84 = vector.load %arg3[%c0_33, %c0_34, %c0_35] : memref<1x1x16xf32, #tpu.memory_space<vmem>>, vector<1x1x16xf32>
    %85 = vector.shape_cast %84 : vector<1x1x16xf32> to vector<1x16xf32>
    %cst_36 = arith.constant -1.000000e+30 : f32
    %86 = vector.broadcast %cst_36 : f32 to vector<1x16xf32>
    %87 = arith.mulf %85, %86 : vector<1x16xf32>
    %88 = vector.shape_cast %87 : vector<1x16xf32> to vector<1x1x1x16xf32>
    %89 = vector.shape_cast %88 : vector<1x1x1x16xf32> to vector<1x1x1x16xf32>
    %90 = vector.broadcast %89 : vector<1x1x1x16xf32> to vector<1x4x1x16xf32>
    %91 = vector.shape_cast %90 : vector<1x4x1x16xf32> to vector<4x1x16xf32>
    %92 = vector.broadcast %91 : vector<4x1x16xf32> to vector<4x8x16xf32>
    %93 = arith.addf %83, %92 : vector<4x8x16xf32>
    %cst_37 = arith.constant dense<0xFF800000> : vector<4x8xf32>
    %94 = vector.multi_reduction <maximumf>, %93, %cst_37 [2] : vector<4x8x16xf32> to vector<4x8xf32>
    %95 = vector.shape_cast %94 : vector<4x8xf32> to vector<4x8x1xf32>
    %96 = vector.broadcast %95 : vector<4x8x1xf32> to vector<4x8x16xf32>
    %97 = arith.subf %93, %96 : vector<4x8x16xf32>
    %98 = math.exp %97 : vector<4x8x16xf32>
    %cst_38 = arith.constant dense<0.000000e+00> : vector<4x8xf32>
    %99 = vector.multi_reduction <add>, %98, %cst_38 [2] : vector<4x8x16xf32> to vector<4x8xf32>
    %100 = vector.shape_cast %99 : vector<4x8xf32> to vector<4x8x1xf32>
    %101 = tpu.reciprocal %100 {approx = true} : vector<4x8x1xf32> -> vector<4x8x1xf32>
    %102 = vector.broadcast %101 : vector<4x8x1xf32> to vector<4x8x16xf32>
    %103 = arith.mulf %98, %102 : vector<4x8x16xf32>
    %104 = arith.truncf %103 : vector<4x8x16xf32> to vector<4x8x16xbf16>
    "tpu.trace_start"() <{level = 10 : i32, message = "bqk,bkd->bqd"}> : () -> ()
    %cst_39 = arith.constant dense<0.000000e+00> : vector<4x8x8xf32>
    %105 = tpu.matmul %104, %82, %cst_39 {dimension_numbers = #tpu.dot_dimension_numbers<[2], [1], [1], [2], [0, 0, 0, 1, 1, 2], [0], [0]>} : vector<4x8x16xbf16>, vector<4x16x8xbf16>, vector<4x8x8xf32> -> vector<4x8x8xf32>
    "tpu.trace_stop"() : () -> ()
    %106 = tpu.transpose %105, [0, 2, 1] : vector<4x8x8xf32> -> vector<4x8x8xf32>
    %107 = vector.shape_cast %106 : vector<4x8x8xf32> to vector<1x32x8xf32>
    %108 = tpu.transpose %107, [0, 2, 1] : vector<1x32x8xf32> -> vector<1x8x32xf32>
    %109 = vector.shape_cast %108 : vector<1x8x32xf32> to vector<8x32xf32>
    %110 = arith.truncf %109 : vector<8x32xf32> to vector<8x32xbf16>
    %c0_40 = arith.constant 0 : index
    %c0_41 = arith.constant 0 : index
    %111 = vector.load %arg14[%c0_40, %c0_41] : memref<32x32xbf16, #tpu.memory_space<vmem>>, vector<32x32xbf16>
    %cst_42 = arith.constant dense<0.000000e+00> : vector<8x32xf32>
    %112 = tpu.matmul %110, %111, %cst_42 {dimension_numbers = #tpu.dot_dimension_numbers<[1], [0], [0], [1], [0, 0, 1, 1], [], []>} : vector<8x32xbf16>, vector<32x32xbf16>, vector<8x32xf32> -> vector<8x32xf32>
    %c0_43 = arith.constant 0 : index
    %c0_44 = arith.constant 0 : index
    %113 = vector.load %arg15[%c0_43, %c0_44] : memref<1x32xf32, #tpu.memory_space<vmem>>, vector<1x32xf32>
    %114 = vector.broadcast %113 : vector<1x32xf32> to vector<8x32xf32>
    %115 = arith.addf %112, %114 : vector<8x32xf32>
    %116 = arith.addf %2, %115 : vector<8x32xf32>
    %c0_45 = arith.constant 0 : index
    %c0_46 = arith.constant 0 : index
    %117 = vector.load %arg8[%c0_45, %c0_46] : memref<1x32xf32, #tpu.memory_space<vmem>>, vector<1x32xf32>
    %c0_47 = arith.constant 0 : index
    %c0_48 = arith.constant 0 : index
    %118 = vector.load %arg9[%c0_47, %c0_48] : memref<1x32xf32, #tpu.memory_space<vmem>>, vector<1x32xf32>
    %cst_49 = arith.constant dense<0.000000e+00> : vector<8xf32>
    %119 = vector.multi_reduction <add>, %116, %cst_49 [1] : vector<8x32xf32> to vector<8xf32>
    %120 = vector.shape_cast %119 : vector<8xf32> to vector<8x1xf32>
    %cst_50 = arith.constant 3.200000e+01 : f32
    %121 = vector.broadcast %cst_50 : f32 to vector<8x1xf32>
    %122 = arith.divf %120, %121 : vector<8x1xf32>
    %123 = vector.broadcast %122 : vector<8x1xf32> to vector<8x32xf32>
    %124 = arith.subf %116, %123 : vector<8x32xf32>
    %125 = arith.mulf %124, %124 : vector<8x32xf32>
    %cst_51 = arith.constant dense<0.000000e+00> : vector<8xf32>
    %126 = vector.multi_reduction <add>, %125, %cst_51 [1] : vector<8x32xf32> to vector<8xf32>
    %127 = vector.shape_cast %126 : vector<8xf32> to vector<8x1xf32>
    %cst_52 = arith.constant 3.200000e+01 : f32
    %128 = vector.broadcast %cst_52 : f32 to vector<8x1xf32>
    %129 = arith.divf %127, %128 : vector<8x1xf32>
    %130 = vector.broadcast %122 : vector<8x1xf32> to vector<8x32xf32>
    %131 = arith.subf %116, %130 : vector<8x32xf32>
    %cst_53 = arith.constant 9.99999974E-6 : f32
    %132 = vector.broadcast %cst_53 : f32 to vector<8x1xf32>
    %133 = arith.addf %129, %132 : vector<8x1xf32>
    %134 = math.rsqrt %133 : vector<8x1xf32>
    %135 = vector.broadcast %134 : vector<8x1xf32> to vector<8x32xf32>
    %136 = arith.mulf %131, %135 : vector<8x32xf32>
    %137 = vector.broadcast %117 : vector<1x32xf32> to vector<8x32xf32>
    %138 = arith.mulf %136, %137 : vector<8x32xf32>
    %139 = vector.broadcast %118 : vector<1x32xf32> to vector<8x32xf32>
    %140 = arith.addf %138, %139 : vector<8x32xf32>
    %141 = arith.truncf %140 : vector<8x32xf32> to vector<8x32xbf16>
    %c0_54 = arith.constant 0 : index
    %c0_55 = arith.constant 0 : index
    %142 = vector.load %arg16[%c0_54, %c0_55] : memref<32x128xbf16, #tpu.memory_space<vmem>>, vector<32x128xbf16>
    %cst_56 = arith.constant dense<0.000000e+00> : vector<8x128xf32>
    %143 = tpu.matmul %141, %142, %cst_56 {dimension_numbers = #tpu.dot_dimension_numbers<[1], [0], [0], [1], [0, 0, 1, 1], [], []>} : vector<8x32xbf16>, vector<32x128xbf16>, vector<8x128xf32> -> vector<8x128xf32>
    %c0_57 = arith.constant 0 : index
    %c0_58 = arith.constant 0 : index
    %144 = vector.load %arg17[%c0_57, %c0_58] : memref<1x128xf32, #tpu.memory_space<vmem>>, vector<1x128xf32>
    %145 = vector.broadcast %144 : vector<1x128xf32> to vector<8x128xf32>
    %146 = arith.addf %143, %145 : vector<8x128xf32>
    %cst_59 = arith.constant 1.702000e+00 : f32
    %147 = vector.broadcast %cst_59 : f32 to vector<8x128xf32>
    %148 = arith.mulf %147, %146 : vector<8x128xf32>
    %149 = arith.negf %148 : vector<8x128xf32>
    %150 = math.exp %149 : vector<8x128xf32>
    %cst_60 = arith.constant 1.000000e+00 : f32
    %151 = vector.broadcast %cst_60 : f32 to vector<8x128xf32>
    %152 = arith.addf %151, %150 : vector<8x128xf32>
    %153 = arith.divf %151, %152 : vector<8x128xf32>
    %154 = arith.mulf %146, %153 : vector<8x128xf32>
    %155 = arith.truncf %154 : vector<8x128xf32> to vector<8x128xbf16>
    %c0_61 = arith.constant 0 : index
    %c0_62 = arith.constant 0 : index
    %156 = vector.load %arg18[%c0_61, %c0_62] : memref<128x32xbf16, #tpu.memory_space<vmem>>, vector<128x32xbf16>
    %cst_63 = arith.constant dense<0.000000e+00> : vector<8x32xf32>
    %157 = tpu.matmul %155, %156, %cst_63 {dimension_numbers = #tpu.dot_dimension_numbers<[1], [0], [0], [1], [0, 0, 1, 1], [], []>} : vector<8x128xbf16>, vector<128x32xbf16>, vector<8x32xf32> -> vector<8x32xf32>
    %c0_64 = arith.constant 0 : index
    %c0_65 = arith.constant 0 : index
    %158 = vector.load %arg19[%c0_64, %c0_65] : memref<1x32xf32, #tpu.memory_space<vmem>>, vector<1x32xf32>
    %159 = vector.broadcast %158 : vector<1x32xf32> to vector<8x32xf32>
    %160 = arith.addf %157, %159 : vector<8x32xf32>
    %161 = arith.addf %116, %160 : vector<8x32xf32>
    %162 = vector.shape_cast %161 : vector<8x32xf32> to vector<1x8x32xf32>
    %163 = arith.truncf %162 : vector<1x8x32xf32> to vector<1x8x32xbf16>
    %c0_66 = arith.constant 0 : index
    %c0_67 = arith.constant 0 : index
    %c0_68 = arith.constant 0 : index
    %164 = vector.load %arg20[%c0_66, %c0_67, %c0_68] : memref<1x8x32xbf16, #tpu.memory_space<vmem>>, vector<1x8x32xbf16>
    tpu.vector_store %arg20[%c0_66, %c0_67, %c0_68], %163 {strides = array<i32>} : memref<1x8x32xbf16, #tpu.memory_space<vmem>>, vector<1x8x32xbf16>,
    return
  }
  func.func @transform_0(%arg0: i32) -> (i32, i32, i32) {
    %c0_i32 = arith.constant 0 : i32
    %c0_i32_0 = arith.constant 0 : i32
    %c0_i32_1 = arith.constant 0 : i32
    return %arg0, %c0_i32, %c0_i32_0 : i32, i32, i32
  }
  func.func @transform_1(%arg0: i32) -> (i32, i32, i32) {
    %c0_i32 = arith.constant 0 : i32
    %c0_i32_0 = arith.constant 0 : i32
    %c0_i32_1 = arith.constant 0 : i32
    return %arg0, %c0_i32, %c0_i32_0 : i32, i32, i32
  }
  func.func @transform_2(%arg0: i32) -> (i32, i32, i32) {
    %c0_i32 = arith.constant 0 : i32
    %c0_i32_0 = arith.constant 0 : i32
    %c0_i32_1 = arith.constant 0 : i32
    return %arg0, %c0_i32, %c0_i32_0 : i32, i32, i32
  }
  func.func @transform_3(%arg0: i32) -> (i32, i32) {
    %c0_i32 = arith.constant 0 : i32
    %c0_i32_0 = arith.constant 0 : i32
    %c0_i32_1 = arith.constant 0 : i32
    return %c0_i32, %c0_i32_0 : i32, i32
  }
  func.func @transform_4(%arg0: i32) -> (i32, i32) {
    %c0_i32 = arith.constant 0 : i32
    %c0_i32_0 = arith.constant 0 : i32
    %c0_i32_1 = arith.constant 0 : i32
    return %c0_i32, %c0_i32_0 : i32, i32
  }
  func.func @transform_5(%arg0: i32) -> (i32, i32) {
    %c0_i32 = arith.constant 0 : i32
    %c0_i32_0 = arith.constant 0 : i32
    %c0_i32_1 = arith.constant 0 : i32
    return %c0_i32, %c0_i32_0 : i32, i32
  }
  func.func @transform_6(%arg0: i32) -> (i32, i32) {
    %c0_i32 = arith.constant 0 : i32
    %c0_i32_0 = arith.constant 0 : i32
    %c0_i32_1 = arith.constant 0 : i32
    return %c0_i32, %c0_i32_0 : i32, i32
  }
  func.func @transform_7(%arg0: i32) -> (i32, i32) {
    %c0_i32 = arith.constant 0 : i32
    %c0_i32_0 = arith.constant 0 : i32
    %c0_i32_1 = arith.constant 0 : i32
    return %c0_i32, %c0_i32_0 : i32, i32
  }
  func.func @transform_8(%arg0: i32) -> (i32, i32) {
    %c0_i32 = arith.constant 0 : i32
    %c0_i32_0 = arith.constant 0 : i32
    %c0_i32_1 = arith.constant 0 : i32
    return %c0_i32, %c0_i32_0 : i32, i32
  }
  func.func @transform_9(%arg0: i32) -> (i32, i32) {
    %c0_i32 = arith.constant 0 : i32
    %c0_i32_0 = arith.constant 0 : i32
    %c0_i32_1 = arith.constant 0 : i32
    return %c0_i32, %c0_i32_0 : i32, i32
  }
  func.func @transform_10(%arg0: i32) -> (i32, i32) {
    %c0_i32 = arith.constant 0 : i32
    %c0_i32_0 = arith.constant 0 : i32
    %c0_i32_1 = arith.constant 0 : i32
    return %c0_i32, %c0_i32_0 : i32, i32
  }
  func.func @transform_11(%arg0: i32) -> (i32, i32) {
    %c0_i32 = arith.constant 0 : i32
    %c0_i32_0 = arith.constant 0 : i32
    %c0_i32_1 = arith.constant 0 : i32
    return %c0_i32, %c0_i32_0 : i32, i32
  }
  func.func @transform_12(%arg0: i32) -> (i32, i32) {
    %c0_i32 = arith.constant 0 : i32
    %c0_i32_0 = arith.constant 0 : i32
    %c0_i32_1 = arith.constant 0 : i32
    return %c0_i32, %c0_i32_0 : i32, i32
  }
  func.func @transform_13(%arg0: i32) -> (i32, i32) {
    %c0_i32 = arith.constant 0 : i32
    %c0_i32_0 = arith.constant 0 : i32
    %c0_i32_1 = arith.constant 0 : i32
    return %c0_i32, %c0_i32_0 : i32, i32
  }
  func.func @transform_14(%arg0: i32) -> (i32, i32) {
    %c0_i32 = arith.constant 0 : i32
    %c0_i32_0 = arith.constant 0 : i32
    %c0_i32_1 = arith.constant 0 : i32
    return %c0_i32, %c0_i32_0 : i32, i32
  }
  func.func @transform_15(%arg0: i32) -> (i32, i32) {
    %c0_i32 = arith.constant 0 : i32
    %c0_i32_0 = arith.constant 0 : i32
    %c0_i32_1 = arith.constant 0 : i32
    return %c0_i32, %c0_i32_0 : i32, i32
  }
  func.func @transform_16(%arg0: i32) -> (i32, i32) {
    %c0_i32 = arith.constant 0 : i32
    %c0_i32_0 = arith.constant 0 : i32
    %c0_i32_1 = arith.constant 0 : i32
    return %c0_i32, %c0_i32_0 : i32, i32
  }
  func.func @transform_17(%arg0: i32) -> (i32, i32) {
    %c0_i32 = arith.constant 0 : i32
    %c0_i32_0 = arith.constant 0 : i32
    %c0_i32_1 = arith.constant 0 : i32
    return %c0_i32, %c0_i32_0 : i32, i32
  }
  func.func @transform_18(%arg0: i32) -> (i32, i32) {
    %c0_i32 = arith.constant 0 : i32
    %c0_i32_0 = arith.constant 0 : i32
    %c0_i32_1 = arith.constant 0 : i32
    return %c0_i32, %c0_i32_0 : i32, i32
  }
  func.func @transform_19(%arg0: i32) -> (i32, i32, i32) {
    %c0_i32 = arith.constant 0 : i32
    %c0_i32_0 = arith.constant 0 : i32
    %c0_i32_1 = arith.constant 0 : i32
    return %arg0, %c0_i32, %c0_i32_0 : i32, i32, i32
  }
}

</mosaic_0001>

<llo_original>
// kernel: tpu_custom_call.1
$region0: #{tpu_custom_call.1}
  #allocation0 [shape = 'u32[]', space=smem, size = 0x4, offset = 0x4, fixed_abs, tag = 'smem constant byte address 0x4 - core index']
  #allocation1 [shape = 'u32[144,128]{1,0:T(1,128)}', space=vmem, size = 0x12000, scoped, tag = 'internal scratch']
  %s0 = inlined_call_operand.hbm [shape: bf16[2,8,32], index: 0, kind: input, shape index: {}]
  %s1 = inlined_call_operand.vmem [shape: bf16[2,16,32], index: 1, kind: input, shape index: {}]
  %s2 = inlined_call_operand.vmem [shape: f32[2,1,16], index: 2, kind: input, shape index: {}]
  %s3 = inlined_call_operand.vmem [shape: f32[1,32], index: 3, kind: input, shape index: {}]
  %s4 = inlined_call_operand.vmem [shape: f32[1,32], index: 4, kind: input, shape index: {}]
  %s5 = inlined_call_operand.vmem [shape: f32[1,32], index: 5, kind: input, shape index: {}]
  %s6 = inlined_call_operand.vmem [shape: f32[1,32], index: 6, kind: input, shape index: {}]
  %s7 = inlined_call_operand.vmem [shape: f32[1,32], index: 7, kind: input, shape index: {}]
  %s8 = inlined_call_operand.vmem [shape: f32[1,32], index: 8, kind: input, shape index: {}]
  %s9 = inlined_call_operand.vmem [shape: bf16[32,32], index: 9, kind: input, shape index: {}]
  %s10 = inlined_call_operand.vmem [shape: f32[1,32], index: 10, kind: input, shape index: {}]
  %s11 = inlined_call_operand.vmem [shape: bf16[32,64], index: 11, kind: input, shape index: {}]
  %s12 = inlined_call_operand.vmem [shape: f32[1,64], index: 12, kind: input, shape index: {}]
  %s13 = inlined_call_operand.vmem [shape: bf16[32,32], index: 13, kind: input, shape index: {}]
  %s14 = inlined_call_operand.vmem [shape: f32[1,32], index: 14, kind: input, shape index: {}]
  %s15 = inlined_call_operand.vmem [shape: bf16[32,128], index: 15, kind: input, shape index: {}]
  %s16 = inlined_call_operand.vmem [shape: f32[1,128], index: 16, kind: input, shape index: {}]
  %s17 = inlined_call_operand.vmem [shape: bf16[128,32], index: 17, kind: input, shape index: {}]
  %s18 = inlined_call_operand.vmem [shape: f32[1,32], index: 18, kind: input, shape index: {}]
  %s19 = inlined_call_operand.hbm [shape: bf16[2,8,32], index: 19, kind: output, shape index: {}]
  %s20 = sld [smem:[#allocation0]]
  $region113: #{tpu_custom_call.1} parent=0
    _
  %s22 = ssub.s32 1, %s20
  %s23 = scalar_select 0, %s22, %s20
  $region1: #{tpu_custom_call.1} parent=0
    #allocation2 [shape = 'u8[4096]{0}', space=vmem, size = 0x1000, scoped, tag = 'input window, operand 0']
    #allocation3 [shape = 's32[2]{0}', space=sflag, size = 0x8, scoped, tag = 'scoped memory for tpu_custom_call.1']
    #allocation4 [shape = 's32[2]{0}', space=sflag, size = 0x8, scoped, tag = 'scoped memory for tpu_custom_call.1']
    #allocation5 [shape = 'u8[4096]{0}', space=vmem, size = 0x1000, scoped, tag = 'output window, operand 0']
    %24 = vsyncpa [#allocation3], 0
    %s25 = scalar_lea.sflag [#allocation3], 1
    %26 = vsyncpa %s25, 0
    %27 = vsyncpa [#allocation4], 0
    %s28 = scalar_lea.sflag [#allocation4], 1
    %29 = vsyncpa %s28, 0
    loop: start=0, step=1, limit=4
    $region2: #{tpu_custom_call.1} parent=1 // loop_pre_header
      _
    $region3: #{tpu_custom_call.1} parent=1 // loop_header
      %s31 = sphi 0, %s35
      %p32 = scmp.ge.s32.totalorder %s31, 4
      %s41 = sphi 0, %s43
      %s44 = sphi 0, %s41
      %s45 = sphi 0, %s44
      %s61 = sphi 0, %s45
      %s67 = sphi 0, %s69
      %s70 = sphi 0, %s67
      %s71 = sphi 0, %s70
      %s87 = sphi 0, %s71
      %s93 = sphi 0, %s95
      %s96 = sphi 0, %s93
      %s97 = sphi 0, %s96
      %s113 = sphi 0, %s97
      %s117 = sphi 0, %s117
      %s119 = sphi 0, %s117
      %s120 = sphi 0, %s119
      %s134 = sphi 0, %s120
      %s138 = sphi 0, %s138
      %s140 = sphi 0, %s138
      %s141 = sphi 0, %s140
      %s155 = sphi 0, %s141
      %s159 = sphi 0, %s159
      %s161 = sphi 0, %s159
      %s162 = sphi 0, %s161
      %s176 = sphi 0, %s162
      %s180 = sphi 0, %s180
      %s182 = sphi 0, %s180
      %s183 = sphi 0, %s182
      %s197 = sphi 0, %s183
      %s201 = sphi 0, %s201
      %s203 = sphi 0, %s201
      %s204 = sphi 0, %s203
      %s218 = sphi 0, %s204
      %s222 = sphi 0, %s222
      %s224 = sphi 0, %s222
      %s225 = sphi 0, %s224
      %s239 = sphi 0, %s225
      %s243 = sphi 0, %s243
      %s245 = sphi 0, %s243
      %s246 = sphi 0, %s245
      %s260 = sphi 0, %s246
      %s264 = sphi 0, %s264
      %s266 = sphi 0, %s264
      %s267 = sphi 0, %s266
      %s281 = sphi 0, %s267
      %s285 = sphi 0, %s285
      %s287 = sphi 0, %s285
      %s288 = sphi 0, %s287
      %s302 = sphi 0, %s288
      %s306 = sphi 0, %s306
      %s308 = sphi 0, %s306
      %s309 = sphi 0, %s308
      %s323 = sphi 0, %s309
      %s327 = sphi 0, %s327
      %s329 = sphi 0, %s327
      %s330 = sphi 0, %s329
      %s344 = sphi 0, %s330
      %s348 = sphi 0, %s348
      %s350 = sphi 0, %s348
      %s351 = sphi 0, %s350
      %s365 = sphi 0, %s351
      %s369 = sphi 0, %s369
      %s371 = sphi 0, %s369
      %s372 = sphi 0, %s371
      %s386 = sphi 0, %s372
      %s390 = sphi 0, %s390
      %s392 = sphi 0, %s390
      %s393 = sphi 0, %s392
      %s407 = sphi 0, %s393
      %s411 = sphi 0, %s411
      %s413 = sphi 0, %s411
      %s414 = sphi 0, %s413
      %s428 = sphi 0, %s414
      %s432 = sphi 0, %s432
      %s434 = sphi 0, %s432
      %s435 = sphi 0, %s434
      %s449 = sphi 0, %s435
      %s455 = sphi 0, %s457
      %s458 = sphi 0, %s455
      %s459 = sphi 0, %s458
      %s475 = sphi 0, %s459
    $region4: #{tpu_custom_call.1} parent=1 // loop_header_branch
      %34 = sbr.rel (%p32) target = $region8
    $region5: #{tpu_custom_call.1} parent=1 // loop_body
      %s36 = ssub.s32 %s31, 1
      %s37 = ssub.s32 %s31, 2
      %s38 = sadd.s32 %s31, 1
      %s39 = ssub.s32 %s31, %s38
      %p40 = scmp.eq.s32.totalorder %s39, 0
      %s42 = sadd.s32 %s41, 1
      %s43 = scalar_select %p40, %s41, %s42
      %p46 = pneg %p40
      %p47 = scmp.eq.s32.totalorder %s31, 1
      %p48 = por %p46, %p47
      %p49 = scmp.ne.s32.totalorder %s41, %s44
      %p50 = scmp.eq.s32.totalorder %s31, 0
      %p51 = por %p49, %p50
      %p52 = scmp.ne.s32.totalorder %s41, %s44
      %p53 = scmp.eq.s32.totalorder %s36, 1
      %p54 = por %p52, %p53
      %p55 = scmp.ne.s32.totalorder %s44, %s45
      %p56 = scmp.eq.s32.totalorder %s36, 0
      %p57 = por %p55, %p56
      %p58 = scmp.ne.s32.totalorder %s44, %s45
      %p59 = scmp.eq.s32.totalorder %s37, 1
      %p60 = por %p58, %p59
      %p62 = scmp.ne.s32.totalorder %s45, %s61
      %p63 = scmp.eq.s32.totalorder %s37, 0
      %p64 = por %p62, %p63
      %s65 = ssub.s32 %s31, %s38
      %p66 = scmp.eq.s32.totalorder %s65, 0
      %s68 = sadd.s32 %s67, 1
      %s69 = scalar_select %p66, %s67, %s68
      %p72 = pneg %p66
      %p73 = scmp.eq.s32.totalorder %s31, 1
      %p74 = por %p72, %p73
      %p75 = scmp.ne.s32.totalorder %s67, %s70
      %p76 = scmp.eq.s32.totalorder %s31, 0
      %p77 = por %p75, %p76
      %p78 = scmp.ne.s32.totalorder %s67, %s70
      %p79 = scmp.eq.s32.totalorder %s36, 1
      %p80 = por %p78, %p79
      %p81 = scmp.ne.s32.totalorder %s70, %s71
      %p82 = scmp.eq.s32.totalorder %s36, 0
      %p83 = por %p81, %p82
      %p84 = scmp.ne.s32.totalorder %s70, %s71
      %p85 = scmp.eq.s32.totalorder %s37, 1
      %p86 = por %p84, %p85
      %p88 = scmp.ne.s32.totalorder %s71, %s87
      %p89 = scmp.eq.s32.totalorder %s37, 0
      %p90 = por %p88, %p89
      %s91 = ssub.s32 %s31, %s38
      %p92 = scmp.eq.s32.totalorder %s91, 0
      %s94 = sadd.s32 %s93, 1
      %s95 = scalar_select %p92, %s93, %s94
      %p98 = pneg %p92
      %p99 = scmp.eq.s32.totalorder %s31, 1
      %p100 = por %p98, %p99
      %p101 = scmp.ne.s32.totalorder %s93, %s96
      %p102 = scmp.eq.s32.totalorder %s31, 0
      %p103 = por %p101, %p102
      %p104 = scmp.ne.s32.totalorder %s93, %s96
      %p105 = scmp.eq.s32.totalorder %s36, 1
      %p106 = por %p104, %p105
      %p107 = scmp.ne.s32.totalorder %s96, %s97
      %p108 = scmp.eq.s32.totalorder %s36, 0
      %p109 = por %p107, %p108
      %p110 = scmp.ne.s32.totalorder %s96, %s97
      %p111 = scmp.eq.s32.totalorder %s37, 1
      %p112 = por %p110, %p111
      %p114 = scmp.ne.s32.totalorder %s97, %s113
      %p115 = scmp.eq.s32.totalorder %s37, 0
      %p116 = por %p114, %p115
      %s118 = sadd.s32 %s117, 1
      %p121 = scmp.eq.s32.totalorder %s31, 1
      %p122 = scmp.ne.s32.totalorder %s117, %s119
      %p123 = scmp.eq.s32.totalorder %s31, 0
      %p124 = por %p122, %p123
      %p125 = scmp.ne.s32.totalorder %s117, %s119
      %p126 = scmp.eq.s32.totalorder %s36, 1
      %p127 = por %p125, %p126
      %p128 = scmp.ne.s32.totalorder %s119, %s120
      %p129 = scmp.eq.s32.totalorder %s36, 0
      %p130 = por %p128, %p129
      %p131 = scmp.ne.s32.totalorder %s119, %s120
      %p132 = scmp.eq.s32.totalorder %s37, 1
      %p133 = por %p131, %p132
      %p135 = scmp.ne.s32.totalorder %s120, %s134
      %p136 = scmp.eq.s32.totalorder %s37, 0
      %p137 = por %p135, %p136
      %s139 = sadd.s32 %s138, 1
      %p142 = scmp.eq.s32.totalorder %s31, 1
      %p143 = scmp.ne.s32.totalorder %s138, %s140
      %p144 = scmp.eq.s32.totalorder %s31, 0
      %p145 = por %p143, %p144
      %p146 = scmp.ne.s32.totalorder %s138, %s140
      %p147 = scmp.eq.s32.totalorder %s36, 1
      %p148 = por %p146, %p147
      %p149 = scmp.ne.s32.totalorder %s140, %s141
      %p150 = scmp.eq.s32.totalorder %s36, 0
      %p151 = por %p149, %p150
      %p152 = scmp.ne.s32.totalorder %s140, %s141
      %p153 = scmp.eq.s32.totalorder %s37, 1
      %p154 = por %p152, %p153
      %p156 = scmp.ne.s32.totalorder %s141, %s155
      %p157 = scmp.eq.s32.totalorder %s37, 0
      %p158 = por %p156, %p157
      %s160 = sadd.s32 %s159, 1
      %p163 = scmp.eq.s32.totalorder %s31, 1
      %p164 = scmp.ne.s32.totalorder %s159, %s161
      %p165 = scmp.eq.s32.totalorder %s31, 0
      %p166 = por %p164, %p165
      %p167 = scmp.ne.s32.totalorder %s159, %s161
      %p168 = scmp.eq.s32.totalorder %s36, 1
      %p169 = por %p167, %p168
      %p170 = scmp.ne.s32.totalorder %s161, %s162
      %p171 = scmp.eq.s32.totalorder %s36, 0
      %p172 = por %p170, %p171
      %p173 = scmp.ne.s32.totalorder %s161, %s162
      %p174 = scmp.eq.s32.totalorder %s37, 1
      %p175 = por %p173, %p174
      %p177 = scmp.ne.s32.totalorder %s162, %s176
      %p178 = scmp.eq.s32.totalorder %s37, 0
      %p179 = por %p177, %p178
      %s181 = sadd.s32 %s180, 1
      %p184 = scmp.eq.s32.totalorder %s31, 1
      %p185 = scmp.ne.s32.totalorder %s180, %s182
      %p186 = scmp.eq.s32.totalorder %s31, 0
      %p187 = por %p185, %p186
      %p188 = scmp.ne.s32.totalorder %s180, %s182
      %p189 = scmp.eq.s32.totalorder %s36, 1
      %p190 = por %p188, %p189
      %p191 = scmp.ne.s32.totalorder %s182, %s183
      %p192 = scmp.eq.s32.totalorder %s36, 0
      %p193 = por %p191, %p192
      %p194 = scmp.ne.s32.totalorder %s182, %s183
      %p195 = scmp.eq.s32.totalorder %s37, 1
      %p196 = por %p194, %p195
      %p198 = scmp.ne.s32.totalorder %s183, %s197
      %p199 = scmp.eq.s32.totalorder %s37, 0
      %p200 = por %p198, %p199
      %s202 = sadd.s32 %s201, 1
      %p205 = scmp.eq.s32.totalorder %s31, 1
      %p206 = scmp.ne.s32.totalorder %s201, %s203
      %p207 = scmp.eq.s32.totalorder %s31, 0
      %p208 = por %p206, %p207
      %p209 = scmp.ne.s32.totalorder %s201, %s203
      %p210 = scmp.eq.s32.totalorder %s36, 1
      %p211 = por %p209, %p210
      %p212 = scmp.ne.s32.totalorder %s203, %s204
      %p213 = scmp.eq.s32.totalorder %s36, 0
      %p214 = por %p212, %p213
      %p215 = scmp.ne.s32.totalorder %s203, %s204
      %p216 = scmp.eq.s32.totalorder %s37, 1
      %p217 = por %p215, %p216
      %p219 = scmp.ne.s32.totalorder %s204, %s218
      %p220 = scmp.eq.s32.totalorder %s37, 0
      %p221 = por %p219, %p220
      %s223 = sadd.s32 %s222, 1
      %p226 = scmp.eq.s32.totalorder %s31, 1
      %p227 = scmp.ne.s32.totalorder %s222, %s224
      %p228 = scmp.eq.s32.totalorder %s31, 0
      %p229 = por %p227, %p228
      %p230 = scmp.ne.s32.totalorder %s222, %s224
      %p231 = scmp.eq.s32.totalorder %s36, 1
      %p232 = por %p230, %p231
      %p233 = scmp.ne.s32.totalorder %s224, %s225
      %p234 = scmp.eq.s32.totalorder %s36, 0
      %p235 = por %p233, %p234
      %p236 = scmp.ne.s32.totalorder %s224, %s225
      %p237 = scmp.eq.s32.totalorder %s37, 1
      %p238 = por %p236, %p237
      %p240 = scmp.ne.s32.totalorder %s225, %s239
      %p241 = scmp.eq.s32.totalorder %s37, 0
      %p242 = por %p240, %p241
      %s244 = sadd.s32 %s243, 1
      %p247 = scmp.eq.s32.totalorder %s31, 1
      %p248 = scmp.ne.s32.totalorder %s243, %s245
      %p249 = scmp.eq.s32.totalorder %s31, 0
      %p250 = por %p248, %p249
      %p251 = scmp.ne.s32.totalorder %s243, %s245
      %p252 = scmp.eq.s32.totalorder %s36, 1
      %p253 = por %p251, %p252
      %p254 = scmp.ne.s32.totalorder %s245, %s246
      %p255 = scmp.eq.s32.totalorder %s36, 0
      %p256 = por %p254, %p255
      %p257 = scmp.ne.s32.totalorder %s245, %s246
      %p258 = scmp.eq.s32.totalorder %s37, 1
      %p259 = por %p257, %p258
      %p261 = scmp.ne.s32.totalorder %s246, %s260
      %p262 = scmp.eq.s32.totalorder %s37, 0
      %p263 = por %p261, %p262
      %s265 = sadd.s32 %s264, 1
      %p268 = scmp.eq.s32.totalorder %s31, 1
      %p269 = scmp.ne.s32.totalorder %s264, %s266
      %p270 = scmp.eq.s32.totalorder %s31, 0
      %p271 = por %p269, %p270
      %p272 = scmp.ne.s32.totalorder %s264, %s266
      %p273 = scmp.eq.s32.totalorder %s36, 1
      %p274 = por %p272, %p273
      %p275 = scmp.ne.s32.totalorder %s266, %s267
      %p276 = scmp.eq.s32.totalorder %s36, 0
      %p277 = por %p275, %p276
      %p278 = scmp.ne.s32.totalorder %s266, %s267
      %p279 = scmp.eq.s32.totalorder %s37, 1
      %p280 = por %p278, %p279
      %p282 = scmp.ne.s32.totalorder %s267, %s281
      %p283 = scmp.eq.s32.totalorder %s37, 0
      %p284 = por %p282, %p283
      %s286 = sadd.s32 %s285, 1
      %p289 = scmp.eq.s32.totalorder %s31, 1
      %p290 = scmp.ne.s32.totalorder %s285, %s287
      %p291 = scmp.eq.s32.totalorder %s31, 0
      %p292 = por %p290, %p291
      %p293 = scmp.ne.s32.totalorder %s285, %s287
      %p294 = scmp.eq.s32.totalorder %s36, 1
      %p295 = por %p293, %p294
      %p296 = scmp.ne.s32.totalorder %s287, %s288
      %p297 = scmp.eq.s32.totalorder %s36, 0
      %p298 = por %p296, %p297
      %p299 = scmp.ne.s32.totalorder %s287, %s288
      %p300 = scmp.eq.s32.totalorder %s37, 1
      %p301 = por %p299, %p300
      %p303 = scmp.ne.s32.totalorder %s288, %s302
      %p304 = scmp.eq.s32.totalorder %s37, 0
      %p305 = por %p303, %p304
      %s307 = sadd.s32 %s306, 1
      %p310 = scmp.eq.s32.totalorder %s31, 1
      %p311 = scmp.ne.s32.totalorder %s306, %s308
      %p312 = scmp.eq.s32.totalorder %s31, 0
      %p313 = por %p311, %p312
      %p314 = scmp.ne.s32.totalorder %s306, %s308
      %p315 = scmp.eq.s32.totalorder %s36, 1
      %p316 = por %p314, %p315
      %p317 = scmp.ne.s32.totalorder %s308, %s309
      %p318 = scmp.eq.s32.totalorder %s36, 0
      %p319 = por %p317, %p318
      %p320 = scmp.ne.s32.totalorder %s308, %s309
      %p321 = scmp.eq.s32.totalorder %s37, 1
      %p322 = por %p320, %p321
      %p324 = scmp.ne.s32.totalorder %s309, %s323
      %p325 = scmp.eq.s32.totalorder %s37, 0
      %p326 = por %p324, %p325
      %s328 = sadd.s32 %s327, 1
      %p331 = scmp.eq.s32.totalorder %s31, 1
      %p332 = scmp.ne.s32.totalorder %s327, %s329
      %p333 = scmp.eq.s32.totalorder %s31, 0
      %p334 = por %p332, %p333
      %p335 = scmp.ne.s32.totalorder %s327, %s329
      %p336 = scmp.eq.s32.totalorder %s36, 1
      %p337 = por %p335, %p336
      %p338 = scmp.ne.s32.totalorder %s329, %s330
      %p339 = scmp.eq.s32.totalorder %s36, 0
      %p340 = por %p338, %p339
      %p341 = scmp.ne.s32.totalorder %s329, %s330
      %p342 = scmp.eq.s32.totalorder %s37, 1
      %p343 = por %p341, %p342
      %p345 = scmp.ne.s32.totalorder %s330, %s344
      %p346 = scmp.eq.s32.totalorder %s37, 0
      %p347 = por %p345, %p346
      %s349 = sadd.s32 %s348, 1
      %p352 = scmp.eq.s32.totalorder %s31, 1
      %p353 = scmp.ne.s32.totalorder %s348, %s350
      %p354 = scmp.eq.s32.totalorder %s31, 0
      %p355 = por %p353, %p354
      %p356 = scmp.ne.s32.totalorder %s348, %s350
      %p357 = scmp.eq.s32.totalorder %s36, 1
      %p358 = por %p356, %p357
      %p359 = scmp.ne.s32.totalorder %s350, %s351
      %p360 = scmp.eq.s32.totalorder %s36, 0
      %p361 = por %p359, %p360
      %p362 = scmp.ne.s32.totalorder %s350, %s351
      %p363 = scmp.eq.s32.totalorder %s37, 1
      %p364 = por %p362, %p363
      %p366 = scmp.ne.s32.totalorder %s351, %s365
      %p367 = scmp.eq.s32.totalorder %s37, 0
      %p368 = por %p366, %p367
      %s370 = sadd.s32 %s369, 1
      %p373 = scmp.eq.s32.totalorder %s31, 1
      %p374 = scmp.ne.s32.totalorder %s369, %s371
      %p375 = scmp.eq.s32.totalorder %s31, 0
      %p376 = por %p374, %p375
      %p377 = scmp.ne.s32.totalorder %s369, %s371
      %p378 = scmp.eq.s32.totalorder %s36, 1
      %p379 = por %p377, %p378
      %p380 = scmp.ne.s32.totalorder %s371, %s372
      %p381 = scmp.eq.s32.totalorder %s36, 0
      %p382 = por %p380, %p381
      %p383 = scmp.ne.s32.totalorder %s371, %s372
      %p384 = scmp.eq.s32.totalorder %s37, 1
      %p385 = por %p383, %p384
      %p387 = scmp.ne.s32.totalorder %s372, %s386
      %p388 = scmp.eq.s32.totalorder %s37, 0
      %p389 = por %p387, %p388
      %s391 = sadd.s32 %s390, 1
      %p394 = scmp.eq.s32.totalorder %s31, 1
      %p395 = scmp.ne.s32.totalorder %s390, %s392
      %p396 = scmp.eq.s32.totalorder %s31, 0
      %p397 = por %p395, %p396
      %p398 = scmp.ne.s32.totalorder %s390, %s392
      %p399 = scmp.eq.s32.totalorder %s36, 1
      %p400 = por %p398, %p399
      %p401 = scmp.ne.s32.totalorder %s392, %s393
      %p402 = scmp.eq.s32.totalorder %s36, 0
      %p403 = por %p401, %p402
      %p404 = scmp.ne.s32.totalorder %s392, %s393
      %p405 = scmp.eq.s32.totalorder %s37, 1
      %p406 = por %p404, %p405
      %p408 = scmp.ne.s32.totalorder %s393, %s407
      %p409 = scmp.eq.s32.totalorder %s37, 0
      %p410 = por %p408, %p409
      %s412 = sadd.s32 %s411, 1
      %p415 = scmp.eq.s32.totalorder %s31, 1
      %p416 = scmp.ne.s32.totalorder %s411, %s413
      %p417 = scmp.eq.s32.totalorder %s31, 0
      %p418 = por %p416, %p417
      %p419 = scmp.ne.s32.totalorder %s411, %s413
      %p420 = scmp.eq.s32.totalorder %s36, 1
      %p421 = por %p419, %p420
      %p422 = scmp.ne.s32.totalorder %s413, %s414
      %p423 = scmp.eq.s32.totalorder %s36, 0
      %p424 = por %p422, %p423
      %p425 = scmp.ne.s32.totalorder %s413, %s414
      %p426 = scmp.eq.s32.totalorder %s37, 1
      %p427 = por %p425, %p426
      %p429 = scmp.ne.s32.totalorder %s414, %s428
      %p430 = scmp.eq.s32.totalorder %s37, 0
      %p431 = por %p429, %p430
      %s433 = sadd.s32 %s432, 1
      %p436 = scmp.eq.s32.totalorder %s31, 1
      %p437 = scmp.ne.s32.totalorder %s432, %s434
      %p438 = scmp.eq.s32.totalorder %s31, 0
      %p439 = por %p437, %p438
      %p440 = scmp.ne.s32.totalorder %s432, %s434
      %p441 = scmp.eq.s32.totalorder %s36, 1
      %p442 = por %p440, %p441
      %p443 = scmp.ne.s32.totalorder %s434, %s435
      %p444 = scmp.eq.s32.totalorder %s36, 0
      %p445 = por %p443, %p444
      %p446 = scmp.ne.s32.totalorder %s434, %s435
      %p447 = scmp.eq.s32.totalorder %s37, 1
      %p448 = por %p446, %p447
      %p450 = scmp.ne.s32.totalorder %s435, %s449
      %p451 = scmp.eq.s32.totalorder %s37, 0
      %p452 = por %p450, %p451
      %s453 = ssub.s32 %s31, %s38
      %p454 = scmp.eq.s32.totalorder %s453, 0
      %s456 = sadd.s32 %s455, 1
      %s457 = scalar_select %p454, %s455, %s456
      %p460 = pneg %p454
      %p461 = scmp.eq.s32.totalorder %s31, 1
      %p462 = por %p460, %p461
      %p463 = scmp.ne.s32.totalorder %s455, %s458
      %p464 = scmp.eq.s32.totalorder %s31, 0
      %p465 = por %p463, %p464
      %p466 = scmp.ne.s32.totalorder %s455, %s458
      %p467 = scmp.eq.s32.totalorder %s36, 1
      %p468 = por %p466, %p467
      %p469 = scmp.ne.s32.totalorder %s458, %s459
      %p470 = scmp.eq.s32.totalorder %s36, 0
      %p471 = por %p469, %p470
      %p472 = scmp.ne.s32.totalorder %s458, %s459
      %p473 = scmp.eq.s32.totalorder %s37, 1
      %p474 = por %p472, %p473
      %p476 = scmp.ne.s32.totalorder %s459, %s475
      %p477 = scmp.eq.s32.totalorder %s37, 0
      %p478 = por %p476, %p477
      %p479 = scmp.le.s32.totalorder 1, %s31
      %p480 = scmp.lt.s32.totalorder %s31, 3
      %p481 = pnand %p479, %p480
      %p482 = pneg %p481
      // Predicated region
      $region9: #{tpu_custom_call.1} parent=5 // pred_check
        _
      $region10: #{tpu_custom_call.1} parent=5 // pred_check_branch
        %484 = sbr.rel (%p481) target = $region12
      $region11: #{tpu_custom_call.1} parent=5 // pred_region
        %s485 = ssub.s32 %s31, 1
        // Predicated region
        $region13: #{tpu_custom_call.1} parent=11 // pred_check
          %p486 = pneg %p130
        $region14: #{tpu_custom_call.1} parent=11 // pred_check_branch
          %488 = sbr.rel (%p486) target = $region16
        $region15: #{tpu_custom_call.1} parent=11 // pred_region
          _
        $region16: #{tpu_custom_call.1} parent=11 // pred_fallthru
          _
        // Predicated region
        $region17: #{tpu_custom_call.1} parent=11 // pred_check
          %p489 = pneg %p151
        $region18: #{tpu_custom_call.1} parent=11 // pred_check_branch
          %491 = sbr.rel (%p489) target = $region20
        $region19: #{tpu_custom_call.1} parent=11 // pred_region
          _
        $region20: #{tpu_custom_call.1} parent=11 // pred_fallthru
          _
        // Predicated region
        $region21: #{tpu_custom_call.1} parent=11 // pred_check
          %p492 = pneg %p172
        $region22: #{tpu_custom_call.1} parent=11 // pred_check_branch
          %494 = sbr.rel (%p492) target = $region24
        $region23: #{tpu_custom_call.1} parent=11 // pred_region
          _
        $region24: #{tpu_custom_call.1} parent=11 // pred_fallthru
          _
        // Predicated region
        $region25: #{tpu_custom_call.1} parent=11 // pred_check
          %p495 = pneg %p193
        $region26: #{tpu_custom_call.1} parent=11 // pred_check_branch
          %497 = sbr.rel (%p495) target = $region28
        $region27: #{tpu_custom_call.1} parent=11 // pred_region
          _
        $region28: #{tpu_custom_call.1} parent=11 // pred_fallthru
          _
        // Predicated region
        $region29: #{tpu_custom_call.1} parent=11 // pred_check
          %p498 = pneg %p214
        $region30: #{tpu_custom_call.1} parent=11 // pred_check_branch
          %500 = sbr.rel (%p498) target = $region32
        $region31: #{tpu_custom_call.1} parent=11 // pred_region
          _
        $region32: #{tpu_custom_call.1} parent=11 // pred_fallthru
          _
        // Predicated region
        $region33: #{tpu_custom_call.1} parent=11 // pred_check
          %p501 = pneg %p235
        $region34: #{tpu_custom_call.1} parent=11 // pred_check_branch
          %503 = sbr.rel (%p501) target = $region36
        $region35: #{tpu_custom_call.1} parent=11 // pred_region
          _
        $region36: #{tpu_custom_call.1} parent=11 // pred_fallthru
          _
        // Predicated region
        $region37: #{tpu_custom_call.1} parent=11 // pred_check
          %p504 = pneg %p256
        $region38: #{tpu_custom_call.1} parent=11 // pred_check_branch
          %506 = sbr.rel (%p504) target = $region40
        $region39: #{tpu_custom_call.1} parent=11 // pred_region
          _
        $region40: #{tpu_custom_call.1} parent=11 // pred_fallthru
          _
        // Predicated region
        $region41: #{tpu_custom_call.1} parent=11 // pred_check
          %p507 = pneg %p277
        $region42: #{tpu_custom_call.1} parent=11 // pred_check_branch
          %509 = sbr.rel (%p507) target = $region44
        $region43: #{tpu_custom_call.1} parent=11 // pred_region
          _
        $region44: #{tpu_custom_call.1} parent=11 // pred_fallthru
          _
        // Predicated region
        $region45: #{tpu_custom_call.1} parent=11 // pred_check
          %p510 = pneg %p298
        $region46: #{tpu_custom_call.1} parent=11 // pred_check_branch
          %512 = sbr.rel (%p510) target = $region48
        $region47: #{tpu_custom_call.1} parent=11 // pred_region
          _
        $region48: #{tpu_custom_call.1} parent=11 // pred_fallthru
          _
        // Predicated region
        $region49: #{tpu_custom_call.1} parent=11 // pred_check
          %p513 = pneg %p319
        $region50: #{tpu_custom_call.1} parent=11 // pred_check_branch
          %515 = sbr.rel (%p513) target = $region52
        $region51: #{tpu_custom_call.1} parent=11 // pred_region
          _
        $region52: #{tpu_custom_call.1} parent=11 // pred_fallthru
          _
        // Predicated region
        $region53: #{tpu_custom_call.1} parent=11 // pred_check
          %p516 = pneg %p340
        $region54: #{tpu_custom_call.1} parent=11 // pred_check_branch
          %518 = sbr.rel (%p516) target = $region56
        $region55: #{tpu_custom_call.1} parent=11 // pred_region
          _
        $region56: #{tpu_custom_call.1} parent=11 // pred_fallthru
          _
        // Predicated region
        $region57: #{tpu_custom_call.1} parent=11 // pred_check
          %p519 = pneg %p361
        $region58: #{tpu_custom_call.1} parent=11 // pred_check_branch
          %521 = sbr.rel (%p519) target = $region60
        $region59: #{tpu_custom_call.1} parent=11 // pred_region
          _
        $region60: #{tpu_custom_call.1} parent=11 // pred_fallthru
          _
        // Predicated region
        $region61: #{tpu_custom_call.1} parent=11 // pred_check
          %p522 = pneg %p382
        $region62: #{tpu_custom_call.1} parent=11 // pred_check_branch
          %524 = sbr.rel (%p522) target = $region64
        $region63: #{tpu_custom_call.1} parent=11 // pred_region
          _
        $region64: #{tpu_custom_call.1} parent=11 // pred_fallthru
          _
        // Predicated region
        $region65: #{tpu_custom_call.1} parent=11 // pred_check
          %p525 = pneg %p403
        $region66: #{tpu_custom_call.1} parent=11 // pred_check_branch
          %527 = sbr.rel (%p525) target = $region68
        $region67: #{tpu_custom_call.1} parent=11 // pred_region
          _
        $region68: #{tpu_custom_call.1} parent=11 // pred_fallthru
          _
        // Predicated region
        $region69: #{tpu_custom_call.1} parent=11 // pred_check
          %p528 = pneg %p424
        $region70: #{tpu_custom_call.1} parent=11 // pred_check_branch
          %530 = sbr.rel (%p528) target = $region72
        $region71: #{tpu_custom_call.1} parent=11 // pred_region
          _
        $region72: #{tpu_custom_call.1} parent=11 // pred_fallthru
          _
        // Predicated region
        $region73: #{tpu_custom_call.1} parent=11 // pred_check
          %p531 = pneg %p445
        $region74: #{tpu_custom_call.1} parent=11 // pred_check_branch
          %533 = sbr.rel (%p531) target = $region76
        $region75: #{tpu_custom_call.1} parent=11 // pred_region
          _
        $region76: #{tpu_custom_call.1} parent=11 // pred_fallthru
          _
      $region12: #{tpu_custom_call.1} parent=5 // pred_fallthru
        _
      %p534 = scmp.lt.s32.totalorder %s31, 2
      // Predicated region
      $region77: #{tpu_custom_call.1} parent=5 // pred_check
        %p535 = pneg %p534
      $region78: #{tpu_custom_call.1} parent=5 // pred_check_branch
        %537 = sbr.rel (%p535) target = $region80
      $region79: #{tpu_custom_call.1} parent=5 // pred_region
        // Predicated region
        $region81: #{tpu_custom_call.1} parent=79 // pred_check
          %p538 = pneg %p51
        $region82: #{tpu_custom_call.1} parent=79 // pred_check_branch
          %540 = sbr.rel (%p538) target = $region84
        $region83: #{tpu_custom_call.1} parent=79 // pred_region
          %s541 = sand.u32 %s41, 1
          %s542 = scalar_lea.sflag [#allocation3], %s541
          %s543 = sand.u32 %s41, 1
          %s544 = smul.addr %s543, 4
          %s545 = scalar_lea.vmem [#allocation2], %s544
          %s547 = ssub.s32 64, 64
          %548 = vsyncadd %s542, %s547
          %s549 = smul.addr %s31, 64
          %s550 = scalar_lea.hbm %s0, %s549
          %s552 = sshll.u32 %s545, 4
          %s553 = int_to_ptr.vmem [resolvable:$true] %s552
          %555 = dma.hbm_to_vmem [thread:$0]  %s550, 64, %s553, %s542
        $region84: #{tpu_custom_call.1} parent=79 // pred_fallthru
          _
        // Predicated region
        $region85: #{tpu_custom_call.1} parent=79 // pred_check
          %p556 = pneg %p77
        $region86: #{tpu_custom_call.1} parent=79 // pred_check_branch
          %558 = sbr.rel (%p556) target = $region88
        $region87: #{tpu_custom_call.1} parent=79 // pred_region
          %p559 = scmp.lt.s32.totalorder %s31, 1
          %s560 = scalar_select %p559, %s31, 1
          %s561 = smul.addr %s560, 2
          %s562 = smul.addr %s561, 4
          %s563 = scalar_lea.vmem %s1, %s562
        $region88: #{tpu_custom_call.1} parent=79 // pred_fallthru
          _
        // Predicated region
        $region89: #{tpu_custom_call.1} parent=79 // pred_check
          %p564 = pneg %p103
        $region90: #{tpu_custom_call.1} parent=79 // pred_check_branch
          %566 = sbr.rel (%p564) target = $region92
        $region91: #{tpu_custom_call.1} parent=79 // pred_region
          %p567 = scmp.lt.s32.totalorder %s31, 1
          %s568 = scalar_select %p567, %s31, 1
          %s569 = scalar_lea.vmem %s2, %s568
        $region92: #{tpu_custom_call.1} parent=79 // pred_fallthru
          _
      $region80: #{tpu_custom_call.1} parent=5 // pred_fallthru
        _
      %p570 = scmp.le.s32.totalorder 1, %s31
      %p571 = scmp.lt.s32.totalorder %s31, 3
      %p572 = pnand %p570, %p571
      %p573 = pneg %p572
      // Predicated region
      $region93: #{tpu_custom_call.1} parent=5 // pred_check
        _
      $region94: #{tpu_custom_call.1} parent=5 // pred_check_branch
        %575 = sbr.rel (%p572) target = $region96
      $region95: #{tpu_custom_call.1} parent=5 // pred_region
        %s576 = ssub.s32 %s31, 1
        %s577 = sand.u32 %s44, 1
        %s578 = scalar_lea.sflag [#allocation3], %s577
        %s579 = sand.u32 %s44, 1
        %s580 = smul.addr %s579, 4
        %s581 = scalar_lea.vmem [#allocation2], %s580
        // Predicated region
        $region97: #{tpu_custom_call.1} parent=95 // pred_check
          %p582 = pneg %p57
        $region98: #{tpu_custom_call.1} parent=95 // pred_check_branch
          %584 = sbr.rel (%p582) target = $region100
        $region99: #{tpu_custom_call.1} parent=95 // pred_region
          %585 = dma.done %s578, 64
        $region100: #{tpu_custom_call.1} parent=95 // pred_fallthru
          _
        %s586 = sand.u32 %s44, 1
        %s587 = scalar_lea.sflag [#allocation3], %s586
        %s588 = sand.u32 %s44, 1
        %s589 = smul.addr %s588, 4
        %s590 = scalar_lea.vmem [#allocation2], %s589
        %p591 = pneg %p57
        %p592 = pneg %p54
        %p593 = scmp.lt.s32.totalorder %s36, 1
        %s594 = scalar_select %p593, %s36, 1
        %s595 = smul.addr %s594, 2
        %s596 = smul.addr %s595, 4
        %s597 = scalar_lea.vmem %s1, %s596
        %p598 = pneg %p83
        %p599 = pneg %p80
        %p600 = scmp.lt.s32.totalorder %s36, 1
        %s601 = scalar_select %p600, %s36, 1
        %s602 = scalar_lea.vmem %s2, %s601
        %p603 = pneg %p109
        %p604 = pneg %p106
        %p605 = pneg %p130
        %p606 = pneg %p127
        %p607 = pneg %p151
        %p608 = pneg %p148
        %p609 = pneg %p172
        %p610 = pneg %p169
        %p611 = pneg %p193
        %p612 = pneg %p190
        %p613 = pneg %p214
        %p614 = pneg %p211
        %p615 = pneg %p235
        %p616 = pneg %p232
        %p617 = pneg %p256
        %p618 = pneg %p253
        %p619 = pneg %p277
        %p620 = pneg %p274
        %p621 = pneg %p298
        %p622 = pneg %p295
        %p623 = pneg %p319
        %p624 = pneg %p316
        %p625 = pneg %p340
        %p626 = pneg %p337
        %p627 = pneg %p361
        %p628 = pneg %p358
        %p629 = pneg %p382
        %p630 = pneg %p379
        %p631 = pneg %p403
        %p632 = pneg %p400
        %p633 = pneg %p424
        %p634 = pneg %p421
        %p635 = pneg %p445
        %p636 = pneg %p442
        %p637 = pneg %p471
        %p638 = pneg %p468
        %s639 = sand.u32 %s458, 1
        %s640 = scalar_lea.sflag [#allocation4], %s639
        %s641 = sand.u32 %s458, 1
        %s642 = smul.addr %s641, 4
        %s643 = scalar_lea.vmem [#allocation5], %s642
        %p644 = scmp.lt.s32.totalorder %s36, 1
        %s645 = scalar_select %p644, %s36, 1
        %s646 = smul.addr %s645, 2
        %s647 = smul.addr %s646, 4
        %s648 = scalar_lea.vmem %s1, %s647
        %p649 = scmp.lt.s32.totalorder %s36, 1
        %s650 = scalar_select %p649, %s36, 1
        %s651 = scalar_lea.vmem %s2, %s650
        %v653 = vld [vmem:[%s581] sm:$0xf]
        %v654 = vunpack.c.l.bf16 %v653
        %v655 = vld [vmem:[%s648] sm:$0xf]
        %v656 = vld [vmem:[%s648 + $0x4] sm:$0xf]
        %v657 = vunpack.c.l.bf16 %v655
        %v658 = vunpack.c.l.bf16 %v656
        %v659 = vld [vmem:[%s3] sm:$0x1]
        %v660 = vld [vmem:[%s4] sm:$0x1]
        %vm661 = vcmask 261120
        %v662 = vsel %vm661, %v654, 0.0
        %663 = vadd.xlane.f32.xlu0 %v662
        %v664 = vpop.xlane.xlu0 %663
        %v665 = vrcp.pop 32.0
        %v666 = vmul.f32 %v664, %v665
        %v667 = vsub.f32 %v654, %v666
        %v668 = vmul.f32 %v667, %v667
        %v669 = vsel %vm661, %v668, 0.0
        %670 = vadd.xlane.f32.xlu0 %v669
        %v671 = vpop.xlane.xlu0 %670
        %v672 = vmul.f32 %v671, %v665
        %v673 = vadd.f32 %v672, 1e-05
        %v674 = vrsqrt.pop %v673
        %v675 = vmul.f32 %v667, %v674
        %v677 = vlaneseq
        %v678 = vshrl.u32 %v677, 7
        %v679 = vsub.s32 0, %v678
        %v680 = vrot.slane %v659, %v679
        %v682 = vmul.f32 %v675, %v680
        %v684 = vlaneseq
        %v685 = vshrl.u32 %v684, 7
        %v686 = vsub.s32 0, %v685
        %v687 = vrot.slane %v660, %v686
        %v689 = vadd.f32 %v682, %v687
        %v690 = vld [vmem:[%s5] sm:$0x1]
        %v691 = vld [vmem:[%s6] sm:$0x1]
        %v692 = vsel %vm661, %v657, 0.0
        %693 = vadd.xlane.f32.xlu0 %v692
        %v694 = vpop.xlane.xlu0 %693
        %v695 = vsel %vm661, %v658, 0.0
        %696 = vadd.xlane.f32.xlu0 %v695
        %v697 = vpop.xlane.xlu0 %696
        %v698 = vmul.f32 %v694, %v665
        %v699 = vmul.f32 %v697, %v665
        %v700 = vsub.f32 %v657, %v698
        %v701 = vsub.f32 %v658, %v699
        %v702 = vmul.f32 %v700, %v700
        %v703 = vmul.f32 %v701, %v701
        %v704 = vsel %vm661, %v702, 0.0
        %705 = vadd.xlane.f32.xlu0 %v704
        %v706 = vpop.xlane.xlu0 %705
        %v707 = vsel %vm661, %v703, 0.0
        %708 = vadd.xlane.f32.xlu0 %v707
        %v709 = vpop.xlane.xlu0 %708
        %v710 = vmul.f32 %v706, %v665
        %v711 = vmul.f32 %v709, %v665
        %v712 = vadd.f32 %v710, 1e-05
        %v713 = vadd.f32 %v711, 1e-05
        %v714 = vrsqrt.pop %v712
        %v715 = vrsqrt.pop %v713
        %v716 = vmul.f32 %v700, %v714
        %v717 = vmul.f32 %v701, %v715
        %v719 = vlaneseq
        %v720 = vshrl.u32 %v719, 7
        %v721 = vsub.s32 0, %v720
        %v722 = vrot.slane %v690, %v721
        %v724 = vmul.f32 %v716, %v722
        %v725 = vmul.f32 %v717, %v722
        %v727 = vlaneseq
        %v728 = vshrl.u32 %v727, 7
        %v729 = vsub.s32 0, %v728
        %v730 = vrot.slane %v691, %v729
        %v732 = vadd.f32 %v724, %v730
        %v733 = vadd.f32 %v725, %v730
        %v734 = vpack.c.bf16 %v689, %v689
        %v735 = vld [vmem:[%s9] sm:$0xf]
        %v736 = vld [vmem:[%s9 + $0x4] sm:$0xf]
        %v737 = vld [vmem:[%s9 + $0x8] sm:$0xf]
        %v738 = vld [vmem:[%s9 + $0xc] sm:$0xf]
        %v739 = vld [vmem:[%s10] sm:$0x1]
        %v741 = vlaneseq
        %v742 = vshrl.u32 %v741, 7
        %v743 = vsub.s32 0, %v742
        %v744 = vrot.slane %v739, %v743
        %v750 = vunpack.c.l.b16 %v735
        %v751 = vunpack.c.l.b16 %v736
        %v752 = vunpack.c.l.b16 %v737
        %v753 = vunpack.c.l.b16 %v738
        %v754 = vpack.c.b16 %v751, %v750
        %v755 = vpack.c.b16 %v753, %v752
        %v759 = vsel %vm661, %v734, 0
        %761 = vmatprep.subr.bf16.mxu0 0
        %762 = vmatpush1.bf16.msra.mxu0 %v754
        %763 = vmatprep.subr.bf16.mxu0 0
        %764 = vmatpush1.bf16.msra.mxu0 %v755
        %765 = vmatprep.subr.bf16.mxu0 0
        %766 = vmatpush1.bf16.msra.mxu0 0
        %767 = vmatprep.subr.bf16.mxu0 0
        %768 = vmatpush1.bf16.msra.mxu0 0
        %769 = vmatprep.subr.bf16.mxu0 0
        %770 = vmatpush1.bf16.msra.mxu0 0
        %771 = vmatprep.subr.bf16.mxu0 0
        %772 = vmatpush1.bf16.msra.mxu0 0
        %773 = vmatprep.subr.bf16.mxu0 0
        %774 = vmatpush1.bf16.msra.mxu0 0
        %775 = vmatprep.subr.bf16.mxu0 0
        %776 = vmatpush1.bf16.msra.mxu0 0
        %777 = vmatprep.subr.bf16.mxu0 0
        %778 = vmatpush1.bf16.msra.mxu0 0
        %779 = vmatprep.subr.bf16.mxu0 0
        %780 = vmatpush1.bf16.msra.mxu0 0
        %781 = vmatprep.subr.bf16.mxu0 0
        %782 = vmatpush1.bf16.msra.mxu0 0
        %783 = vmatprep.subr.bf16.mxu0 0
        %784 = vmatpush1.bf16.msra.mxu0 0
        %785 = vmatprep.subr.bf16.mxu0 0
        %786 = vmatpush1.bf16.msra.mxu0 0
        %787 = vmatprep.subr.bf16.mxu0 0
        %788 = vmatpush1.bf16.msra.mxu0 0
        %789 = vmatprep.subr.bf16.mxu0 0
        %790 = vmatpush1.bf16.msra.mxu0 0
        %791 = vmatprep.subr.bf16.mxu0 0
        %792 = vmatpush1.bf16.msra.mxu0 0
        %793 = vmatprep.mubr.bf16.mxu0 0
        %794 = vmatmul.mubr.bf16.gmra.mrb[0].mxu0 %v759
        %v795 = vpop.f32.mrb[0].mxu0
        %v796 = vadd.f32 %v744, %v795
        %v797 = vpop.f32.mrb[0].mxu0
        %v798 = vpop.f32.mrb[0].mxu0
        %v799 = vpop.f32.mrb[0].mxu0
        %800 = vdwg.mxu0
        %v801 = vpack.c.bf16 %v733, %v732
        %v802 = vld [vmem:[%s11] sm:$0xf]
        %v803 = vld [vmem:[%s11 + $0x4] sm:$0xf]
        %v804 = vld [vmem:[%s11 + $0x8] sm:$0xf]
        %v805 = vld [vmem:[%s11 + $0xc] sm:$0xf]
        %v806 = vld [vmem:[%s12] sm:$0x1]
        %v808 = vlaneseq
        %v809 = vshrl.u32 %v808, 7
        %v810 = vsub.s32 0, %v809
        %v811 = vrot.slane %v806, %v810
        %v817 = vunpack.c.l.b16 %v802
        %v818 = vunpack.c.l.b16 %v803
        %v819 = vunpack.c.l.b16 %v804
        %v820 = vunpack.c.l.b16 %v805
        %v821 = vpack.c.b16 %v818, %v817
        %v822 = vpack.c.b16 %v820, %v819
        %v826 = vsel %vm661, %v801, 0
        %828 = vmatprep.subr.bf16.mxu0 0
        %829 = vmatpush1.bf16.msra.mxu0 %v821
        %830 = vmatprep.subr.bf16.mxu0 0
        %831 = vmatpush1.bf16.msra.mxu0 %v822
        %832 = vmatprep.subr.bf16.mxu0 0
        %833 = vmatpush1.bf16.msra.mxu0 0
        %834 = vmatprep.subr.bf16.mxu0 0
        %835 = vmatpush1.bf16.msra.mxu0 0
        %836 = vmatprep.subr.bf16.mxu0 0
        %837 = vmatpush1.bf16.msra.mxu0 0
        %838 = vmatprep.subr.bf16.mxu0 0
        %839 = vmatpush1.bf16.msra.mxu0 0
        %840 = vmatprep.subr.bf16.mxu0 0
        %841 = vmatpush1.bf16.msra.mxu0 0
        %842 = vmatprep.subr.bf16.mxu0 0
        %843 = vmatpush1.bf16.msra.mxu0 0
        %844 = vmatprep.subr.bf16.mxu0 0
        %845 = vmatpush1.bf16.msra.mxu0 0
        %846 = vmatprep.subr.bf16.mxu0 0
        %847 = vmatpush1.bf16.msra.mxu0 0
        %848 = vmatprep.subr.bf16.mxu0 0
        %849 = vmatpush1.bf16.msra.mxu0 0
        %850 = vmatprep.subr.bf16.mxu0 0
        %851 = vmatpush1.bf16.msra.mxu0 0
        %852 = vmatprep.subr.bf16.mxu0 0
        %853 = vmatpush1.bf16.msra.mxu0 0
        %854 = vmatprep.subr.bf16.mxu0 0
        %855 = vmatpush1.bf16.msra.mxu0 0
        %856 = vmatprep.subr.bf16.mxu0 0
        %857 = vmatpush1.bf16.msra.mxu0 0
        %858 = vmatprep.subr.bf16.mxu0 0
        %859 = vmatpush1.bf16.msra.mxu0 0
        %860 = vmatprep.mubr.bf16.mxu0 0
        %861 = vmatmul.mubr.bf16.gmra.mrb[0].mxu0 %v826
        %v862 = vpop.f32.mrb[0].mxu0
        %v863 = vadd.f32 %v811, %v862
        %v864 = vpop.f32.mrb[0].mxu0
        %v865 = vpop.f32.mrb[0].mxu0
        %v866 = vadd.f32 %v811, %v865
        %v867 = vpop.f32.mrb[0].mxu0
        %868 = vdwg.mxu0
        %869 = vxpose.xlu0.b32.start [1/16] %v796, 128
        %870 = vxpose.xlu0.b32.cont [2/16] 0.0, 128
        %871 = vxpose.xlu0.b32.cont [3/16] 0.0, 128
        %872 = vxpose.xlu0.b32.cont [4/16] 0.0, 128
        %873 = vxpose.xlu0.b32.cont [5/16] 0.0, 128
        %874 = vxpose.xlu0.b32.cont [6/16] 0.0, 128
        %875 = vxpose.xlu0.b32.cont [7/16] 0.0, 128
        %876 = vxpose.xlu0.b32.cont [8/16] 0.0, 128
        %877 = vxpose.xlu0.b32.cont [9/16] 0.0, 128
        %878 = vxpose.xlu0.b32.cont [10/16] 0.0, 128
        %879 = vxpose.xlu0.b32.cont [11/16] 0.0, 128
        %880 = vxpose.xlu0.b32.cont [12/16] 0.0, 128
        %881 = vxpose.xlu0.b32.cont [13/16] 0.0, 128
        %882 = vxpose.xlu0.b32.cont [14/16] 0.0, 128
        %883 = vxpose.xlu0.b32.cont [15/16] 0.0, 128
        %884 = vxpose.xlu0.b32.end [16/16] 0.0, 128
        %v885 = vpop.trf.xlu0
        %v886 = vpop.trf.xlu0
        %v887 = vpop.trf.xlu0
        %v888 = vpop.trf.xlu0
        %v889 = vpop.trf.xlu0
        %v890 = vpop.trf.xlu0
        %v891 = vpop.trf.xlu0
        %v892 = vpop.trf.xlu0
        %v893 = vpop.trf.xlu0
        %v894 = vpop.trf.xlu0
        %v895 = vpop.trf.xlu0
        %v896 = vpop.trf.xlu0
        %v897 = vpop.trf.xlu0
        %v898 = vpop.trf.xlu0
        %v899 = vpop.trf.xlu0
        %v900 = vpop.trf.xlu0
        %901 = vxpose.xlu0.b32.start [1/16] %v885, 128
        %902 = vxpose.xlu0.b32.cont [2/16] 0.0, 128
        %903 = vxpose.xlu0.b32.cont [3/16] 0.0, 128
        %904 = vxpose.xlu0.b32.cont [4/16] 0.0, 128
        %905 = vxpose.xlu0.b32.cont [5/16] 0.0, 128
        %906 = vxpose.xlu0.b32.cont [6/16] 0.0, 128
        %907 = vxpose.xlu0.b32.cont [7/16] 0.0, 128
        %908 = vxpose.xlu0.b32.cont [8/16] 0.0, 128
        %909 = vxpose.xlu0.b32.cont [9/16] 0.0, 128
        %910 = vxpose.xlu0.b32.cont [10/16] 0.0, 128
        %911 = vxpose.xlu0.b32.cont [11/16] 0.0, 128
        %912 = vxpose.xlu0.b32.cont [12/16] 0.0, 128
        %913 = vxpose.xlu0.b32.cont [13/16] 0.0, 128
        %914 = vxpose.xlu0.b32.cont [14/16] 0.0, 128
        %915 = vxpose.xlu0.b32.cont [15/16] 0.0, 128
        %916 = vxpose.xlu0.b32.end [16/16] 0.0, 128
        %v917 = vpop.trf.xlu0
        %v918 = vpop.trf.xlu0
        %v919 = vpop.trf.xlu0
        %v920 = vpop.trf.xlu0
        %v921 = vpop.trf.xlu0
        %v922 = vpop.trf.xlu0
        %v923 = vpop.trf.xlu0
        %v924 = vpop.trf.xlu0
        %v925 = vpop.trf.xlu0
        %v926 = vpop.trf.xlu0
        %v927 = vpop.trf.xlu0
        %v928 = vpop.trf.xlu0
        %v929 = vpop.trf.xlu0
        %v930 = vpop.trf.xlu0
        %v931 = vpop.trf.xlu0
        %v932 = vpop.trf.xlu0
        %933 = vxpose.xlu0.b32.start [1/16] %v886, 128
        %934 = vxpose.xlu0.b32.cont [2/16] 0.0, 128
        %935 = vxpose.xlu0.b32.cont [3/16] 0.0, 128
        %936 = vxpose.xlu0.b32.cont [4/16] 0.0, 128
        %937 = vxpose.xlu0.b32.cont [5/16] 0.0, 128
        %938 = vxpose.xlu0.b32.cont [6/16] 0.0, 128
        %939 = vxpose.xlu0.b32.cont [7/16] 0.0, 128
        %940 = vxpose.xlu0.b32.cont [8/16] 0.0, 128
        %941 = vxpose.xlu0.b32.cont [9/16] 0.0, 128
        %942 = vxpose.xlu0.b32.cont [10/16] 0.0, 128
        %943 = vxpose.xlu0.b32.cont [11/16] 0.0, 128
        %944 = vxpose.xlu0.b32.cont [12/16] 0.0, 128
        %945 = vxpose.xlu0.b32.cont [13/16] 0.0, 128
        %946 = vxpose.xlu0.b32.cont [14/16] 0.0, 128
        %947 = vxpose.xlu0.b32.cont [15/16] 0.0, 128
        %948 = vxpose.xlu0.b32.end [16/16] 0.0, 128
        %v949 = vpop.trf.xlu0
        %v950 = vpop.trf.xlu0
        %v951 = vpop.trf.xlu0
        %v952 = vpop.trf.xlu0
        %v953 = vpop.trf.xlu0
        %v954 = vpop.trf.xlu0
        %v955 = vpop.trf.xlu0
        %v956 = vpop.trf.xlu0
        %v957 = vpop.trf.xlu0
        %v958 = vpop.trf.xlu0
        %v959 = vpop.trf.xlu0
        %v960 = vpop.trf.xlu0
        %v961 = vpop.trf.xlu0
        %v962 = vpop.trf.xlu0
        %v963 = vpop.trf.xlu0
        %v964 = vpop.trf.xlu0
        %965 = vxpose.xlu0.b32.start [1/16] %v887, 128
        %966 = vxpose.xlu0.b32.cont [2/16] 0.0, 128
        %967 = vxpose.xlu0.b32.cont [3/16] 0.0, 128
        %968 = vxpose.xlu0.b32.cont [4/16] 0.0, 128
        %969 = vxpose.xlu0.b32.cont [5/16] 0.0, 128
        %970 = vxpose.xlu0.b32.cont [6/16] 0.0, 128
        %971 = vxpose.xlu0.b32.cont [7/16] 0.0, 128
        %972 = vxpose.xlu0.b32.cont [8/16] 0.0, 128
        %973 = vxpose.xlu0.b32.cont [9/16] 0.0, 128
        %974 = vxpose.xlu0.b32.cont [10/16] 0.0, 128
        %975 = vxpose.xlu0.b32.cont [11/16] 0.0, 128
        %976 = vxpose.xlu0.b32.cont [12/16] 0.0, 128
        %977 = vxpose.xlu0.b32.cont [13/16] 0.0, 128
        %978 = vxpose.xlu0.b32.cont [14/16] 0.0, 128
        %979 = vxpose.xlu0.b32.cont [15/16] 0.0, 128
        %980 = vxpose.xlu0.b32.end [16/16] 0.0, 128
        %v981 = vpop.trf.xlu0
        %v982 = vpop.trf.xlu0
        %v983 = vpop.trf.xlu0
        %v984 = vpop.trf.xlu0
        %v985 = vpop.trf.xlu0
        %v986 = vpop.trf.xlu0
        %v987 = vpop.trf.xlu0
        %v988 = vpop.trf.xlu0
        %v989 = vpop.trf.xlu0
        %v990 = vpop.trf.xlu0
        %v991 = vpop.trf.xlu0
        %v992 = vpop.trf.xlu0
        %v993 = vpop.trf.xlu0
        %v994 = vpop.trf.xlu0
        %v995 = vpop.trf.xlu0
        %v996 = vpop.trf.xlu0
        %997 = vxpose.xlu0.b32.start [1/16] %v888, 128
        %998 = vxpose.xlu0.b32.cont [2/16] 0.0, 128
        %999 = vxpose.xlu0.b32.cont [3/16] 0.0, 128
        %1000 = vxpose.xlu0.b32.cont [4/16] 0.0, 128
        %1001 = vxpose.xlu0.b32.cont [5/16] 0.0, 128
        %1002 = vxpose.xlu0.b32.cont [6/16] 0.0, 128
        %1003 = vxpose.xlu0.b32.cont [7/16] 0.0, 128
        %1004 = vxpose.xlu0.b32.cont [8/16] 0.0, 128
        %1005 = vxpose.xlu0.b32.cont [9/16] 0.0, 128
        %1006 = vxpose.xlu0.b32.cont [10/16] 0.0, 128
        %1007 = vxpose.xlu0.b32.cont [11/16] 0.0, 128
        %1008 = vxpose.xlu0.b32.cont [12/16] 0.0, 128
        %1009 = vxpose.xlu0.b32.cont [13/16] 0.0, 128
        %1010 = vxpose.xlu0.b32.cont [14/16] 0.0, 128
        %1011 = vxpose.xlu0.b32.cont [15/16] 0.0, 128
        %1012 = vxpose.xlu0.b32.end [16/16] 0.0, 128
        %v1013 = vpop.trf.xlu0
        %v1014 = vpop.trf.xlu0
        %v1015 = vpop.trf.xlu0
        %v1016 = vpop.trf.xlu0
        %v1017 = vpop.trf.xlu0
        %v1018 = vpop.trf.xlu0
        %v1019 = vpop.trf.xlu0
        %v1020 = vpop.trf.xlu0
        %v1021 = vpop.trf.xlu0
        %v1022 = vpop.trf.xlu0
        %v1023 = vpop.trf.xlu0
        %v1024 = vpop.trf.xlu0
        %v1025 = vpop.trf.xlu0
        %v1026 = vpop.trf.xlu0
        %v1027 = vpop.trf.xlu0
        %v1028 = vpop.trf.xlu0
        %v1029 = vpack.c.bf16 %v917, %v917
        %v1030 = vpack.c.bf16 %v949, %v949
        %v1031 = vpack.c.bf16 %v981, %v981
        %v1032 = vpack.c.bf16 %v1013, %v1013
        %1033 = vxpose.xlu0.b32.start [1/16] %v863, 128
        %1034 = vxpose.xlu0.b32.cont [2/16] %v866, 128
        %1035 = vxpose.xlu0.b32.cont [3/16] 0.0, 128
        %1036 = vxpose.xlu0.b32.cont [4/16] 0.0, 128
        %1037 = vxpose.xlu0.b32.cont [5/16] 0.0, 128
        %1038 = vxpose.xlu0.b32.cont [6/16] 0.0, 128
        %1039 = vxpose.xlu0.b32.cont [7/16] 0.0, 128
        %1040 = vxpose.xlu0.b32.cont [8/16] 0.0, 128
        %1041 = vxpose.xlu0.b32.cont [9/16] 0.0, 128
        %1042 = vxpose.xlu0.b32.cont [10/16] 0.0, 128
        %1043 = vxpose.xlu0.b32.cont [11/16] 0.0, 128
        %1044 = vxpose.xlu0.b32.cont [12/16] 0.0, 128
        %1045 = vxpose.xlu0.b32.cont [13/16] 0.0, 128
        %1046 = vxpose.xlu0.b32.cont [14/16] 0.0, 128
        %1047 = vxpose.xlu0.b32.cont [15/16] 0.0, 128
        %1048 = vxpose.xlu0.b32.end [16/16] 0.0, 128
        %v1049 = vpop.trf.xlu0
        %v1050 = vpop.trf.xlu0
        %v1051 = vpop.trf.xlu0
        %v1052 = vpop.trf.xlu0
        %v1053 = vpop.trf.xlu0
        %v1054 = vpop.trf.xlu0
        %v1055 = vpop.trf.xlu0
        %v1056 = vpop.trf.xlu0
        %v1057 = vpop.trf.xlu0
        %v1058 = vpop.trf.xlu0
        %v1059 = vpop.trf.xlu0
        %v1060 = vpop.trf.xlu0
        %v1061 = vpop.trf.xlu0
        %v1062 = vpop.trf.xlu0
        %v1063 = vpop.trf.xlu0
        %v1064 = vpop.trf.xlu0
        %1065 = vxpose.xlu0.b32.start [1/16] %v1049, 128
        %1066 = vxpose.xlu0.b32.cont [2/16] 0.0, 128
        %1067 = vxpose.xlu0.b32.cont [3/16] 0.0, 128
        %1068 = vxpose.xlu0.b32.cont [4/16] 0.0, 128
        %1069 = vxpose.xlu0.b32.cont [5/16] 0.0, 128
        %1070 = vxpose.xlu0.b32.cont [6/16] 0.0, 128
        %1071 = vxpose.xlu0.b32.cont [7/16] 0.0, 128
        %1072 = vxpose.xlu0.b32.cont [8/16] 0.0, 128
        %1073 = vxpose.xlu0.b32.cont [9/16] 0.0, 128
        %1074 = vxpose.xlu0.b32.cont [10/16] 0.0, 128
        %1075 = vxpose.xlu0.b32.cont [11/16] 0.0, 128
        %1076 = vxpose.xlu0.b32.cont [12/16] 0.0, 128
        %1077 = vxpose.xlu0.b32.cont [13/16] 0.0, 128
        %1078 = vxpose.xlu0.b32.cont [14/16] 0.0, 128
        %1079 = vxpose.xlu0.b32.cont [15/16] 0.0, 128
        %1080 = vxpose.xlu0.b32.end [16/16] 0.0, 128
        %v1081 = vpop.trf.xlu0
        %v1082 = vpop.trf.xlu0
        %v1083 = vpop.trf.xlu0
        %v1084 = vpop.trf.xlu0
        %v1085 = vpop.trf.xlu0
        %v1086 = vpop.trf.xlu0
        %v1087 = vpop.trf.xlu0
        %v1088 = vpop.trf.xlu0
        %v1089 = vpop.trf.xlu0
        %v1090 = vpop.trf.xlu0
        %v1091 = vpop.trf.xlu0
        %v1092 = vpop.trf.xlu0
        %v1093 = vpop.trf.xlu0
        %v1094 = vpop.trf.xlu0
        %v1095 = vpop.trf.xlu0
        %v1096 = vpop.trf.xlu0
        %1097 = vxpose.xlu0.b32.start [1/16] %v1050, 128
        %1098 = vxpose.xlu0.b32.cont [2/16] 0.0, 128
        %1099 = vxpose.xlu0.b32.cont [3/16] 0.0, 128
        %1100 = vxpose.xlu0.b32.cont [4/16] 0.0, 128
        %1101 = vxpose.xlu0.b32.cont [5/16] 0.0, 128
        %1102 = vxpose.xlu0.b32.cont [6/16] 0.0, 128
        %1103 = vxpose.xlu0.b32.cont [7/16] 0.0, 128
        %1104 = vxpose.xlu0.b32.cont [8/16] 0.0, 128
        %1105 = vxpose.xlu0.b32.cont [9/16] 0.0, 128
        %1106 = vxpose.xlu0.b32.cont [10/16] 0.0, 128
        %1107 = vxpose.xlu0.b32.cont [11/16] 0.0, 128
        %1108 = vxpose.xlu0.b32.cont [12/16] 0.0, 128
        %1109 = vxpose.xlu0.b32.cont [13/16] 0.0, 128
        %1110 = vxpose.xlu0.b32.cont [14/16] 0.0, 128
        %1111 = vxpose.xlu0.b32.cont [15/16] 0.0, 128
        %1112 = vxpose.xlu0.b32.end [16/16] 0.0, 128
        %v1113 = vpop.trf.xlu0
        %v1114 = vpop.trf.xlu0
        %v1115 = vpop.trf.xlu0
        %v1116 = vpop.trf.xlu0
        %v1117 = vpop.trf.xlu0
        %v1118 = vpop.trf.xlu0
        %v1119 = vpop.trf.xlu0
        %v1120 = vpop.trf.xlu0
        %v1121 = vpop.trf.xlu0
        %v1122 = vpop.trf.xlu0
        %v1123 = vpop.trf.xlu0
        %v1124 = vpop.trf.xlu0
        %v1125 = vpop.trf.xlu0
        %v1126 = vpop.trf.xlu0
        %v1127 = vpop.trf.xlu0
        %v1128 = vpop.trf.xlu0
        %1129 = vxpose.xlu0.b32.start [1/16] %v1051, 128
        %1130 = vxpose.xlu0.b32.cont [2/16] 0.0, 128
        %1131 = vxpose.xlu0.b32.cont [3/16] 0.0, 128
        %1132 = vxpose.xlu0.b32.cont [4/16] 0.0, 128
        %1133 = vxpose.xlu0.b32.cont [5/16] 0.0, 128
        %1134 = vxpose.xlu0.b32.cont [6/16] 0.0, 128
        %1135 = vxpose.xlu0.b32.cont [7/16] 0.0, 128
        %1136 = vxpose.xlu0.b32.cont [8/16] 0.0, 128
        %1137 = vxpose.xlu0.b32.cont [9/16] 0.0, 128
        %1138 = vxpose.xlu0.b32.cont [10/16] 0.0, 128
        %1139 = vxpose.xlu0.b32.cont [11/16] 0.0, 128
        %1140 = vxpose.xlu0.b32.cont [12/16] 0.0, 128
        %1141 = vxpose.xlu0.b32.cont [13/16] 0.0, 128
        %1142 = vxpose.xlu0.b32.cont [14/16] 0.0, 128
        %1143 = vxpose.xlu0.b32.cont [15/16] 0.0, 128
        %1144 = vxpose.xlu0.b32.end [16/16] 0.0, 128
        %v1145 = vpop.trf.xlu0
        %v1146 = vpop.trf.xlu0
        %v1147 = vpop.trf.xlu0
        %v1148 = vpop.trf.xlu0
        %v1149 = vpop.trf.xlu0
        %v1150 = vpop.trf.xlu0
        %v1151 = vpop.trf.xlu0
        %v1152 = vpop.trf.xlu0
        %v1153 = vpop.trf.xlu0
        %v1154 = vpop.trf.xlu0
        %v1155 = vpop.trf.xlu0
        %v1156 = vpop.trf.xlu0
        %v1157 = vpop.trf.xlu0
        %v1158 = vpop.trf.xlu0
        %v1159 = vpop.trf.xlu0
        %v1160 = vpop.trf.xlu0
        %1161 = vxpose.xlu0.b32.start [1/16] %v1052, 128
        %1162 = vxpose.xlu0.b32.cont [2/16] 0.0, 128
        %1163 = vxpose.xlu0.b32.cont [3/16] 0.0, 128
        %1164 = vxpose.xlu0.b32.cont [4/16] 0.0, 128
        %1165 = vxpose.xlu0.b32.cont [5/16] 0.0, 128
        %1166 = vxpose.xlu0.b32.cont [6/16] 0.0, 128
        %1167 = vxpose.xlu0.b32.cont [7/16] 0.0, 128
        %1168 = vxpose.xlu0.b32.cont [8/16] 0.0, 128
        %1169 = vxpose.xlu0.b32.cont [9/16] 0.0, 128
        %1170 = vxpose.xlu0.b32.cont [10/16] 0.0, 128
        %1171 = vxpose.xlu0.b32.cont [11/16] 0.0, 128
        %1172 = vxpose.xlu0.b32.cont [12/16] 0.0, 128
        %1173 = vxpose.xlu0.b32.cont [13/16] 0.0, 128
        %1174 = vxpose.xlu0.b32.cont [14/16] 0.0, 128
        %1175 = vxpose.xlu0.b32.cont [15/16] 0.0, 128
        %1176 = vxpose.xlu0.b32.end [16/16] 0.0, 128
        %v1177 = vpop.trf.xlu0
        %v1178 = vpop.trf.xlu0
        %v1179 = vpop.trf.xlu0
        %v1180 = vpop.trf.xlu0
        %v1181 = vpop.trf.xlu0
        %v1182 = vpop.trf.xlu0
        %v1183 = vpop.trf.xlu0
        %v1184 = vpop.trf.xlu0
        %v1185 = vpop.trf.xlu0
        %v1186 = vpop.trf.xlu0
        %v1187 = vpop.trf.xlu0
        %v1188 = vpop.trf.xlu0
        %v1189 = vpop.trf.xlu0
        %v1190 = vpop.trf.xlu0
        %v1191 = vpop.trf.xlu0
        %v1192 = vpop.trf.xlu0
        %v1193 = vpack.c.bf16 %v1082, %v1081
        %v1194 = vpack.c.bf16 %v1114, %v1113
        %v1195 = vpack.c.bf16 %v1146, %v1145
        %v1196 = vpack.c.bf16 %v1178, %v1177
        %1199 = vrot.lane.b32.xlu0 %v863, 96
        %v1200 = vpop.permute.xlu0 %1199
        %1201 = vrot.lane.b32.xlu0 %v866, 96
        %v1202 = vpop.permute.xlu0 %1201
        %1205 = vxpose.xlu0.b32.start [1/16] %v1200, 128
        %1206 = vxpose.xlu0.b32.cont [2/16] %v1202, 128
        %1207 = vxpose.xlu0.b32.cont [3/16] 0.0, 128
        %1208 = vxpose.xlu0.b32.cont [4/16] 0.0, 128
        %1209 = vxpose.xlu0.b32.cont [5/16] 0.0, 128
        %1210 = vxpose.xlu0.b32.cont [6/16] 0.0, 128
        %1211 = vxpose.xlu0.b32.cont [7/16] 0.0, 128
        %1212 = vxpose.xlu0.b32.cont [8/16] 0.0, 128
        %1213 = vxpose.xlu0.b32.cont [9/16] 0.0, 128
        %1214 = vxpose.xlu0.b32.cont [10/16] 0.0, 128
        %1215 = vxpose.xlu0.b32.cont [11/16] 0.0, 128
        %1216 = vxpose.xlu0.b32.cont [12/16] 0.0, 128
        %1217 = vxpose.xlu0.b32.cont [13/16] 0.0, 128
        %1218 = vxpose.xlu0.b32.cont [14/16] 0.0, 128
        %1219 = vxpose.xlu0.b32.cont [15/16] 0.0, 128
        %1220 = vxpose.xlu0.b32.end [16/16] 0.0, 128
        %v1221 = vpop.trf.xlu0
        %v1222 = vpop.trf.xlu0
        %v1223 = vpop.trf.xlu0
        %v1224 = vpop.trf.xlu0
        %v1225 = vpop.trf.xlu0
        %v1226 = vpop.trf.xlu0
        %v1227 = vpop.trf.xlu0
        %v1228 = vpop.trf.xlu0
        %v1229 = vpop.trf.xlu0
        %v1230 = vpop.trf.xlu0
        %v1231 = vpop.trf.xlu0
        %v1232 = vpop.trf.xlu0
        %v1233 = vpop.trf.xlu0
        %v1234 = vpop.trf.xlu0
        %v1235 = vpop.trf.xlu0
        %v1236 = vpop.trf.xlu0
        %1237 = vxpose.xlu0.b32.start [1/16] %v1221, 128
        %1238 = vxpose.xlu0.b32.cont [2/16] 0.0, 128
        %1239 = vxpose.xlu0.b32.cont [3/16] 0.0, 128
        %1240 = vxpose.xlu0.b32.cont [4/16] 0.0, 128
        %1241 = vxpose.xlu0.b32.cont [5/16] 0.0, 128
        %1242 = vxpose.xlu0.b32.cont [6/16] 0.0, 128
        %1243 = vxpose.xlu0.b32.cont [7/16] 0.0, 128
        %1244 = vxpose.xlu0.b32.cont [8/16] 0.0, 128
        %1245 = vxpose.xlu0.b32.cont [9/16] 0.0, 128
        %1246 = vxpose.xlu0.b32.cont [10/16] 0.0, 128
        %1247 = vxpose.xlu0.b32.cont [11/16] 0.0, 128
        %1248 = vxpose.xlu0.b32.cont [12/16] 0.0, 128
        %1249 = vxpose.xlu0.b32.cont [13/16] 0.0, 128
        %1250 = vxpose.xlu0.b32.cont [14/16] 0.0, 128
        %1251 = vxpose.xlu0.b32.cont [15/16] 0.0, 128
        %1252 = vxpose.xlu0.b32.end [16/16] 0.0, 128
        %v1253 = vpop.trf.xlu0
        %v1254 = vpop.trf.xlu0
        %v1255 = vpop.trf.xlu0
        %v1256 = vpop.trf.xlu0
        %v1257 = vpop.trf.xlu0
        %v1258 = vpop.trf.xlu0
        %v1259 = vpop.trf.xlu0
        %v1260 = vpop.trf.xlu0
        %v1261 = vpop.trf.xlu0
        %v1262 = vpop.trf.xlu0
        %v1263 = vpop.trf.xlu0
        %v1264 = vpop.trf.xlu0
        %v1265 = vpop.trf.xlu0
        %v1266 = vpop.trf.xlu0
        %v1267 = vpop.trf.xlu0
        %v1268 = vpop.trf.xlu0
        %1269 = vxpose.xlu0.b32.start [1/16] %v1222, 128
        %1270 = vxpose.xlu0.b32.cont [2/16] 0.0, 128
        %1271 = vxpose.xlu0.b32.cont [3/16] 0.0, 128
        %1272 = vxpose.xlu0.b32.cont [4/16] 0.0, 128
        %1273 = vxpose.xlu0.b32.cont [5/16] 0.0, 128
        %1274 = vxpose.xlu0.b32.cont [6/16] 0.0, 128
        %1275 = vxpose.xlu0.b32.cont [7/16] 0.0, 128
        %1276 = vxpose.xlu0.b32.cont [8/16] 0.0, 128
        %1277 = vxpose.xlu0.b32.cont [9/16] 0.0, 128
        %1278 = vxpose.xlu0.b32.cont [10/16] 0.0, 128
        %1279 = vxpose.xlu0.b32.cont [11/16] 0.0, 128
        %1280 = vxpose.xlu0.b32.cont [12/16] 0.0, 128
        %1281 = vxpose.xlu0.b32.cont [13/16] 0.0, 128
        %1282 = vxpose.xlu0.b32.cont [14/16] 0.0, 128
        %1283 = vxpose.xlu0.b32.cont [15/16] 0.0, 128
        %1284 = vxpose.xlu0.b32.end [16/16] 0.0, 128
        %v1285 = vpop.trf.xlu0
        %v1286 = vpop.trf.xlu0
        %v1287 = vpop.trf.xlu0
        %v1288 = vpop.trf.xlu0
        %v1289 = vpop.trf.xlu0
        %v1290 = vpop.trf.xlu0
        %v1291 = vpop.trf.xlu0
        %v1292 = vpop.trf.xlu0
        %v1293 = vpop.trf.xlu0
        %v1294 = vpop.trf.xlu0
        %v1295 = vpop.trf.xlu0
        %v1296 = vpop.trf.xlu0
        %v1297 = vpop.trf.xlu0
        %v1298 = vpop.trf.xlu0
        %v1299 = vpop.trf.xlu0
        %v1300 = vpop.trf.xlu0
        %1301 = vxpose.xlu0.b32.start [1/16] %v1223, 128
        %1302 = vxpose.xlu0.b32.cont [2/16] 0.0, 128
        %1303 = vxpose.xlu0.b32.cont [3/16] 0.0, 128
        %1304 = vxpose.xlu0.b32.cont [4/16] 0.0, 128
        %1305 = vxpose.xlu0.b32.cont [5/16] 0.0, 128
        %1306 = vxpose.xlu0.b32.cont [6/16] 0.0, 128
        %1307 = vxpose.xlu0.b32.cont [7/16] 0.0, 128
        %1308 = vxpose.xlu0.b32.cont [8/16] 0.0, 128
        %1309 = vxpose.xlu0.b32.cont [9/16] 0.0, 128
        %1310 = vxpose.xlu0.b32.cont [10/16] 0.0, 128
        %1311 = vxpose.xlu0.b32.cont [11/16] 0.0, 128
        %1312 = vxpose.xlu0.b32.cont [12/16] 0.0, 128
        %1313 = vxpose.xlu0.b32.cont [13/16] 0.0, 128
        %1314 = vxpose.xlu0.b32.cont [14/16] 0.0, 128
        %1315 = vxpose.xlu0.b32.cont [15/16] 0.0, 128
        %1316 = vxpose.xlu0.b32.end [16/16] 0.0, 128
        %v1317 = vpop.trf.xlu0
        %v1318 = vpop.trf.xlu0
        %v1319 = vpop.trf.xlu0
        %v1320 = vpop.trf.xlu0
        %v1321 = vpop.trf.xlu0
        %v1322 = vpop.trf.xlu0
        %v1323 = vpop.trf.xlu0
        %v1324 = vpop.trf.xlu0
        %v1325 = vpop.trf.xlu0
        %v1326 = vpop.trf.xlu0
        %v1327 = vpop.trf.xlu0
        %v1328 = vpop.trf.xlu0
        %v1329 = vpop.trf.xlu0
        %v1330 = vpop.trf.xlu0
        %v1331 = vpop.trf.xlu0
        %v1332 = vpop.trf.xlu0
        %1333 = vxpose.xlu0.b32.start [1/16] %v1224, 128
        %1334 = vxpose.xlu0.b32.cont [2/16] 0.0, 128
        %1335 = vxpose.xlu0.b32.cont [3/16] 0.0, 128
        %1336 = vxpose.xlu0.b32.cont [4/16] 0.0, 128
        %1337 = vxpose.xlu0.b32.cont [5/16] 0.0, 128
        %1338 = vxpose.xlu0.b32.cont [6/16] 0.0, 128
        %1339 = vxpose.xlu0.b32.cont [7/16] 0.0, 128
        %1340 = vxpose.xlu0.b32.cont [8/16] 0.0, 128
        %1341 = vxpose.xlu0.b32.cont [9/16] 0.0, 128
        %1342 = vxpose.xlu0.b32.cont [10/16] 0.0, 128
        %1343 = vxpose.xlu0.b32.cont [11/16] 0.0, 128
        %1344 = vxpose.xlu0.b32.cont [12/16] 0.0, 128
        %1345 = vxpose.xlu0.b32.cont [13/16] 0.0, 128
        %1346 = vxpose.xlu0.b32.cont [14/16] 0.0, 128
        %1347 = vxpose.xlu0.b32.cont [15/16] 0.0, 128
        %1348 = vxpose.xlu0.b32.end [16/16] 0.0, 128
        %v1349 = vpop.trf.xlu0
        %v1350 = vpop.trf.xlu0
        %v1351 = vpop.trf.xlu0
        %v1352 = vpop.trf.xlu0
        %v1353 = vpop.trf.xlu0
        %v1354 = vpop.trf.xlu0
        %v1355 = vpop.trf.xlu0
        %v1356 = vpop.trf.xlu0
        %v1357 = vpop.trf.xlu0
        %v1358 = vpop.trf.xlu0
        %v1359 = vpop.trf.xlu0
        %v1360 = vpop.trf.xlu0
        %v1361 = vpop.trf.xlu0
        %v1362 = vpop.trf.xlu0
        %v1363 = vpop.trf.xlu0
        %v1364 = vpop.trf.xlu0
        %v1365 = vpack.c.bf16 %v1254, %v1253
        %v1366 = vpack.c.bf16 %v1286, %v1285
        %v1367 = vpack.c.bf16 %v1318, %v1317
        %v1368 = vpack.c.bf16 %v1350, %v1349
        %v1369 = vld [vmem:[%s651] sm:$0x1]
        %v1370 = vmul.f32 %v1369, -1e+30
        %v1372 = vlaneseq
        %v1373 = vshrl.u32 %v1372, 7
        %v1374 = vsub.s32 0, %v1373
        %v1375 = vrot.slane %v1370, %v1374
        %vm1377 = vcmask 64512
        %v1379 = vsel %vm1377, %v1029, 0
        %v1382 = vsel %vm1377, %v1193, 0
        %1384 = vmatprep.subr.bf16.mxu0 0
        %1385 = vmatpush1.bf16.xpose.msra.mxu0 %v1382
        %1386 = vmatprep.subr.bf16.mxu0 0
        %1387 = vmatpush1.bf16.xpose.msra.mxu0 0
        %1388 = vmatprep.subr.bf16.mxu0 0
        %1389 = vmatpush1.bf16.xpose.msra.mxu0 0
        %1390 = vmatprep.subr.bf16.mxu0 0
        %1391 = vmatpush1.bf16.xpose.msra.mxu0 0
        %1392 = vmatprep.subr.bf16.mxu0 0
        %1393 = vmatpush1.bf16.xpose.msra.mxu0 0
        %1394 = vmatprep.subr.bf16.mxu0 0
        %1395 = vmatpush1.bf16.xpose.msra.mxu0 0
        %1396 = vmatprep.subr.bf16.mxu0 0
        %1397 = vmatpush1.bf16.xpose.msra.mxu0 0
        %1398 = vmatprep.subr.bf16.mxu0 0
        %1399 = vmatpush1.bf16.xpose.msra.mxu0 0
        %1400 = vmatprep.subr.bf16.mxu0 0
        %1401 = vmatpush1.bf16.xpose.msra.mxu0 0
        %1402 = vmatprep.subr.bf16.mxu0 0
        %1403 = vmatpush1.bf16.xpose.msra.mxu0 0
        %1404 = vmatprep.subr.bf16.mxu0 0
        %1405 = vmatpush1.bf16.xpose.msra.mxu0 0
        %1406 = vmatprep.subr.bf16.mxu0 0
        %1407 = vmatpush1.bf16.xpose.msra.mxu0 0
        %1408 = vmatprep.subr.bf16.mxu0 0
        %1409 = vmatpush1.bf16.xpose.msra.mxu0 0
        %1410 = vmatprep.subr.bf16.mxu0 0
        %1411 = vmatpush1.bf16.xpose.msra.mxu0 0
        %1412 = vmatprep.subr.bf16.mxu0 0
        %1413 = vmatpush1.bf16.xpose.msra.mxu0 0
        %1414 = vmatprep.subr.bf16.mxu0 0
        %1415 = vmatpush1.bf16.xpose.msra.mxu0 0
        %1416 = vmatprep.mubr.bf16.mxu0 0
        %1417 = vmatmul.mubr.bf16.gmra.mrb[0].mxu0 %v1379
        %v1418 = vpop.f32.mrb[0].mxu0
        %v1419 = vadd.f32 %v1375, %v1418
        %v1420 = vpop.f32.mrb[0].mxu0
        %v1421 = vpop.f32.mrb[0].mxu0
        %v1422 = vpop.f32.mrb[0].mxu0
        %1423 = vdwg.mxu0
        %v1425 = vsel %vm1377, %v1030, 0
        %v1428 = vsel %vm1377, %v1194, 0
        %1430 = vmatprep.subr.bf16.mxu0 0
        %1431 = vmatpush1.bf16.xpose.msra.mxu0 %v1428
        %1432 = vmatprep.subr.bf16.mxu0 0
        %1433 = vmatpush1.bf16.xpose.msra.mxu0 0
        %1434 = vmatprep.subr.bf16.mxu0 0
        %1435 = vmatpush1.bf16.xpose.msra.mxu0 0
        %1436 = vmatprep.subr.bf16.mxu0 0
        %1437 = vmatpush1.bf16.xpose.msra.mxu0 0
        %1438 = vmatprep.subr.bf16.mxu0 0
        %1439 = vmatpush1.bf16.xpose.msra.mxu0 0
        %1440 = vmatprep.subr.bf16.mxu0 0
        %1441 = vmatpush1.bf16.xpose.msra.mxu0 0
        %1442 = vmatprep.subr.bf16.mxu0 0
        %1443 = vmatpush1.bf16.xpose.msra.mxu0 0
        %1444 = vmatprep.subr.bf16.mxu0 0
        %1445 = vmatpush1.bf16.xpose.msra.mxu0 0
        %1446 = vmatprep.subr.bf16.mxu0 0
        %1447 = vmatpush1.bf16.xpose.msra.mxu0 0
        %1448 = vmatprep.subr.bf16.mxu0 0
        %1449 = vmatpush1.bf16.xpose.msra.mxu0 0
        %1450 = vmatprep.subr.bf16.mxu0 0
        %1451 = vmatpush1.bf16.xpose.msra.mxu0 0
        %1452 = vmatprep.subr.bf16.mxu0 0
        %1453 = vmatpush1.bf16.xpose.msra.mxu0 0
        %1454 = vmatprep.subr.bf16.mxu0 0
        %1455 = vmatpush1.bf16.xpose.msra.mxu0 0
        %1456 = vmatprep.subr.bf16.mxu0 0
        %1457 = vmatpush1.bf16.xpose.msra.mxu0 0
        %1458 = vmatprep.subr.bf16.mxu0 0
        %1459 = vmatpush1.bf16.xpose.msra.mxu0 0
        %1460 = vmatprep.subr.bf16.mxu0 0
        %1461 = vmatpush1.bf16.xpose.msra.mxu0 0
        %1462 = vmatprep.mubr.bf16.mxu0 0
        %1463 = vmatmul.mubr.bf16.gmra.mrb[0].mxu0 %v1425
        %v1464 = vpop.f32.mrb[0].mxu0
        %v1465 = vadd.f32 %v1375, %v1464
        %v1466 = vpop.f32.mrb[0].mxu0
        %v1467 = vpop.f32.mrb[0].mxu0
        %v1468 = vpop.f32.mrb[0].mxu0
        %1469 = vdwg.mxu0
        %v1471 = vsel %vm1377, %v1031, 0
        %v1474 = vsel %vm1377, %v1195, 0
        %1476 = vmatprep.subr.bf16.mxu0 0
        %1477 = vmatpush1.bf16.xpose.msra.mxu0 %v1474
        %1478 = vmatprep.subr.bf16.mxu0 0
        %1479 = vmatpush1.bf16.xpose.msra.mxu0 0
        %1480 = vmatprep.subr.bf16.mxu0 0
        %1481 = vmatpush1.bf16.xpose.msra.mxu0 0
        %1482 = vmatprep.subr.bf16.mxu0 0
        %1483 = vmatpush1.bf16.xpose.msra.mxu0 0
        %1484 = vmatprep.subr.bf16.mxu0 0
        %1485 = vmatpush1.bf16.xpose.msra.mxu0 0
        %1486 = vmatprep.subr.bf16.mxu0 0
        %1487 = vmatpush1.bf16.xpose.msra.mxu0 0
        %1488 = vmatprep.subr.bf16.mxu0 0
        %1489 = vmatpush1.bf16.xpose.msra.mxu0 0
        %1490 = vmatprep.subr.bf16.mxu0 0
        %1491 = vmatpush1.bf16.xpose.msra.mxu0 0
        %1492 = vmatprep.subr.bf16.mxu0 0
        %1493 = vmatpush1.bf16.xpose.msra.mxu0 0
        %1494 = vmatprep.subr.bf16.mxu0 0
        %1495 = vmatpush1.bf16.xpose.msra.mxu0 0
        %1496 = vmatprep.subr.bf16.mxu0 0
        %1497 = vmatpush1.bf16.xpose.msra.mxu0 0
        %1498 = vmatprep.subr.bf16.mxu0 0
        %1499 = vmatpush1.bf16.xpose.msra.mxu0 0
        %1500 = vmatprep.subr.bf16.mxu0 0
        %1501 = vmatpush1.bf16.xpose.msra.mxu0 0
        %1502 = vmatprep.subr.bf16.mxu0 0
        %1503 = vmatpush1.bf16.xpose.msra.mxu0 0
        %1504 = vmatprep.subr.bf16.mxu0 0
        %1505 = vmatpush1.bf16.xpose.msra.mxu0 0
        %1506 = vmatprep.subr.bf16.mxu0 0
        %1507 = vmatpush1.bf16.xpose.msra.mxu0 0
        %1508 = vmatprep.mubr.bf16.mxu0 0
        %1509 = vmatmul.mubr.bf16.gmra.mrb[0].mxu0 %v1471
        %v1510 = vpop.f32.mrb[0].mxu0
        %v1511 = vadd.f32 %v1375, %v1510
        %v1512 = vpop.f32.mrb[0].mxu0
        %v1513 = vpop.f32.mrb[0].mxu0
        %v1514 = vpop.f32.mrb[0].mxu0
        %1515 = vdwg.mxu0
        %v1517 = vsel %vm1377, %v1032, 0
        %v1520 = vsel %vm1377, %v1196, 0
        %1522 = vmatprep.subr.bf16.mxu0 0
        %1523 = vmatpush1.bf16.xpose.msra.mxu0 %v1520
        %1524 = vmatprep.subr.bf16.mxu0 0
        %1525 = vmatpush1.bf16.xpose.msra.mxu0 0
        %1526 = vmatprep.subr.bf16.mxu0 0
        %1527 = vmatpush1.bf16.xpose.msra.mxu0 0
        %1528 = vmatprep.subr.bf16.mxu0 0
        %1529 = vmatpush1.bf16.xpose.msra.mxu0 0
        %1530 = vmatprep.subr.bf16.mxu0 0
        %1531 = vmatpush1.bf16.xpose.msra.mxu0 0
        %1532 = vmatprep.subr.bf16.mxu0 0
        %1533 = vmatpush1.bf16.xpose.msra.mxu0 0
        %1534 = vmatprep.subr.bf16.mxu0 0
        %1535 = vmatpush1.bf16.xpose.msra.mxu0 0
        %1536 = vmatprep.subr.bf16.mxu0 0
        %1537 = vmatpush1.bf16.xpose.msra.mxu0 0
        %1538 = vmatprep.subr.bf16.mxu0 0
        %1539 = vmatpush1.bf16.xpose.msra.mxu0 0
        %1540 = vmatprep.subr.bf16.mxu0 0
        %1541 = vmatpush1.bf16.xpose.msra.mxu0 0
        %1542 = vmatprep.subr.bf16.mxu0 0
        %1543 = vmatpush1.bf16.xpose.msra.mxu0 0
        %1544 = vmatprep.subr.bf16.mxu0 0
        %1545 = vmatpush1.bf16.xpose.msra.mxu0 0
        %1546 = vmatprep.subr.bf16.mxu0 0
        %1547 = vmatpush1.bf16.xpose.msra.mxu0 0
        %1548 = vmatprep.subr.bf16.mxu0 0
        %1549 = vmatpush1.bf16.xpose.msra.mxu0 0
        %1550 = vmatprep.subr.bf16.mxu0 0
        %1551 = vmatpush1.bf16.xpose.msra.mxu0 0
        %1552 = vmatprep.subr.bf16.mxu0 0
        %1553 = vmatpush1.bf16.xpose.msra.mxu0 0
        %1554 = vmatprep.mubr.bf16.mxu0 0
        %1555 = vmatmul.mubr.bf16.gmra.mrb[0].mxu0 %v1517
        %v1556 = vpop.f32.mrb[0].mxu0
        %v1557 = vadd.f32 %v1375, %v1556
        %v1558 = vpop.f32.mrb[0].mxu0
        %v1559 = vpop.f32.mrb[0].mxu0
        %v1560 = vpop.f32.mrb[0].mxu0
        %1561 = vdwg.mxu0
        %vm1562 = vcmask 130048
        %v1563 = vsel %vm1562, %v1419, -inf
        %1564 = vmax.xlane.f32.xlu0 %v1563
        %v1565 = vpop.xlane.xlu0 %1564
        %v1566 = vsel %vm1562, %v1465, -inf
        %1567 = vmax.xlane.f32.xlu0 %v1566
        %v1568 = vpop.xlane.xlu0 %1567
        %v1569 = vsel %vm1562, %v1511, -inf
        %1570 = vmax.xlane.f32.xlu0 %v1569
        %v1571 = vpop.xlane.xlu0 %1570
        %v1572 = vsel %vm1562, %v1557, -inf
        %1573 = vmax.xlane.f32.xlu0 %v1572
        %v1574 = vpop.xlane.xlu0 %1573
        %v1575 = vsub.f32 %v1419, %v1565
        %v1576 = vsub.f32 %v1465, %v1568
        %v1577 = vsub.f32 %v1511, %v1571
        %v1578 = vsub.f32 %v1557, %v1574
        %v1579 = vmul.f32 %v1575, 1.442695
        %v1580 = vpow.pop %v1579
        %v1581 = vmul.f32 %v1576, 1.442695
        %v1582 = vpow.pop %v1581
        %v1583 = vmul.f32 %v1577, 1.442695
        %v1584 = vpow.pop %v1583
        %v1585 = vmul.f32 %v1578, 1.442695
        %v1586 = vpow.pop %v1585
        %v1587 = vsel %vm1562, %v1580, 0.0
        %1588 = vadd.xlane.f32.xlu0 %v1587
        %v1589 = vpop.xlane.xlu0 %1588
        %v1590 = vsel %vm1562, %v1582, 0.0
        %1591 = vadd.xlane.f32.xlu0 %v1590
        %v1592 = vpop.xlane.xlu0 %1591
        %v1593 = vsel %vm1562, %v1584, 0.0
        %1594 = vadd.xlane.f32.xlu0 %v1593
        %v1595 = vpop.xlane.xlu0 %1594
        %v1596 = vsel %vm1562, %v1586, 0.0
        %1597 = vadd.xlane.f32.xlu0 %v1596
        %v1598 = vpop.xlane.xlu0 %1597
        %v1599 = vrcp.pop %v1589
        %v1600 = vrcp.pop %v1592
        %v1601 = vrcp.pop %v1595
        %v1602 = vrcp.pop %v1598
        %v1603 = vmul.f32 %v1580, %v1599
        %v1604 = vmul.f32 %v1582, %v1600
        %v1605 = vmul.f32 %v1584, %v1601
        %v1606 = vmul.f32 %v1586, %v1602
        %v1607 = vpack.c.bf16 %v1603, %v1603
        %v1608 = vpack.c.bf16 %v1604, %v1604
        %v1609 = vpack.c.bf16 %v1605, %v1605
        %v1610 = vpack.c.bf16 %v1606, %v1606
        %v1612 = vsel %vm1562, %v1607, 0
        %1614 = vmatprep.subr.bf16.mxu0 0
        %1615 = vmatpush1.bf16.msra.mxu0 %v1365
        %1616 = vmatprep.subr.bf16.mxu0 0
        %1617 = vmatpush1.bf16.msra.mxu0 0
        %1618 = vmatprep.subr.bf16.mxu0 0
        %1619 = vmatpush1.bf16.msra.mxu0 0
        %1620 = vmatprep.subr.bf16.mxu0 0
        %1621 = vmatpush1.bf16.msra.mxu0 0
        %1622 = vmatprep.subr.bf16.mxu0 0
        %1623 = vmatpush1.bf16.msra.mxu0 0
        %1624 = vmatprep.subr.bf16.mxu0 0
        %1625 = vmatpush1.bf16.msra.mxu0 0
        %1626 = vmatprep.subr.bf16.mxu0 0
        %1627 = vmatpush1.bf16.msra.mxu0 0
        %1628 = vmatprep.subr.bf16.mxu0 0
        %1629 = vmatpush1.bf16.msra.mxu0 0
        %1630 = vmatprep.subr.bf16.mxu0 0
        %1631 = vmatpush1.bf16.msra.mxu0 0
        %1632 = vmatprep.subr.bf16.mxu0 0
        %1633 = vmatpush1.bf16.msra.mxu0 0
        %1634 = vmatprep.subr.bf16.mxu0 0
        %1635 = vmatpush1.bf16.msra.mxu0 0
        %1636 = vmatprep.subr.bf16.mxu0 0
        %1637 = vmatpush1.bf16.msra.mxu0 0
        %1638 = vmatprep.subr.bf16.mxu0 0
        %1639 = vmatpush1.bf16.msra.mxu0 0
        %1640 = vmatprep.subr.bf16.mxu0 0
        %1641 = vmatpush1.bf16.msra.mxu0 0
        %1642 = vmatprep.subr.bf16.mxu0 0
        %1643 = vmatpush1.bf16.msra.mxu0 0
        %1644 = vmatprep.subr.bf16.mxu0 0
        %1645 = vmatpush1.bf16.msra.mxu0 0
        %1646 = vmatprep.mubr.bf16.mxu0 0
        %1647 = vmatmul.mubr.bf16.gmra.mrb[0].mxu0 %v1612
        %v1648 = vpop.f32.mrb[0].mxu0
        %v1649 = vadd.f32 0.0, %v1648
        %v1650 = vpop.f32.mrb[0].mxu0
        %v1651 = vpop.f32.mrb[0].mxu0
        %v1652 = vpop.f32.mrb[0].mxu0
        %1653 = vdwg.mxu0
        %v1655 = vsel %vm1562, %v1608, 0
        %1657 = vmatprep.subr.bf16.mxu0 0
        %1658 = vmatpush1.bf16.msra.mxu0 %v1366
        %1659 = vmatprep.subr.bf16.mxu0 0
        %1660 = vmatpush1.bf16.msra.mxu0 0
        %1661 = vmatprep.subr.bf16.mxu0 0
        %1662 = vmatpush1.bf16.msra.mxu0 0
        %1663 = vmatprep.subr.bf16.mxu0 0
        %1664 = vmatpush1.bf16.msra.mxu0 0
        %1665 = vmatprep.subr.bf16.mxu0 0
        %1666 = vmatpush1.bf16.msra.mxu0 0
        %1667 = vmatprep.subr.bf16.mxu0 0
        %1668 = vmatpush1.bf16.msra.mxu0 0
        %1669 = vmatprep.subr.bf16.mxu0 0
        %1670 = vmatpush1.bf16.msra.mxu0 0
        %1671 = vmatprep.subr.bf16.mxu0 0
        %1672 = vmatpush1.bf16.msra.mxu0 0
        %1673 = vmatprep.subr.bf16.mxu0 0
        %1674 = vmatpush1.bf16.msra.mxu0 0
        %1675 = vmatprep.subr.bf16.mxu0 0
        %1676 = vmatpush1.bf16.msra.mxu0 0
        %1677 = vmatprep.subr.bf16.mxu0 0
        %1678 = vmatpush1.bf16.msra.mxu0 0
        %1679 = vmatprep.subr.bf16.mxu0 0
        %1680 = vmatpush1.bf16.msra.mxu0 0
        %1681 = vmatprep.subr.bf16.mxu0 0
        %1682 = vmatpush1.bf16.msra.mxu0 0
        %1683 = vmatprep.subr.bf16.mxu0 0
        %1684 = vmatpush1.bf16.msra.mxu0 0
        %1685 = vmatprep.subr.bf16.mxu0 0
        %1686 = vmatpush1.bf16.msra.mxu0 0
        %1687 = vmatprep.subr.bf16.mxu0 0
        %1688 = vmatpush1.bf16.msra.mxu0 0
        %1689 = vmatprep.mubr.bf16.mxu0 0
        %1690 = vmatmul.mubr.bf16.gmra.mrb[0].mxu0 %v1655
        %v1691 = vpop.f32.mrb[0].mxu0
        %v1692 = vadd.f32 0.0, %v1691
        %v1693 = vpop.f32.mrb[0].mxu0
        %v1694 = vpop.f32.mrb[0].mxu0
        %v1695 = vpop.f32.mrb[0].mxu0
        %1696 = vdwg.mxu0
        %v1698 = vsel %vm1562, %v1609, 0
        %1700 = vmatprep.subr.bf16.mxu0 0
        %1701 = vmatpush1.bf16.msra.mxu0 %v1367
        %1702 = vmatprep.subr.bf16.mxu0 0
        %1703 = vmatpush1.bf16.msra.mxu0 0
        %1704 = vmatprep.subr.bf16.mxu0 0
        %1705 = vmatpush1.bf16.msra.mxu0 0
        %1706 = vmatprep.subr.bf16.mxu0 0
        %1707 = vmatpush1.bf16.msra.mxu0 0
        %1708 = vmatprep.subr.bf16.mxu0 0
        %1709 = vmatpush1.bf16.msra.mxu0 0
        %1710 = vmatprep.subr.bf16.mxu0 0
        %1711 = vmatpush1.bf16.msra.mxu0 0
        %1712 = vmatprep.subr.bf16.mxu0 0
        %1713 = vmatpush1.bf16.msra.mxu0 0
        %1714 = vmatprep.subr.bf16.mxu0 0
        %1715 = vmatpush1.bf16.msra.mxu0 0
        %1716 = vmatprep.subr.bf16.mxu0 0
        %1717 = vmatpush1.bf16.msra.mxu0 0
        %1718 = vmatprep.subr.bf16.mxu0 0
        %1719 = vmatpush1.bf16.msra.mxu0 0
        %1720 = vmatprep.subr.bf16.mxu0 0
        %1721 = vmatpush1.bf16.msra.mxu0 0
        %1722 = vmatprep.subr.bf16.mxu0 0
        %1723 = vmatpush1.bf16.msra.mxu0 0
        %1724 = vmatprep.subr.bf16.mxu0 0
        %1725 = vmatpush1.bf16.msra.mxu0 0
        %1726 = vmatprep.subr.bf16.mxu0 0
        %1727 = vmatpush1.bf16.msra.mxu0 0
        %1728 = vmatprep.subr.bf16.mxu0 0
        %1729 = vmatpush1.bf16.msra.mxu0 0
        %1730 = vmatprep.subr.bf16.mxu0 0
        %1731 = vmatpush1.bf16.msra.mxu0 0
        %1732 = vmatprep.mubr.bf16.mxu0 0
        %1733 = vmatmul.mubr.bf16.gmra.mrb[0].mxu0 %v1698
        %v1734 = vpop.f32.mrb[0].mxu0
        %v1735 = vadd.f32 0.0, %v1734
        %v1736 = vpop.f32.mrb[0].mxu0
        %v1737 = vpop.f32.mrb[0].mxu0
        %v1738 = vpop.f32.mrb[0].mxu0
        %1739 = vdwg.mxu0
        %v1741 = vsel %vm1562, %v1610, 0
        %1743 = vmatprep.subr.bf16.mxu0 0
        %1744 = vmatpush1.bf16.msra.mxu0 %v1368
        %1745 = vmatprep.subr.bf16.mxu0 0
        %1746 = vmatpush1.bf16.msra.mxu0 0
        %1747 = vmatprep.subr.bf16.mxu0 0
        %1748 = vmatpush1.bf16.msra.mxu0 0
        %1749 = vmatprep.subr.bf16.mxu0 0
        %1750 = vmatpush1.bf16.msra.mxu0 0
        %1751 = vmatprep.subr.bf16.mxu0 0
        %1752 = vmatpush1.bf16.msra.mxu0 0
        %1753 = vmatprep.subr.bf16.mxu0 0
        %1754 = vmatpush1.bf16.msra.mxu0 0
        %1755 = vmatprep.subr.bf16.mxu0 0
        %1756 = vmatpush1.bf16.msra.mxu0 0
        %1757 = vmatprep.subr.bf16.mxu0 0
        %1758 = vmatpush1.bf16.msra.mxu0 0
        %1759 = vmatprep.subr.bf16.mxu0 0
        %1760 = vmatpush1.bf16.msra.mxu0 0
        %1761 = vmatprep.subr.bf16.mxu0 0
        %1762 = vmatpush1.bf16.msra.mxu0 0
        %1763 = vmatprep.subr.bf16.mxu0 0
        %1764 = vmatpush1.bf16.msra.mxu0 0
        %1765 = vmatprep.subr.bf16.mxu0 0
        %1766 = vmatpush1.bf16.msra.mxu0 0
        %1767 = vmatprep.subr.bf16.mxu0 0
        %1768 = vmatpush1.bf16.msra.mxu0 0
        %1769 = vmatprep.subr.bf16.mxu0 0
        %1770 = vmatpush1.bf16.msra.mxu0 0
        %1771 = vmatprep.subr.bf16.mxu0 0
        %1772 = vmatpush1.bf16.msra.mxu0 0
        %1773 = vmatprep.subr.bf16.mxu0 0
        %1774 = vmatpush1.bf16.msra.mxu0 0
        %1775 = vmatprep.mubr.bf16.mxu0 0
        %1776 = vmatmul.mubr.bf16.gmra.mrb[0].mxu0 %v1741
        %v1777 = vpop.f32.mrb[0].mxu0
        %v1778 = vadd.f32 0.0, %v1777
        %v1779 = vpop.f32.mrb[0].mxu0
        %v1780 = vpop.f32.mrb[0].mxu0
        %v1781 = vpop.f32.mrb[0].mxu0
        %1782 = vdwg.mxu0
        %1783 = vxpose.xlu0.b32.start [1/16] %v1649, 128
        %1784 = vxpose.xlu0.b32.cont [2/16] 0.0, 128
        %1785 = vxpose.xlu0.b32.cont [3/16] 0.0, 128
        %1786 = vxpose.xlu0.b32.cont [4/16] 0.0, 128
        %1787 = vxpose.xlu0.b32.cont [5/16] 0.0, 128
        %1788 = vxpose.xlu0.b32.cont [6/16] 0.0, 128
        %1789 = vxpose.xlu0.b32.cont [7/16] 0.0, 128
        %1790 = vxpose.xlu0.b32.cont [8/16] 0.0, 128
        %1791 = vxpose.xlu0.b32.cont [9/16] 0.0, 128
        %1792 = vxpose.xlu0.b32.cont [10/16] 0.0, 128
        %1793 = vxpose.xlu0.b32.cont [11/16] 0.0, 128
        %1794 = vxpose.xlu0.b32.cont [12/16] 0.0, 128
        %1795 = vxpose.xlu0.b32.cont [13/16] 0.0, 128
        %1796 = vxpose.xlu0.b32.cont [14/16] 0.0, 128
        %1797 = vxpose.xlu0.b32.cont [15/16] 0.0, 128
        %1798 = vxpose.xlu0.b32.end [16/16] 0.0, 128
        %v1799 = vpop.trf.xlu0
        %v1800 = vpop.trf.xlu0
        %v1801 = vpop.trf.xlu0
        %v1802 = vpop.trf.xlu0
        %v1803 = vpop.trf.xlu0
        %v1804 = vpop.trf.xlu0
        %v1805 = vpop.trf.xlu0
        %v1806 = vpop.trf.xlu0
        %v1807 = vpop.trf.xlu0
        %v1808 = vpop.trf.xlu0
        %v1809 = vpop.trf.xlu0
        %v1810 = vpop.trf.xlu0
        %v1811 = vpop.trf.xlu0
        %v1812 = vpop.trf.xlu0
        %v1813 = vpop.trf.xlu0
        %v1814 = vpop.trf.xlu0
        %1815 = vxpose.xlu0.b32.start [1/16] %v1692, 128
        %1816 = vxpose.xlu0.b32.cont [2/16] 0.0, 128
        %1817 = vxpose.xlu0.b32.cont [3/16] 0.0, 128
        %1818 = vxpose.xlu0.b32.cont [4/16] 0.0, 128
        %1819 = vxpose.xlu0.b32.cont [5/16] 0.0, 128
        %1820 = vxpose.xlu0.b32.cont [6/16] 0.0, 128
        %1821 = vxpose.xlu0.b32.cont [7/16] 0.0, 128
        %1822 = vxpose.xlu0.b32.cont [8/16] 0.0, 128
        %1823 = vxpose.xlu0.b32.cont [9/16] 0.0, 128
        %1824 = vxpose.xlu0.b32.cont [10/16] 0.0, 128
        %1825 = vxpose.xlu0.b32.cont [11/16] 0.0, 128
        %1826 = vxpose.xlu0.b32.cont [12/16] 0.0, 128
        %1827 = vxpose.xlu0.b32.cont [13/16] 0.0, 128
        %1828 = vxpose.xlu0.b32.cont [14/16] 0.0, 128
        %1829 = vxpose.xlu0.b32.cont [15/16] 0.0, 128
        %1830 = vxpose.xlu0.b32.end [16/16] 0.0, 128
        %v1831 = vpop.trf.xlu0
        %v1832 = vpop.trf.xlu0
        %v1833 = vpop.trf.xlu0
        %v1834 = vpop.trf.xlu0
        %v1835 = vpop.trf.xlu0
        %v1836 = vpop.trf.xlu0
        %v1837 = vpop.trf.xlu0
        %v1838 = vpop.trf.xlu0
        %v1839 = vpop.trf.xlu0
        %v1840 = vpop.trf.xlu0
        %v1841 = vpop.trf.xlu0
        %v1842 = vpop.trf.xlu0
        %v1843 = vpop.trf.xlu0
        %v1844 = vpop.trf.xlu0
        %v1845 = vpop.trf.xlu0
        %v1846 = vpop.trf.xlu0
        %1847 = vxpose.xlu0.b32.start [1/16] %v1735, 128
        %1848 = vxpose.xlu0.b32.cont [2/16] 0.0, 128
        %1849 = vxpose.xlu0.b32.cont [3/16] 0.0, 128
        %1850 = vxpose.xlu0.b32.cont [4/16] 0.0, 128
        %1851 = vxpose.xlu0.b32.cont [5/16] 0.0, 128
        %1852 = vxpose.xlu0.b32.cont [6/16] 0.0, 128
        %1853 = vxpose.xlu0.b32.cont [7/16] 0.0, 128
        %1854 = vxpose.xlu0.b32.cont [8/16] 0.0, 128
        %1855 = vxpose.xlu0.b32.cont [9/16] 0.0, 128
        %1856 = vxpose.xlu0.b32.cont [10/16] 0.0, 128
        %1857 = vxpose.xlu0.b32.cont [11/16] 0.0, 128
        %1858 = vxpose.xlu0.b32.cont [12/16] 0.0, 128
        %1859 = vxpose.xlu0.b32.cont [13/16] 0.0, 128
        %1860 = vxpose.xlu0.b32.cont [14/16] 0.0, 128
        %1861 = vxpose.xlu0.b32.cont [15/16] 0.0, 128
        %1862 = vxpose.xlu0.b32.end [16/16] 0.0, 128
        %v1863 = vpop.trf.xlu0
        %v1864 = vpop.trf.xlu0
        %v1865 = vpop.trf.xlu0
        %v1866 = vpop.trf.xlu0
        %v1867 = vpop.trf.xlu0
        %v1868 = vpop.trf.xlu0
        %v1869 = vpop.trf.xlu0
        %v1870 = vpop.trf.xlu0
        %v1871 = vpop.trf.xlu0
        %v1872 = vpop.trf.xlu0
        %v1873 = vpop.trf.xlu0
        %v1874 = vpop.trf.xlu0
        %v1875 = vpop.trf.xlu0
        %v1876 = vpop.trf.xlu0
        %v1877 = vpop.trf.xlu0
        %v1878 = vpop.trf.xlu0
        %1879 = vxpose.xlu0.b32.start [1/16] %v1778, 128
        %1880 = vxpose.xlu0.b32.cont [2/16] 0.0, 128
        %1881 = vxpose.xlu0.b32.cont [3/16] 0.0, 128
        %1882 = vxpose.xlu0.b32.cont [4/16] 0.0, 128
        %1883 = vxpose.xlu0.b32.cont [5/16] 0.0, 128
        %1884 = vxpose.xlu0.b32.cont [6/16] 0.0, 128
        %1885 = vxpose.xlu0.b32.cont [7/16] 0.0, 128
        %1886 = vxpose.xlu0.b32.cont [8/16] 0.0, 128
        %1887 = vxpose.xlu0.b32.cont [9/16] 0.0, 128
        %1888 = vxpose.xlu0.b32.cont [10/16] 0.0, 128
        %1889 = vxpose.xlu0.b32.cont [11/16] 0.0, 128
        %1890 = vxpose.xlu0.b32.cont [12/16] 0.0, 128
        %1891 = vxpose.xlu0.b32.cont [13/16] 0.0, 128
        %1892 = vxpose.xlu0.b32.cont [14/16] 0.0, 128
        %1893 = vxpose.xlu0.b32.cont [15/16] 0.0, 128
        %1894 = vxpose.xlu0.b32.end [16/16] 0.0, 128
        %v1895 = vpop.trf.xlu0
        %v1896 = vpop.trf.xlu0
        %v1897 = vpop.trf.xlu0
        %v1898 = vpop.trf.xlu0
        %v1899 = vpop.trf.xlu0
        %v1900 = vpop.trf.xlu0
        %v1901 = vpop.trf.xlu0
        %v1902 = vpop.trf.xlu0
        %v1903 = vpop.trf.xlu0
        %v1904 = vpop.trf.xlu0
        %v1905 = vpop.trf.xlu0
        %v1906 = vpop.trf.xlu0
        %v1907 = vpop.trf.xlu0
        %v1908 = vpop.trf.xlu0
        %v1909 = vpop.trf.xlu0
        %v1910 = vpop.trf.xlu0
        %1911 = vxpose.xlu0.b32.start [1/16] %v1799, 128
        %1912 = vxpose.xlu0.b32.cont [2/16] %v1831, 128
        %1913 = vxpose.xlu0.b32.cont [3/16] %v1863, 128
        %1914 = vxpose.xlu0.b32.cont [4/16] %v1895, 128
        %1915 = vxpose.xlu0.b32.cont [5/16] 0.0, 128
        %1916 = vxpose.xlu0.b32.cont [6/16] 0.0, 128
        %1917 = vxpose.xlu0.b32.cont [7/16] 0.0, 128
        %1918 = vxpose.xlu0.b32.cont [8/16] 0.0, 128
        %1919 = vxpose.xlu0.b32.cont [9/16] 0.0, 128
        %1920 = vxpose.xlu0.b32.cont [10/16] 0.0, 128
        %1921 = vxpose.xlu0.b32.cont [11/16] 0.0, 128
        %1922 = vxpose.xlu0.b32.cont [12/16] 0.0, 128
        %1923 = vxpose.xlu0.b32.cont [13/16] 0.0, 128
        %1924 = vxpose.xlu0.b32.cont [14/16] 0.0, 128
        %1925 = vxpose.xlu0.b32.cont [15/16] 0.0, 128
        %1926 = vxpose.xlu0.b32.end [16/16] 0.0, 128
        %v1927 = vpop.trf.xlu0
        %v1928 = vpop.trf.xlu0
        %v1929 = vpop.trf.xlu0
        %v1930 = vpop.trf.xlu0
        %v1931 = vpop.trf.xlu0
        %v1932 = vpop.trf.xlu0
        %v1933 = vpop.trf.xlu0
        %v1934 = vpop.trf.xlu0
        %v1935 = vpop.trf.xlu0
        %v1936 = vpop.trf.xlu0
        %v1937 = vpop.trf.xlu0
        %v1938 = vpop.trf.xlu0
        %v1939 = vpop.trf.xlu0
        %v1940 = vpop.trf.xlu0
        %v1941 = vpop.trf.xlu0
        %v1942 = vpop.trf.xlu0
        %v1943 = vpack.c.bf16 %v1927, %v1927
        %v1944 = vld [vmem:[%s13] sm:$0xf]
        %v1945 = vld [vmem:[%s13 + $0x4] sm:$0xf]
        %v1946 = vld [vmem:[%s13 + $0x8] sm:$0xf]
        %v1947 = vld [vmem:[%s13 + $0xc] sm:$0xf]
        %v1948 = vld [vmem:[%s14] sm:$0x1]
        %v1950 = vlaneseq
        %v1951 = vshrl.u32 %v1950, 7
        %v1952 = vsub.s32 0, %v1951
        %v1953 = vrot.slane %v1948, %v1952
        %v1959 = vunpack.c.l.b16 %v1944
        %v1960 = vunpack.c.l.b16 %v1945
        %v1961 = vunpack.c.l.b16 %v1946
        %v1962 = vunpack.c.l.b16 %v1947
        %v1963 = vpack.c.b16 %v1960, %v1959
        %v1964 = vpack.c.b16 %v1962, %v1961
        %v1968 = vsel %vm661, %v1943, 0
        %1970 = vmatprep.subr.bf16.mxu0 0
        %1971 = vmatpush1.bf16.msra.mxu0 %v1963
        %1972 = vmatprep.subr.bf16.mxu0 0
        %1973 = vmatpush1.bf16.msra.mxu0 %v1964
        %1974 = vmatprep.subr.bf16.mxu0 0
        %1975 = vmatpush1.bf16.msra.mxu0 0
        %1976 = vmatprep.subr.bf16.mxu0 0
        %1977 = vmatpush1.bf16.msra.mxu0 0
        %1978 = vmatprep.subr.bf16.mxu0 0
        %1979 = vmatpush1.bf16.msra.mxu0 0
        %1980 = vmatprep.subr.bf16.mxu0 0
        %1981 = vmatpush1.bf16.msra.mxu0 0
        %1982 = vmatprep.subr.bf16.mxu0 0
        %1983 = vmatpush1.bf16.msra.mxu0 0
        %1984 = vmatprep.subr.bf16.mxu0 0
        %1985 = vmatpush1.bf16.msra.mxu0 0
        %1986 = vmatprep.subr.bf16.mxu0 0
        %1987 = vmatpush1.bf16.msra.mxu0 0
        %1988 = vmatprep.subr.bf16.mxu0 0
        %1989 = vmatpush1.bf16.msra.mxu0 0
        %1990 = vmatprep.subr.bf16.mxu0 0
        %1991 = vmatpush1.bf16.msra.mxu0 0
        %1992 = vmatprep.subr.bf16.mxu0 0
        %1993 = vmatpush1.bf16.msra.mxu0 0
        %1994 = vmatprep.subr.bf16.mxu0 0
        %1995 = vmatpush1.bf16.msra.mxu0 0
        %1996 = vmatprep.subr.bf16.mxu0 0
        %1997 = vmatpush1.bf16.msra.mxu0 0
        %1998 = vmatprep.subr.bf16.mxu0 0
        %1999 = vmatpush1.bf16.msra.mxu0 0
        %2000 = vmatprep.subr.bf16.mxu0 0
        %2001 = vmatpush1.bf16.msra.mxu0 0
        %2002 = vmatprep.mubr.bf16.mxu0 0
        %2003 = vmatmul.mubr.bf16.gmra.mrb[0].mxu0 %v1968
        %v2004 = vpop.f32.mrb[0].mxu0
        %v2005 = vadd.f32 %v1953, %v2004
        %v2006 = vpop.f32.mrb[0].mxu0
        %v2007 = vpop.f32.mrb[0].mxu0
        %v2008 = vpop.f32.mrb[0].mxu0
        %2009 = vdwg.mxu0
        %v2010 = vadd.f32 %v654, %v2005
        %v2011 = vld [vmem:[%s7] sm:$0x1]
        %v2012 = vld [vmem:[%s8] sm:$0x1]
        %v2013 = vsel %vm661, %v2010, 0.0
        %2014 = vadd.xlane.f32.xlu0 %v2013
        %v2015 = vpop.xlane.xlu0 %2014
        %v2016 = vmul.f32 %v2015, %v665
        %v2017 = vsub.f32 %v2010, %v2016
        %v2018 = vmul.f32 %v2017, %v2017
        %v2019 = vsel %vm661, %v2018, 0.0
        %2020 = vadd.xlane.f32.xlu0 %v2019
        %v2021 = vpop.xlane.xlu0 %2020
        %v2022 = vmul.f32 %v2021, %v665
        %v2023 = vadd.f32 %v2022, 1e-05
        %v2024 = vrsqrt.pop %v2023
        %v2025 = vmul.f32 %v2017, %v2024
        %v2027 = vlaneseq
        %v2028 = vshrl.u32 %v2027, 7
        %v2029 = vsub.s32 0, %v2028
        %v2030 = vrot.slane %v2011, %v2029
        %v2032 = vmul.f32 %v2025, %v2030
        %v2034 = vlaneseq
        %v2035 = vshrl.u32 %v2034, 7
        %v2036 = vsub.s32 0, %v2035
        %v2037 = vrot.slane %v2012, %v2036
        %v2039 = vadd.f32 %v2032, %v2037
        %v2040 = vpack.c.bf16 %v2039, %v2039
        %v2041 = vld [vmem:[%s15] sm:$0xf]
        %v2042 = vld [vmem:[%s15 + $0x4] sm:$0xf]
        %v2043 = vld [vmem:[%s15 + $0x8] sm:$0xf]
        %v2044 = vld [vmem:[%s15 + $0xc] sm:$0xf]
        %v2045 = vld [vmem:[%s16] sm:$0x1]
        %v2047 = vlaneseq
        %v2048 = vshrl.u32 %v2047, 7
        %v2049 = vsub.s32 0, %v2048
        %v2050 = vrot.slane %v2045, %v2049
        %v2056 = vunpack.c.l.b16 %v2041
        %v2057 = vunpack.c.l.b16 %v2042
        %v2058 = vunpack.c.l.b16 %v2043
        %v2059 = vunpack.c.l.b16 %v2044
        %v2060 = vpack.c.b16 %v2057, %v2056
        %v2061 = vpack.c.b16 %v2059, %v2058
        %v2065 = vsel %vm661, %v2040, 0
        %2067 = vmatprep.subr.bf16.mxu0 0
        %2068 = vmatpush1.bf16.msra.mxu0 %v2060
        %2069 = vmatprep.subr.bf16.mxu0 0
        %2070 = vmatpush1.bf16.msra.mxu0 %v2061
        %2071 = vmatprep.subr.bf16.mxu0 0
        %2072 = vmatpush1.bf16.msra.mxu0 0
        %2073 = vmatprep.subr.bf16.mxu0 0
        %2074 = vmatpush1.bf16.msra.mxu0 0
        %2075 = vmatprep.subr.bf16.mxu0 0
        %2076 = vmatpush1.bf16.msra.mxu0 0
        %2077 = vmatprep.subr.bf16.mxu0 0
        %2078 = vmatpush1.bf16.msra.mxu0 0
        %2079 = vmatprep.subr.bf16.mxu0 0
        %2080 = vmatpush1.bf16.msra.mxu0 0
        %2081 = vmatprep.subr.bf16.mxu0 0
        %2082 = vmatpush1.bf16.msra.mxu0 0
        %2083 = vmatprep.subr.bf16.mxu0 0
        %2084 = vmatpush1.bf16.msra.mxu0 0
        %2085 = vmatprep.subr.bf16.mxu0 0
        %2086 = vmatpush1.bf16.msra.mxu0 0
        %2087 = vmatprep.subr.bf16.mxu0 0
        %2088 = vmatpush1.bf16.msra.mxu0 0
        %2089 = vmatprep.subr.bf16.mxu0 0
        %2090 = vmatpush1.bf16.msra.mxu0 0
        %2091 = vmatprep.subr.bf16.mxu0 0
        %2092 = vmatpush1.bf16.msra.mxu0 0
        %2093 = vmatprep.subr.bf16.mxu0 0
        %2094 = vmatpush1.bf16.msra.mxu0 0
        %2095 = vmatprep.subr.bf16.mxu0 0
        %2096 = vmatpush1.bf16.msra.mxu0 0
        %2097 = vmatprep.subr.bf16.mxu0 0
        %2098 = vmatpush1.bf16.msra.mxu0 0
        %2099 = vmatprep.mubr.bf16.mxu0 0
        %2100 = vmatmul.mubr.bf16.gmra.mrb[0].mxu0 %v2065
        %v2101 = vpop.f32.mrb[0].mxu0
        %v2102 = vadd.f32 %v2050, %v2101
        %v2103 = vpop.f32.mrb[0].mxu0
        %v2104 = vpop.f32.mrb[0].mxu0
        %v2105 = vpop.f32.mrb[0].mxu0
        %2106 = vdwg.mxu0
        %v2107 = vmul.f32 %v2102, 1.702
        %v2108 = vxor.u32 %v2107, 2147483648
        %v2109 = vmul.f32 %v2108, 1.442695
        %v2110 = vpow.pop %v2109
        %v2111 = vadd.f32 %v2110, 1.0
        %v2112 = vrcp.pop %v2111
        %v2113 = vmul.f32 1.0, %v2112
        %v2114 = vmul.f32 %v2102, %v2113
        %v2115 = vpack.c.bf16 %v2114, %v2114
        %v2116 = vld [vmem:[%s17] sm:$0xf]
        %v2117 = vld [vmem:[%s17 + $0x4] sm:$0xf]
        %v2118 = vld [vmem:[%s17 + $0x8] sm:$0xf]
        %v2119 = vld [vmem:[%s17 + $0xc] sm:$0xf]
        %v2120 = vld [vmem:[%s17 + $0x10] sm:$0xf]
        %v2121 = vld [vmem:[%s17 + $0x14] sm:$0xf]
        %v2122 = vld [vmem:[%s17 + $0x18] sm:$0xf]
        %v2123 = vld [vmem:[%s17 + $0x1c] sm:$0xf]
        %v2124 = vld [vmem:[%s17 + $0x20] sm:$0xf]
        %v2125 = vld [vmem:[%s17 + $0x24] sm:$0xf]
        %v2126 = vld [vmem:[%s17 + $0x28] sm:$0xf]
        %v2127 = vld [vmem:[%s17 + $0x2c] sm:$0xf]
        %v2128 = vld [vmem:[%s17 + $0x30] sm:$0xf]
        %v2129 = vld [vmem:[%s17 + $0x34] sm:$0xf]
        %v2130 = vld [vmem:[%s17 + $0x38] sm:$0xf]
        %v2131 = vld [vmem:[%s17 + $0x3c] sm:$0xf]
        %v2132 = vld [vmem:[%s18] sm:$0x1]
        %v2134 = vlaneseq
        %v2135 = vshrl.u32 %v2134, 7
        %v2136 = vsub.s32 0, %v2135
        %v2137 = vrot.slane %v2132, %v2136
        %v2155 = vunpack.c.l.b16 %v2116
        %v2156 = vunpack.c.l.b16 %v2117
        %v2157 = vunpack.c.l.b16 %v2118
        %v2158 = vunpack.c.l.b16 %v2119
        %v2159 = vunpack.c.l.b16 %v2120
        %v2160 = vunpack.c.l.b16 %v2121
        %v2161 = vunpack.c.l.b16 %v2122
        %v2162 = vunpack.c.l.b16 %v2123
        %v2163 = vunpack.c.l.b16 %v2124
        %v2164 = vunpack.c.l.b16 %v2125
        %v2165 = vunpack.c.l.b16 %v2126
        %v2166 = vunpack.c.l.b16 %v2127
        %v2167 = vunpack.c.l.b16 %v2128
        %v2168 = vunpack.c.l.b16 %v2129
        %v2169 = vunpack.c.l.b16 %v2130
        %v2170 = vunpack.c.l.b16 %v2131
        %v2171 = vpack.c.b16 %v2156, %v2155
        %v2172 = vpack.c.b16 %v2158, %v2157
        %v2173 = vpack.c.b16 %v2160, %v2159
        %v2174 = vpack.c.b16 %v2162, %v2161
        %v2175 = vpack.c.b16 %v2164, %v2163
        %v2176 = vpack.c.b16 %v2166, %v2165
        %v2177 = vpack.c.b16 %v2168, %v2167
        %v2178 = vpack.c.b16 %v2170, %v2169
        %2187 = vmatprep.subr.bf16.mxu0 0
        %2188 = vmatpush1.bf16.msra.mxu0 %v2171
        %2189 = vmatprep.subr.bf16.mxu0 0
        %2190 = vmatpush1.bf16.msra.mxu0 %v2172
        %2191 = vmatprep.subr.bf16.mxu0 0
        %2192 = vmatpush1.bf16.msra.mxu0 %v2173
        %2193 = vmatprep.subr.bf16.mxu0 0
        %2194 = vmatpush1.bf16.msra.mxu0 %v2174
        %2195 = vmatprep.subr.bf16.mxu0 0
        %2196 = vmatpush1.bf16.msra.mxu0 %v2175
        %2197 = vmatprep.subr.bf16.mxu0 0
        %2198 = vmatpush1.bf16.msra.mxu0 %v2176
        %2199 = vmatprep.subr.bf16.mxu0 0
        %2200 = vmatpush1.bf16.msra.mxu0 %v2177
        %2201 = vmatprep.subr.bf16.mxu0 0
        %2202 = vmatpush1.bf16.msra.mxu0 %v2178
        %2203 = vmatprep.subr.bf16.mxu0 0
        %2204 = vmatpush1.bf16.msra.mxu0 0
        %2205 = vmatprep.subr.bf16.mxu0 0
        %2206 = vmatpush1.bf16.msra.mxu0 0
        %2207 = vmatprep.subr.bf16.mxu0 0
        %2208 = vmatpush1.bf16.msra.mxu0 0
        %2209 = vmatprep.subr.bf16.mxu0 0
        %2210 = vmatpush1.bf16.msra.mxu0 0
        %2211 = vmatprep.subr.bf16.mxu0 0
        %2212 = vmatpush1.bf16.msra.mxu0 0
        %2213 = vmatprep.subr.bf16.mxu0 0
        %2214 = vmatpush1.bf16.msra.mxu0 0
        %2215 = vmatprep.subr.bf16.mxu0 0
        %2216 = vmatpush1.bf16.msra.mxu0 0
        %2217 = vmatprep.subr.bf16.mxu0 0
        %2218 = vmatpush1.bf16.msra.mxu0 0
        %2219 = vmatprep.mubr.bf16.mxu0 0
        %2220 = vmatmul.mubr.bf16.gmra.mrb[0].mxu0 %v2115
        %v2221 = vpop.f32.mrb[0].mxu0
        %v2222 = vadd.f32 %v2137, %v2221
        %v2223 = vpop.f32.mrb[0].mxu0
        %v2224 = vpop.f32.mrb[0].mxu0
        %v2225 = vpop.f32.mrb[0].mxu0
        %2226 = vdwg.mxu0
        %v2227 = vadd.f32 %v2010, %v2222
        %v2228 = vpack.c.bf16 %v2227, %v2227
        %vm2229 = vcmask 257024
        %2230 = vst.msk [vmem:[%s643] sm:$0xf] %vm2229, %v2228
        %s2231 = sand.u32 %s458, 1
        %s2232 = scalar_lea.sflag [#allocation4], %s2231
        %s2233 = sand.u32 %s458, 1
        %s2234 = smul.addr %s2233, 4
        %s2235 = scalar_lea.vmem [#allocation5], %s2234
        // Predicated region
        $region101: #{tpu_custom_call.1} parent=95 // pred_check
          %p2236 = pneg %p468
        $region102: #{tpu_custom_call.1} parent=95 // pred_check_branch
          %2238 = sbr.rel (%p2236) target = $region104
        $region103: #{tpu_custom_call.1} parent=95 // pred_region
          %s2240 = ssub.s32 64, 64
          %2241 = vsyncadd %s2232, %s2240
          %s2242 = smul.addr %s36, 64
          %s2243 = scalar_lea.hbm %s19, %s2242
          %s2245 = sshll.u32 %s2235, 4
          %s2246 = int_to_ptr.vmem [resolvable:$true] %s2245
          %2248 = dma.vmem_to_hbm [thread:$0]  %s2246, 64, %s2243, %s2232
        $region104: #{tpu_custom_call.1} parent=95 // pred_fallthru
          _
      $region96: #{tpu_custom_call.1} parent=5 // pred_fallthru
        _
      %p2249 = scmp.le.s32.totalorder 2, %s31
      // Predicated region
      $region105: #{tpu_custom_call.1} parent=5 // pred_check
        %p2250 = pneg %p2249
      $region106: #{tpu_custom_call.1} parent=5 // pred_check_branch
        %2252 = sbr.rel (%p2250) target = $region108
      $region107: #{tpu_custom_call.1} parent=5 // pred_region
        %s2253 = ssub.s32 %s31, 2
        // Predicated region
        $region109: #{tpu_custom_call.1} parent=107 // pred_check
          %p2254 = pneg %p474
        $region110: #{tpu_custom_call.1} parent=107 // pred_check_branch
          %2256 = sbr.rel (%p2254) target = $region112
        $region111: #{tpu_custom_call.1} parent=107 // pred_region
          %s2257 = sand.u32 %s459, 1
          %s2258 = scalar_lea.sflag [#allocation4], %s2257
          %s2259 = sand.u32 %s459, 1
          %s2260 = smul.addr %s2259, 4
          %s2261 = scalar_lea.vmem [#allocation5], %s2260
          %2262 = dma.done %s2258, 64
        $region112: #{tpu_custom_call.1} parent=107 // pred_fallthru
          _
      $region108: #{tpu_custom_call.1} parent=5 // pred_fallthru
        _
    $region6: #{tpu_custom_call.1} parent=1 // loop_footer
      %s35 = sadd.s32 1, %s31
    $region7: #{tpu_custom_call.1} parent=1 // loop_footer_branch
      %30 = sbr.rel target = $region3
    $region8: #{tpu_custom_call.1} parent=1 // loop_exit
      _
    %2263 = vsyncpa [#allocation3], 1
    %s2264 = scalar_lea.sflag [#allocation3], 1
    %2265 = vsyncpa %s2264, 1
    %2266 = vsyncpa [#allocation4], 1
    %s2267 = scalar_lea.sflag [#allocation4], 1
    %2268 = vsyncpa %s2267, 1

</llo_original>
